<compile_context>
chip_gen: v5e
topology: v5e:2x2
jax: 0.10.0
libtpu: 0.0.40
codegen_flags: <defaults>
</compile_context>

<pallas_src>
import functools

import jax
import jax.numpy as jnp
from jax import lax
from jax.experimental import pallas as pl
from jax.experimental.pallas import tpu as pltpu


# ----------------------------------------------------------------------------
# In-kernel 3x3 / stride-2 / pad-1 convolution via parity ("space-to-depth")
# taps.  x4_ref holds the 4 (row,col)-parity planes of the zero-padded input:
#   x4[p, i, j, c] = xpad[2*i + p//2, 2*j + p%2, c]
# Output pixel (oh, ow) needs padded pixel (2*oh + kh, 2*ow + kw), i.e. parity
# plane (kh%2, kw%2) at spatial offset (kh//2, kw//2).  Each of the 9 taps is
# a rectangular VMEM read followed by one MXU matmul; results accumulate in
# float32.
# ----------------------------------------------------------------------------
def _conv3x3_accumulate(x4_ref, w_ref, Ho, Wo, cin):
    """Returns the float32 conv result of shape (Ho*Wo, cout)."""
    acc = None
    for t in range(9):
        kh, kw = divmod(t, 3)
        ph, dh = kh % 2, kh // 2
        pw, dw = kw % 2, kw // 2
        # Rectangular load (static offsets), then do the width-offset slice +
        # spatial flatten on an f32 value (Wo % 8 == 0, so the flatten is
        # layout-trivial; only the 3 dw==1 taps need a sublane shift).
        rows = x4_ref[ph * 2 + pw, dh:dh + Ho, :, :].astype(jnp.float32)
        lhs = rows[:, dw:dw + Wo, :].reshape(Ho * Wo, cin)
        contrib = jnp.dot(lhs.astype(w_ref.dtype), w_ref[t],
                          preferred_element_type=jnp.float32)
        acc = contrib if acc is None else acc + contrib
    return acc


def _conv_bn_relu_kernel(x4_ref, w_ref, b_ref, o_ref, *, Ho, Wo, cin):
    """conv3x3(s2,p1) with BN scale pre-folded into w; adds shift, ReLU."""
    acc = _conv3x3_accumulate(x4_ref, w_ref, Ho, Wo, cin)          # (M, c1) f32
    y = jnp.maximum(acc + b_ref[...], 0.0)
    o_ref[...] = y.astype(o_ref.dtype)


def _conv_bn_relu_proj_kernel(x4_ref, w_ref, b_ref, w3_ref, b3_ref, o_ref,
                              *, Ho, Wo, cin):
    """Fused stage 2 + 3: conv3x3+shift+ReLU, then 1x1 conv (+bias)."""
    acc = _conv3x3_accumulate(x4_ref, w_ref, Ho, Wo, cin)          # (M, c2) f32
    h = jnp.maximum(acc + b_ref[...], 0.0)                         # f32
    y = jnp.dot(h.astype(w3_ref.dtype), w3_ref[...],
                preferred_element_type=jnp.float32) + b3_ref[...]  # (M, E) f32
    o_ref[...] = y.astype(o_ref.dtype)


# ----------------------------------------------------------------------------
# Plain-JAX glue: 1x parity rearrangement of the zero-padded activation.
# (B, H, W, C) -> (B, 4, H/2+1, W/2+1, C);  same byte count as the padded
# input — no 9x im2col blow-up in HBM.
# ----------------------------------------------------------------------------
def _parity_split(x_nhwc, dtype):
    B, H, W, C = x_nhwc.shape
    Hh, Wh = H // 2 + 1, W // 2 + 1
    xp = jnp.pad(x_nhwc, ((0, 0), (1, 1), (1, 1), (0, 0)))
    x4 = xp.reshape(B, Hh, 2, Wh, 2, C).transpose(0, 2, 4, 1, 3, 5)
    return x4.reshape(B, 4, Hh, Wh, C).astype(dtype)


_COMPILER_PARAMS = pltpu.CompilerParams(
    dimension_semantics=("parallel",),          # batch axis -> both v7x cores
    vmem_limit_bytes=48 * 1024 * 1024,          # safe on v5e/v6e/v7x
)


def conv3x3_s2_bn_relu(x_nhwc, w9, shift, *, compute_dtype, out_dtype):
    """Stage-1 pallas_call: (B,H,W,C) -> (B, H/2*W/2, cout)."""
    B, H, W, C = x_nhwc.shape
    Ho, Wo = H // 2, W // 2
    cout = w9.shape[-1]
    x4 = _parity_split(x_nhwc, compute_dtype)
    kern = functools.partial(_conv_bn_relu_kernel, Ho=Ho, Wo=Wo, cin=C)
    return pl.pallas_call(
        kern,
        out_shape=jax.ShapeDtypeStruct((B, Ho * Wo, cout), out_dtype),
        grid=(B,),
        in_specs=[
            pl.BlockSpec((None, 4, Ho + 1, Wo + 1, C),
                         lambda b: (b, 0, 0, 0, 0)),
            pl.BlockSpec((9, C, cout), lambda b: (0, 0, 0)),   # folded weights
            pl.BlockSpec((1, cout), lambda b: (0, 0)),         # BN shift
        ],
        out_specs=pl.BlockSpec((None, Ho * Wo, cout), lambda b: (b, 0, 0)),
        compiler_params=_COMPILER_PARAMS,
    )(x4, w9.astype(compute_dtype),
      shift.reshape(1, cout).astype(jnp.float32))


def conv3x3_s2_bn_relu_proj(x_nhwc, w9, shift, w3, b3, *, compute_dtype):
    """Fused stage-2+3 pallas_call: (B,H1,W1,c1) -> (B, H2*W2, E), float32."""
    B, H, W, C = x_nhwc.shape
    Ho, Wo = H // 2, W // 2
    c2 = w9.shape[-1]
    E = w3.shape[-1]
    x4 = _parity_split(x_nhwc, compute_dtype)
    kern = functools.partial(_conv_bn_relu_proj_kernel, Ho=Ho, Wo=Wo, cin=C)
    return pl.pallas_call(
        kern,
        out_shape=jax.ShapeDtypeStruct((B, Ho * Wo, E), jnp.float32),
        grid=(B,),
        in_specs=[
            pl.BlockSpec((None, 4, Ho + 1, Wo + 1, C),
                         lambda b: (b, 0, 0, 0, 0)),
            pl.BlockSpec((9, C, c2), lambda b: (0, 0, 0)),     # folded conv2 w
            pl.BlockSpec((1, c2), lambda b: (0, 0)),           # BN shift
            pl.BlockSpec((c2, E), lambda b: (0, 0)),           # 1x1 conv w
            pl.BlockSpec((1, E), lambda b: (0, 0)),            # 1x1 conv bias
        ],
        out_specs=pl.BlockSpec((None, Ho * Wo, E), lambda b: (b, 0, 0)),
        compiler_params=_COMPILER_PARAMS,
    )(x4, w9.astype(compute_dtype),
      shift.reshape(1, c2).astype(jnp.float32),
      w3.astype(compute_dtype),
      b3.reshape(1, E).astype(jnp.float32))


# ----------------------------------------------------------------------------
# ConvStem forward
# ----------------------------------------------------------------------------
def conv_stem_forward(x_nhwc, params, compute_dtype=jnp.bfloat16):
    B, H, W, _ = x_nhwc.shape
    # W % 32 keeps both per-stage output widths multiples of 8 so the in-kernel
    # spatial flatten stays sublane-aligned (holds for 224x224 and the demo).
    # TODO(synk): relax the W % 32 restriction for arbitrary image widths.
    assert H % 4 == 0 and W % 32 == 0, (H, W)

    # stage 1: conv3x3 s2 p1 (BN scale folded into w) + shift + ReLU
    y1 = conv3x3_s2_bn_relu(x_nhwc, params["w1"], params["b1"],
                            compute_dtype=compute_dtype,
                            out_dtype=compute_dtype)
    H1, W1 = H // 2, W // 2
    y1 = y1.reshape(B, H1, W1, -1)

    # stages 2+3 fused: conv3x3 s2 p1 + shift + ReLU, then 1x1 conv (+bias)
    out = conv3x3_s2_bn_relu_proj(y1, params["w2"], params["b2"],
                                  params["w3"], params["b3"],
                                  compute_dtype=compute_dtype)
    return out  # (B, num_patches, embed_dim), float32


# ----------------------------------------------------------------------------
# Deterministic parameter init (shapes from ConvStem.__init__), with the
# eval-mode BatchNorm scale folded directly into the conv weights.
# ----------------------------------------------------------------------------
def init_params(key, in_chans=3, embed_dim=32):
    assert embed_dim % 8 == 0
    c1 = embed_dim // 8
    c2 = 2 * c1
    ks = jax.random.split(key, 8)

    def nrm(k, shape, scale=0.1):
        return (scale * jax.random.normal(k, shape)).astype(jnp.float32)

    w1 = nrm(ks[0], (3, 3, in_chans, c1))          # HWIO
    w2 = nrm(ks[1], (3, 3, c1, c2))
    w3 = nrm(ks[2], (1, 1, c2, embed_dim))
    b3 = nrm(ks[3], (embed_dim,))

    eps = 1e-5

    def folded_bn(kg, kb, c):
        gamma = (1.0 + 0.05 * jax.random.normal(kg, (c,))).astype(jnp.float32)
        beta = (0.05 * jax.random.normal(kb, (c,))).astype(jnp.float32)
        mean = 0.02 * jnp.arange(c, dtype=jnp.float32)
        var = 1.0 + 0.01 * jnp.arange(c, dtype=jnp.float32)
        scale = gamma / jnp.sqrt(var + eps)
        shift = beta - mean * scale
        return scale, shift

    s1, sh1 = folded_bn(ks[4], ks[5], c1)
    s2, sh2 = folded_bn(ks[6], ks[7], c2)

    # Fold the BN scale into the conv weights: conv(x, w)*s + b == conv(x, w*s) + b
    w1f = w1 * s1
    w2f = w2 * s2

    return {
        # kernel-side layouts: (9, Cin, Cout) with tap index t = kh*3 + kw
        "w1": w1f.reshape(9, in_chans, c1), "b1": sh1,
        "w2": w2f.reshape(9, c1, c2),       "b2": sh2,
        "w3": w3.reshape(c2, embed_dim),    "b3": b3,
        # HWIO copies of the folded weights for the reference check only
        "w1_hwio": w1f, "w2_hwio": w2f,
    }


# ----------------------------------------------------------------------------
# Pure-JAX reference.  With compute_dtype=bfloat16 it mirrors the kernel's
# operand rounding (bf16 inputs/weights, f32 accumulation, bf16 y1), so only
# summation-order / rounding-boundary differences remain and a tight tolerance
# applies.  With float32 it is the plain fp32 semantics of the module
# (eval-mode BN).
# ----------------------------------------------------------------------------
def reference(x_nhwc, params, compute_dtype):
    cd = compute_dtype

    def conv3(x, w_hwio, shift):
        dn = lax.conv_dimension_numbers(x.shape, w_hwio.shape,
                                        ("NHWC", "HWIO", "NHWC"))
        y = lax.conv_general_dilated(x.astype(cd), w_hwio.astype(cd),
                                     (2, 2), ((1, 1), (1, 1)),
                                     dimension_numbers=dn,
                                     preferred_element_type=jnp.float32)
        return jnp.maximum(y + shift, 0.0)

    y1 = conv3(x_nhwc, params["w1_hwio"], params["b1"]).astype(cd)
    h2 = conv3(y1, params["w2_hwio"], params["b2"]).astype(cd)
    y3 = jnp.einsum("bhwc,ce->bhwe", h2, params["w3"].astype(cd),
                    preferred_element_type=jnp.float32) + params["b3"]
    B, H2, W2, E = y3.shape
    return y3.reshape(B, H2 * W2, E)


if __name__ == "__main__":
    key = jax.random.PRNGKey(0)
    kx, kp = jax.random.split(key)

    # small shapes: batch=2, 3 input channels, 32x32 image, embed_dim=32
    B, in_chans, img, embed_dim = 2, 3, 32, 32
    x_nchw = jax.random.normal(kx, (B, in_chans, img, img), dtype=jnp.float32)
    x_nhwc = jnp.transpose(x_nchw, (0, 2, 3, 1))   # PyTorch NCHW -> NHWC once

    params = init_params(kp, in_chans=in_chans, embed_dim=embed_dim)

    fwd = jax.jit(conv_stem_forward)               # fuse inter-stage glue
    out = jax.block_until_ready(fwd(x_nhwc, params))

    n_patches = (img // 4) * (img // 4)
    assert out.shape == (B, n_patches, embed_dim), out.shape

    # Tight check vs. a bit-matched bf16 reference (same operand rounding,
    # f32 accumulation -> only summation-order / 1-ulp boundary differences).
    ref_bf16 = reference(x_nhwc, params, jnp.bfloat16)
    if not jnp.allclose(out, ref_bf16, atol=5e-3, rtol=5e-3):
        raise AssertionError("Pallas ConvStem mismatches bf16-matched reference")

    # Semantic check vs. the full-fp32 reference (loose: covers bf16 rounding).
    ref_f32 = reference(x_nhwc, params, jnp.float32)
    if not jnp.allclose(out, ref_f32, atol=2e-2, rtol=2e-2):
        raise AssertionError("Pallas ConvStem mismatches float32 reference")

    print("KERNEL_OK")
</pallas_src>

<mosaic_0001>
module attributes {stable_mosaic.version = 11 : i64} {
  func.func @_conv_bn_relu_kernel(%arg0: i32, %arg1: memref<1x4x17x17x3xbf16, #tpu.memory_space<vmem>>, %arg2: memref<9x3x4xbf16, #tpu.memory_space<vmem>>, %arg3: memref<1x4xf32, #tpu.memory_space<vmem>>, %arg4: memref<1x256x4xbf16, #tpu.memory_space<vmem>>) attributes {dimension_semantics = [#tpu.dimension_semantics<parallel>], iteration_bounds = array<i64: 2>, scalar_prefetch = 0 : i64, scratch_operands = 0 : i64, tpu.core_type = #tpu.core_type<tc>, window_params = [{transform_indices = @transform_0, window_bounds = array<i64: 1, 4, 17, 17, 3>}, {pipeline_mode = #tpu.pipeline_mode<synchronous>, transform_indices = @transform_1, window_bounds = array<i64: 9, 3, 4>}, {pipeline_mode = #tpu.pipeline_mode<synchronous>, transform_indices = @transform_2, window_bounds = array<i64: 1, 4>}, {transform_indices = @transform_3, window_bounds = array<i64: 1, 256, 4>}]} {
    %c0 = arith.constant 0 : index
    %c0_0 = arith.constant 0 : index
    %c0_1 = arith.constant 0 : index
    %c0_2 = arith.constant 0 : index
    %c0_3 = arith.constant 0 : index
    %0 = vector.load %arg1[%c0, %c0_0, %c0_1, %c0_2, %c0_3] : memref<1x4x17x17x3xbf16, #tpu.memory_space<vmem>>, vector<1x1x16x17x3xbf16>
    %1 = vector.shape_cast %0 : vector<1x1x16x17x3xbf16> to vector<16x17x3xbf16>
    %2 = arith.extf %1 : vector<16x17x3xbf16> to vector<16x17x3xf32>
    %3 = vector.extract_strided_slice %2 {offsets = [0, 0, 0], sizes = [16, 16, 3], strides = [1, 1, 1]} : vector<16x17x3xf32> to vector<16x16x3xf32>
    %4 = vector.shape_cast %3 : vector<16x16x3xf32> to vector<256x3xf32>
    %5 = arith.truncf %4 : vector<256x3xf32> to vector<256x3xbf16>
    %c0_4 = arith.constant 0 : index
    %c0_5 = arith.constant 0 : index
    %c0_6 = arith.constant 0 : index
    %6 = vector.load %arg2[%c0_4, %c0_5, %c0_6] : memref<9x3x4xbf16, #tpu.memory_space<vmem>>, vector<1x3x4xbf16>
    %7 = vector.shape_cast %6 : vector<1x3x4xbf16> to vector<3x4xbf16>
    %cst = arith.constant dense<0.000000e+00> : vector<256x4xf32>
    %8 = tpu.matmul %5, %7, %cst {dimension_numbers = #tpu.dot_dimension_numbers<[1], [0], [0], [1], [0, 0, 1, 1], [], []>} : vector<256x3xbf16>, vector<3x4xbf16>, vector<256x4xf32> -> vector<256x4xf32>
    %c0_7 = arith.constant 0 : index
    %c1 = arith.constant 1 : index
    %c0_8 = arith.constant 0 : index
    %c0_9 = arith.constant 0 : index
    %c0_10 = arith.constant 0 : index
    %9 = vector.load %arg1[%c0_7, %c1, %c0_8, %c0_9, %c0_10] : memref<1x4x17x17x3xbf16, #tpu.memory_space<vmem>>, vector<1x1x16x17x3xbf16>
    %10 = vector.shape_cast %9 : vector<1x1x16x17x3xbf16> to vector<16x17x3xbf16>
    %11 = arith.extf %10 : vector<16x17x3xbf16> to vector<16x17x3xf32>
    %12 = vector.extract_strided_slice %11 {offsets = [0, 0, 0], sizes = [16, 16, 3], strides = [1, 1, 1]} : vector<16x17x3xf32> to vector<16x16x3xf32>
    %13 = vector.shape_cast %12 : vector<16x16x3xf32> to vector<256x3xf32>
    %14 = arith.truncf %13 : vector<256x3xf32> to vector<256x3xbf16>
    %c1_11 = arith.constant 1 : index
    %c0_12 = arith.constant 0 : index
    %c0_13 = arith.constant 0 : index
    %15 = vector.load %arg2[%c1_11, %c0_12, %c0_13] : memref<9x3x4xbf16, #tpu.memory_space<vmem>>, vector<1x3x4xbf16>
    %16 = vector.shape_cast %15 : vector<1x3x4xbf16> to vector<3x4xbf16>
    %cst_14 = arith.constant dense<0.000000e+00> : vector<256x4xf32>
    %17 = tpu.matmul %14, %16, %cst_14 {dimension_numbers = #tpu.dot_dimension_numbers<[1], [0], [0], [1], [0, 0, 1, 1], [], []>} : vector<256x3xbf16>, vector<3x4xbf16>, vector<256x4xf32> -> vector<256x4xf32>
    %18 = arith.addf %8, %17 : vector<256x4xf32>
    %c0_15 = arith.constant 0 : index
    %c0_16 = arith.constant 0 : index
    %c0_17 = arith.constant 0 : index
    %c0_18 = arith.constant 0 : index
    %c0_19 = arith.constant 0 : index
    %19 = vector.load %arg1[%c0_15, %c0_16, %c0_17, %c0_18, %c0_19] : memref<1x4x17x17x3xbf16, #tpu.memory_space<vmem>>, vector<1x1x16x17x3xbf16>
    %20 = vector.shape_cast %19 : vector<1x1x16x17x3xbf16> to vector<16x17x3xbf16>
    %21 = arith.extf %20 : vector<16x17x3xbf16> to vector<16x17x3xf32>
    %22 = vector.extract_strided_slice %21 {offsets = [0, 1, 0], sizes = [16, 16, 3], strides = [1, 1, 1]} : vector<16x17x3xf32> to vector<16x16x3xf32>
    %23 = vector.shape_cast %22 : vector<16x16x3xf32> to vector<256x3xf32>
    %24 = arith.truncf %23 : vector<256x3xf32> to vector<256x3xbf16>
    %c2 = arith.constant 2 : index
    %c0_20 = arith.constant 0 : index
    %c0_21 = arith.constant 0 : index
    %25 = vector.load %arg2[%c2, %c0_20, %c0_21] : memref<9x3x4xbf16, #tpu.memory_space<vmem>>, vector<1x3x4xbf16>
    %26 = vector.shape_cast %25 : vector<1x3x4xbf16> to vector<3x4xbf16>
    %cst_22 = arith.constant dense<0.000000e+00> : vector<256x4xf32>
    %27 = tpu.matmul %24, %26, %cst_22 {dimension_numbers = #tpu.dot_dimension_numbers<[1], [0], [0], [1], [0, 0, 1, 1], [], []>} : vector<256x3xbf16>, vector<3x4xbf16>, vector<256x4xf32> -> vector<256x4xf32>
    %28 = arith.addf %18, %27 : vector<256x4xf32>
    %c0_23 = arith.constant 0 : index
    %c2_24 = arith.constant 2 : index
    %c0_25 = arith.constant 0 : index
    %c0_26 = arith.constant 0 : index
    %c0_27 = arith.constant 0 : index
    %29 = vector.load %arg1[%c0_23, %c2_24, %c0_25, %c0_26, %c0_27] : memref<1x4x17x17x3xbf16, #tpu.memory_space<vmem>>, vector<1x1x16x17x3xbf16>
    %30 = vector.shape_cast %29 : vector<1x1x16x17x3xbf16> to vector<16x17x3xbf16>
    %31 = arith.extf %30 : vector<16x17x3xbf16> to vector<16x17x3xf32>
    %32 = vector.extract_strided_slice %31 {offsets = [0, 0, 0], sizes = [16, 16, 3], strides = [1, 1, 1]} : vector<16x17x3xf32> to vector<16x16x3xf32>
    %33 = vector.shape_cast %32 : vector<16x16x3xf32> to vector<256x3xf32>
    %34 = arith.truncf %33 : vector<256x3xf32> to vector<256x3xbf16>
    %c3 = arith.constant 3 : index
    %c0_28 = arith.constant 0 : index
    %c0_29 = arith.constant 0 : index
    %35 = vector.load %arg2[%c3, %c0_28, %c0_29] : memref<9x3x4xbf16, #tpu.memory_space<vmem>>, vector<1x3x4xbf16>
    %36 = vector.shape_cast %35 : vector<1x3x4xbf16> to vector<3x4xbf16>
    %cst_30 = arith.constant dense<0.000000e+00> : vector<256x4xf32>
    %37 = tpu.matmul %34, %36, %cst_30 {dimension_numbers = #tpu.dot_dimension_numbers<[1], [0], [0], [1], [0, 0, 1, 1], [], []>} : vector<256x3xbf16>, vector<3x4xbf16>, vector<256x4xf32> -> vector<256x4xf32>
    %38 = arith.addf %28, %37 : vector<256x4xf32>
    %c0_31 = arith.constant 0 : index
    %c3_32 = arith.constant 3 : index
    %c0_33 = arith.constant 0 : index
    %c0_34 = arith.constant 0 : index
    %c0_35 = arith.constant 0 : index
    %39 = vector.load %arg1[%c0_31, %c3_32, %c0_33, %c0_34, %c0_35] : memref<1x4x17x17x3xbf16, #tpu.memory_space<vmem>>, vector<1x1x16x17x3xbf16>
    %40 = vector.shape_cast %39 : vector<1x1x16x17x3xbf16> to vector<16x17x3xbf16>
    %41 = arith.extf %40 : vector<16x17x3xbf16> to vector<16x17x3xf32>
    %42 = vector.extract_strided_slice %41 {offsets = [0, 0, 0], sizes = [16, 16, 3], strides = [1, 1, 1]} : vector<16x17x3xf32> to vector<16x16x3xf32>
    %43 = vector.shape_cast %42 : vector<16x16x3xf32> to vector<256x3xf32>
    %44 = arith.truncf %43 : vector<256x3xf32> to vector<256x3xbf16>
    %c4 = arith.constant 4 : index
    %c0_36 = arith.constant 0 : index
    %c0_37 = arith.constant 0 : index
    %45 = vector.load %arg2[%c4, %c0_36, %c0_37] : memref<9x3x4xbf16, #tpu.memory_space<vmem>>, vector<1x3x4xbf16>
    %46 = vector.shape_cast %45 : vector<1x3x4xbf16> to vector<3x4xbf16>
    %cst_38 = arith.constant dense<0.000000e+00> : vector<256x4xf32>
    %47 = tpu.matmul %44, %46, %cst_38 {dimension_numbers = #tpu.dot_dimension_numbers<[1], [0], [0], [1], [0, 0, 1, 1], [], []>} : vector<256x3xbf16>, vector<3x4xbf16>, vector<256x4xf32> -> vector<256x4xf32>
    %48 = arith.addf %38, %47 : vector<256x4xf32>
    %c0_39 = arith.constant 0 : index
    %c2_40 = arith.constant 2 : index
    %c0_41 = arith.constant 0 : index
    %c0_42 = arith.constant 0 : index
    %c0_43 = arith.constant 0 : index
    %49 = vector.load %arg1[%c0_39, %c2_40, %c0_41, %c0_42, %c0_43] : memref<1x4x17x17x3xbf16, #tpu.memory_space<vmem>>, vector<1x1x16x17x3xbf16>
    %50 = vector.shape_cast %49 : vector<1x1x16x17x3xbf16> to vector<16x17x3xbf16>
    %51 = arith.extf %50 : vector<16x17x3xbf16> to vector<16x17x3xf32>
    %52 = vector.extract_strided_slice %51 {offsets = [0, 1, 0], sizes = [16, 16, 3], strides = [1, 1, 1]} : vector<16x17x3xf32> to vector<16x16x3xf32>
    %53 = vector.shape_cast %52 : vector<16x16x3xf32> to vector<256x3xf32>
    %54 = arith.truncf %53 : vector<256x3xf32> to vector<256x3xbf16>
    %c5 = arith.constant 5 : index
    %c0_44 = arith.constant 0 : index
    %c0_45 = arith.constant 0 : index
    %55 = vector.load %arg2[%c5, %c0_44, %c0_45] : memref<9x3x4xbf16, #tpu.memory_space<vmem>>, vector<1x3x4xbf16>
    %56 = vector.shape_cast %55 : vector<1x3x4xbf16> to vector<3x4xbf16>
    %cst_46 = arith.constant dense<0.000000e+00> : vector<256x4xf32>
    %57 = tpu.matmul %54, %56, %cst_46 {dimension_numbers = #tpu.dot_dimension_numbers<[1], [0], [0], [1], [0, 0, 1, 1], [], []>} : vector<256x3xbf16>, vector<3x4xbf16>, vector<256x4xf32> -> vector<256x4xf32>
    %58 = arith.addf %48, %57 : vector<256x4xf32>
    %c0_47 = arith.constant 0 : index
    %c0_48 = arith.constant 0 : index
    %c1_49 = arith.constant 1 : index
    %c0_50 = arith.constant 0 : index
    %c0_51 = arith.constant 0 : index
    %59 = vector.load %arg1[%c0_47, %c0_48, %c1_49, %c0_50, %c0_51] : memref<1x4x17x17x3xbf16, #tpu.memory_space<vmem>>, vector<1x1x16x17x3xbf16>
    %60 = vector.shape_cast %59 : vector<1x1x16x17x3xbf16> to vector<16x17x3xbf16>
    %61 = arith.extf %60 : vector<16x17x3xbf16> to vector<16x17x3xf32>
    %62 = vector.extract_strided_slice %61 {offsets = [0, 0, 0], sizes = [16, 16, 3], strides = [1, 1, 1]} : vector<16x17x3xf32> to vector<16x16x3xf32>
    %63 = vector.shape_cast %62 : vector<16x16x3xf32> to vector<256x3xf32>
    %64 = arith.truncf %63 : vector<256x3xf32> to vector<256x3xbf16>
    %c6 = arith.constant 6 : index
    %c0_52 = arith.constant 0 : index
    %c0_53 = arith.constant 0 : index
    %65 = vector.load %arg2[%c6, %c0_52, %c0_53] : memref<9x3x4xbf16, #tpu.memory_space<vmem>>, vector<1x3x4xbf16>
    %66 = vector.shape_cast %65 : vector<1x3x4xbf16> to vector<3x4xbf16>
    %cst_54 = arith.constant dense<0.000000e+00> : vector<256x4xf32>
    %67 = tpu.matmul %64, %66, %cst_54 {dimension_numbers = #tpu.dot_dimension_numbers<[1], [0], [0], [1], [0, 0, 1, 1], [], []>} : vector<256x3xbf16>, vector<3x4xbf16>, vector<256x4xf32> -> vector<256x4xf32>
    %68 = arith.addf %58, %67 : vector<256x4xf32>
    %c0_55 = arith.constant 0 : index
    %c1_56 = arith.constant 1 : index
    %c1_57 = arith.constant 1 : index
    %c0_58 = arith.constant 0 : index
    %c0_59 = arith.constant 0 : index
    %69 = vector.load %arg1[%c0_55, %c1_56, %c1_57, %c0_58, %c0_59] : memref<1x4x17x17x3xbf16, #tpu.memory_space<vmem>>, vector<1x1x16x17x3xbf16>
    %70 = vector.shape_cast %69 : vector<1x1x16x17x3xbf16> to vector<16x17x3xbf16>
    %71 = arith.extf %70 : vector<16x17x3xbf16> to vector<16x17x3xf32>
    %72 = vector.extract_strided_slice %71 {offsets = [0, 0, 0], sizes = [16, 16, 3], strides = [1, 1, 1]} : vector<16x17x3xf32> to vector<16x16x3xf32>
    %73 = vector.shape_cast %72 : vector<16x16x3xf32> to vector<256x3xf32>
    %74 = arith.truncf %73 : vector<256x3xf32> to vector<256x3xbf16>
    %c7 = arith.constant 7 : index
    %c0_60 = arith.constant 0 : index
    %c0_61 = arith.constant 0 : index
    %75 = vector.load %arg2[%c7, %c0_60, %c0_61] : memref<9x3x4xbf16, #tpu.memory_space<vmem>>, vector<1x3x4xbf16>
    %76 = vector.shape_cast %75 : vector<1x3x4xbf16> to vector<3x4xbf16>
    %cst_62 = arith.constant dense<0.000000e+00> : vector<256x4xf32>
    %77 = tpu.matmul %74, %76, %cst_62 {dimension_numbers = #tpu.dot_dimension_numbers<[1], [0], [0], [1], [0, 0, 1, 1], [], []>} : vector<256x3xbf16>, vector<3x4xbf16>, vector<256x4xf32> -> vector<256x4xf32>
    %78 = arith.addf %68, %77 : vector<256x4xf32>
    %c0_63 = arith.constant 0 : index
    %c0_64 = arith.constant 0 : index
    %c1_65 = arith.constant 1 : index
    %c0_66 = arith.constant 0 : index
    %c0_67 = arith.constant 0 : index
    %79 = vector.load %arg1[%c0_63, %c0_64, %c1_65, %c0_66, %c0_67] : memref<1x4x17x17x3xbf16, #tpu.memory_space<vmem>>, vector<1x1x16x17x3xbf16>
    %80 = vector.shape_cast %79 : vector<1x1x16x17x3xbf16> to vector<16x17x3xbf16>
    %81 = arith.extf %80 : vector<16x17x3xbf16> to vector<16x17x3xf32>
    %82 = vector.extract_strided_slice %81 {offsets = [0, 1, 0], sizes = [16, 16, 3], strides = [1, 1, 1]} : vector<16x17x3xf32> to vector<16x16x3xf32>
    %83 = vector.shape_cast %82 : vector<16x16x3xf32> to vector<256x3xf32>
    %84 = arith.truncf %83 : vector<256x3xf32> to vector<256x3xbf16>
    %c8 = arith.constant 8 : index
    %c0_68 = arith.constant 0 : index
    %c0_69 = arith.constant 0 : index
    %85 = vector.load %arg2[%c8, %c0_68, %c0_69] : memref<9x3x4xbf16, #tpu.memory_space<vmem>>, vector<1x3x4xbf16>
    %86 = vector.shape_cast %85 : vector<1x3x4xbf16> to vector<3x4xbf16>
    %cst_70 = arith.constant dense<0.000000e+00> : vector<256x4xf32>
    %87 = tpu.matmul %84, %86, %cst_70 {dimension_numbers = #tpu.dot_dimension_numbers<[1], [0], [0], [1], [0, 0, 1, 1], [], []>} : vector<256x3xbf16>, vector<3x4xbf16>, vector<256x4xf32> -> vector<256x4xf32>
    %88 = arith.addf %78, %87 : vector<256x4xf32>
    %c0_71 = arith.constant 0 : index
    %c0_72 = arith.constant 0 : index
    %89 = vector.load %arg3[%c0_71, %c0_72] : memref<1x4xf32, #tpu.memory_space<vmem>>, vector<1x4xf32>
    %90 = vector.broadcast %89 : vector<1x4xf32> to vector<256x4xf32>
    %91 = arith.addf %88, %90 : vector<256x4xf32>
    %cst_73 = arith.constant 0.000000e+00 : f32
    %92 = vector.broadcast %cst_73 : f32 to vector<256x4xf32>
    %93 = arith.maximumf %91, %92 : vector<256x4xf32>
    %94 = arith.truncf %93 : vector<256x4xf32> to vector<256x4xbf16>
    %c0_74 = arith.constant 0 : index
    %c0_75 = arith.constant 0 : index
    %c0_76 = arith.constant 0 : index
    %95 = vector.load %arg4[%c0_74, %c0_75, %c0_76] : memref<1x256x4xbf16, #tpu.memory_space<vmem>>, vector<1x256x4xbf16>
    %96 = vector.shape_cast %95 : vector<1x256x4xbf16> to vector<256x4xbf16>
    %97 = vector.shape_cast %94 : vector<256x4xbf16> to vector<1x256x4xbf16>
    tpu.vector_store %arg4[%c0_74, %c0_75, %c0_76], %97 {strides = array<i32>} : memref<1x256x4xbf16, #tpu.memory_space<vmem>>, vector<1x256x4xbf16>,
    return
  }
  func.func @transform_0(%arg0: i32) -> (i32, i32, i32, i32, i32) {
    %c0_i32 = arith.constant 0 : i32
    %c0_i32_0 = arith.constant 0 : i32
    %c0_i32_1 = arith.constant 0 : i32
    %c0_i32_2 = arith.constant 0 : i32
    %c0_i32_3 = arith.constant 0 : i32
    return %arg0, %c0_i32, %c0_i32_0, %c0_i32_1, %c0_i32_2 : i32, i32, i32, i32, i32
  }
  func.func @transform_1(%arg0: i32) -> (i32, i32, i32) {
    %c0_i32 = arith.constant 0 : i32
    %c0_i32_0 = arith.constant 0 : i32
    %c0_i32_1 = arith.constant 0 : i32
    %c0_i32_2 = arith.constant 0 : i32
    return %c0_i32, %c0_i32_0, %c0_i32_1 : i32, i32, i32
  }
  func.func @transform_2(%arg0: i32) -> (i32, i32) {
    %c0_i32 = arith.constant 0 : i32
    %c0_i32_0 = arith.constant 0 : i32
    %c0_i32_1 = arith.constant 0 : i32
    return %c0_i32, %c0_i32_0 : i32, i32
  }
  func.func @transform_3(%arg0: i32) -> (i32, i32, i32) {
    %c0_i32 = arith.constant 0 : i32
    %c0_i32_0 = arith.constant 0 : i32
    %c0_i32_1 = arith.constant 0 : i32
    return %arg0, %c0_i32, %c0_i32_0 : i32, i32, i32
  }
}

module attributes {stable_mosaic.version = 11 : i64} {
  func.func @_conv_bn_relu_proj_kernel(%arg0: i32, %arg1: memref<1x4x9x9x4xbf16, #tpu.memory_space<vmem>>, %arg2: memref<9x4x8xbf16, #tpu.memory_space<vmem>>, %arg3: memref<1x8xf32, #tpu.memory_space<vmem>>, %arg4: memref<8x32xbf16, #tpu.memory_space<vmem>>, %arg5: memref<1x32xf32, #tpu.memory_space<vmem>>, %arg6: memref<1x64x32xf32, #tpu.memory_space<vmem>>) attributes {dimension_semantics = [#tpu.dimension_semantics<parallel>], iteration_bounds = array<i64: 2>, scalar_prefetch = 0 : i64, scratch_operands = 0 : i64, tpu.core_type = #tpu.core_type<tc>, window_params = [{transform_indices = @transform_0, window_bounds = array<i64: 1, 4, 9, 9, 4>}, {pipeline_mode = #tpu.pipeline_mode<synchronous>, transform_indices = @transform_1, window_bounds = array<i64: 9, 4, 8>}, {pipeline_mode = #tpu.pipeline_mode<synchronous>, transform_indices = @transform_2, window_bounds = array<i64: 1, 8>}, {pipeline_mode = #tpu.pipeline_mode<synchronous>, transform_indices = @transform_3, window_bounds = array<i64: 8, 32>}, {pipeline_mode = #tpu.pipeline_mode<synchronous>, transform_indices = @transform_4, window_bounds = array<i64: 1, 32>}, {transform_indices = @transform_5, window_bounds = array<i64: 1, 64, 32>}]} {
    %c0 = arith.constant 0 : index
    %c0_0 = arith.constant 0 : index
    %c0_1 = arith.constant 0 : index
    %c0_2 = arith.constant 0 : index
    %c0_3 = arith.constant 0 : index
    %0 = vector.load %arg1[%c0, %c0_0, %c0_1, %c0_2, %c0_3] : memref<1x4x9x9x4xbf16, #tpu.memory_space<vmem>>, vector<1x1x8x9x4xbf16>
    %1 = vector.shape_cast %0 : vector<1x1x8x9x4xbf16> to vector<8x9x4xbf16>
    %2 = arith.extf %1 : vector<8x9x4xbf16> to vector<8x9x4xf32>
    %3 = vector.extract_strided_slice %2 {offsets = [0, 0, 0], sizes = [8, 8, 4], strides = [1, 1, 1]} : vector<8x9x4xf32> to vector<8x8x4xf32>
    %4 = vector.shape_cast %3 : vector<8x8x4xf32> to vector<64x4xf32>
    %5 = arith.truncf %4 : vector<64x4xf32> to vector<64x4xbf16>
    %c0_4 = arith.constant 0 : index
    %c0_5 = arith.constant 0 : index
    %c0_6 = arith.constant 0 : index
    %6 = vector.load %arg2[%c0_4, %c0_5, %c0_6] : memref<9x4x8xbf16, #tpu.memory_space<vmem>>, vector<1x4x8xbf16>
    %7 = vector.shape_cast %6 : vector<1x4x8xbf16> to vector<4x8xbf16>
    %cst = arith.constant dense<0.000000e+00> : vector<64x8xf32>
    %8 = tpu.matmul %5, %7, %cst {dimension_numbers = #tpu.dot_dimension_numbers<[1], [0], [0], [1], [0, 0, 1, 1], [], []>} : vector<64x4xbf16>, vector<4x8xbf16>, vector<64x8xf32> -> vector<64x8xf32>
    %c0_7 = arith.constant 0 : index
    %c1 = arith.constant 1 : index
    %c0_8 = arith.constant 0 : index
    %c0_9 = arith.constant 0 : index
    %c0_10 = arith.constant 0 : index
    %9 = vector.load %arg1[%c0_7, %c1, %c0_8, %c0_9, %c0_10] : memref<1x4x9x9x4xbf16, #tpu.memory_space<vmem>>, vector<1x1x8x9x4xbf16>
    %10 = vector.shape_cast %9 : vector<1x1x8x9x4xbf16> to vector<8x9x4xbf16>
    %11 = arith.extf %10 : vector<8x9x4xbf16> to vector<8x9x4xf32>
    %12 = vector.extract_strided_slice %11 {offsets = [0, 0, 0], sizes = [8, 8, 4], strides = [1, 1, 1]} : vector<8x9x4xf32> to vector<8x8x4xf32>
    %13 = vector.shape_cast %12 : vector<8x8x4xf32> to vector<64x4xf32>
    %14 = arith.truncf %13 : vector<64x4xf32> to vector<64x4xbf16>
    %c1_11 = arith.constant 1 : index
    %c0_12 = arith.constant 0 : index
    %c0_13 = arith.constant 0 : index
    %15 = vector.load %arg2[%c1_11, %c0_12, %c0_13] : memref<9x4x8xbf16, #tpu.memory_space<vmem>>, vector<1x4x8xbf16>
    %16 = vector.shape_cast %15 : vector<1x4x8xbf16> to vector<4x8xbf16>
    %cst_14 = arith.constant dense<0.000000e+00> : vector<64x8xf32>
    %17 = tpu.matmul %14, %16, %cst_14 {dimension_numbers = #tpu.dot_dimension_numbers<[1], [0], [0], [1], [0, 0, 1, 1], [], []>} : vector<64x4xbf16>, vector<4x8xbf16>, vector<64x8xf32> -> vector<64x8xf32>
    %18 = arith.addf %8, %17 : vector<64x8xf32>
    %c0_15 = arith.constant 0 : index
    %c0_16 = arith.constant 0 : index
    %c0_17 = arith.constant 0 : index
    %c0_18 = arith.constant 0 : index
    %c0_19 = arith.constant 0 : index
    %19 = vector.load %arg1[%c0_15, %c0_16, %c0_17, %c0_18, %c0_19] : memref<1x4x9x9x4xbf16, #tpu.memory_space<vmem>>, vector<1x1x8x9x4xbf16>
    %20 = vector.shape_cast %19 : vector<1x1x8x9x4xbf16> to vector<8x9x4xbf16>
    %21 = arith.extf %20 : vector<8x9x4xbf16> to vector<8x9x4xf32>
    %22 = vector.extract_strided_slice %21 {offsets = [0, 1, 0], sizes = [8, 8, 4], strides = [1, 1, 1]} : vector<8x9x4xf32> to vector<8x8x4xf32>
    %23 = vector.shape_cast %22 : vector<8x8x4xf32> to vector<64x4xf32>
    %24 = arith.truncf %23 : vector<64x4xf32> to vector<64x4xbf16>
    %c2 = arith.constant 2 : index
    %c0_20 = arith.constant 0 : index
    %c0_21 = arith.constant 0 : index
    %25 = vector.load %arg2[%c2, %c0_20, %c0_21] : memref<9x4x8xbf16, #tpu.memory_space<vmem>>, vector<1x4x8xbf16>
    %26 = vector.shape_cast %25 : vector<1x4x8xbf16> to vector<4x8xbf16>
    %cst_22 = arith.constant dense<0.000000e+00> : vector<64x8xf32>
    %27 = tpu.matmul %24, %26, %cst_22 {dimension_numbers = #tpu.dot_dimension_numbers<[1], [0], [0], [1], [0, 0, 1, 1], [], []>} : vector<64x4xbf16>, vector<4x8xbf16>, vector<64x8xf32> -> vector<64x8xf32>
    %28 = arith.addf %18, %27 : vector<64x8xf32>
    %c0_23 = arith.constant 0 : index
    %c2_24 = arith.constant 2 : index
    %c0_25 = arith.constant 0 : index
    %c0_26 = arith.constant 0 : index
    %c0_27 = arith.constant 0 : index
    %29 = vector.load %arg1[%c0_23, %c2_24, %c0_25, %c0_26, %c0_27] : memref<1x4x9x9x4xbf16, #tpu.memory_space<vmem>>, vector<1x1x8x9x4xbf16>
    %30 = vector.shape_cast %29 : vector<1x1x8x9x4xbf16> to vector<8x9x4xbf16>
    %31 = arith.extf %30 : vector<8x9x4xbf16> to vector<8x9x4xf32>
    %32 = vector.extract_strided_slice %31 {offsets = [0, 0, 0], sizes = [8, 8, 4], strides = [1, 1, 1]} : vector<8x9x4xf32> to vector<8x8x4xf32>
    %33 = vector.shape_cast %32 : vector<8x8x4xf32> to vector<64x4xf32>
    %34 = arith.truncf %33 : vector<64x4xf32> to vector<64x4xbf16>
    %c3 = arith.constant 3 : index
    %c0_28 = arith.constant 0 : index
    %c0_29 = arith.constant 0 : index
    %35 = vector.load %arg2[%c3, %c0_28, %c0_29] : memref<9x4x8xbf16, #tpu.memory_space<vmem>>, vector<1x4x8xbf16>
    %36 = vector.shape_cast %35 : vector<1x4x8xbf16> to vector<4x8xbf16>
    %cst_30 = arith.constant dense<0.000000e+00> : vector<64x8xf32>
    %37 = tpu.matmul %34, %36, %cst_30 {dimension_numbers = #tpu.dot_dimension_numbers<[1], [0], [0], [1], [0, 0, 1, 1], [], []>} : vector<64x4xbf16>, vector<4x8xbf16>, vector<64x8xf32> -> vector<64x8xf32>
    %38 = arith.addf %28, %37 : vector<64x8xf32>
    %c0_31 = arith.constant 0 : index
    %c3_32 = arith.constant 3 : index
    %c0_33 = arith.constant 0 : index
    %c0_34 = arith.constant 0 : index
    %c0_35 = arith.constant 0 : index
    %39 = vector.load %arg1[%c0_31, %c3_32, %c0_33, %c0_34, %c0_35] : memref<1x4x9x9x4xbf16, #tpu.memory_space<vmem>>, vector<1x1x8x9x4xbf16>
    %40 = vector.shape_cast %39 : vector<1x1x8x9x4xbf16> to vector<8x9x4xbf16>
    %41 = arith.extf %40 : vector<8x9x4xbf16> to vector<8x9x4xf32>
    %42 = vector.extract_strided_slice %41 {offsets = [0, 0, 0], sizes = [8, 8, 4], strides = [1, 1, 1]} : vector<8x9x4xf32> to vector<8x8x4xf32>
    %43 = vector.shape_cast %42 : vector<8x8x4xf32> to vector<64x4xf32>
    %44 = arith.truncf %43 : vector<64x4xf32> to vector<64x4xbf16>
    %c4 = arith.constant 4 : index
    %c0_36 = arith.constant 0 : index
    %c0_37 = arith.constant 0 : index
    %45 = vector.load %arg2[%c4, %c0_36, %c0_37] : memref<9x4x8xbf16, #tpu.memory_space<vmem>>, vector<1x4x8xbf16>
    %46 = vector.shape_cast %45 : vector<1x4x8xbf16> to vector<4x8xbf16>
    %cst_38 = arith.constant dense<0.000000e+00> : vector<64x8xf32>
    %47 = tpu.matmul %44, %46, %cst_38 {dimension_numbers = #tpu.dot_dimension_numbers<[1], [0], [0], [1], [0, 0, 1, 1], [], []>} : vector<64x4xbf16>, vector<4x8xbf16>, vector<64x8xf32> -> vector<64x8xf32>
    %48 = arith.addf %38, %47 : vector<64x8xf32>
    %c0_39 = arith.constant 0 : index
    %c2_40 = arith.constant 2 : index
    %c0_41 = arith.constant 0 : index
    %c0_42 = arith.constant 0 : index
    %c0_43 = arith.constant 0 : index
    %49 = vector.load %arg1[%c0_39, %c2_40, %c0_41, %c0_42, %c0_43] : memref<1x4x9x9x4xbf16, #tpu.memory_space<vmem>>, vector<1x1x8x9x4xbf16>
    %50 = vector.shape_cast %49 : vector<1x1x8x9x4xbf16> to vector<8x9x4xbf16>
    %51 = arith.extf %50 : vector<8x9x4xbf16> to vector<8x9x4xf32>
    %52 = vector.extract_strided_slice %51 {offsets = [0, 1, 0], sizes = [8, 8, 4], strides = [1, 1, 1]} : vector<8x9x4xf32> to vector<8x8x4xf32>
    %53 = vector.shape_cast %52 : vector<8x8x4xf32> to vector<64x4xf32>
    %54 = arith.truncf %53 : vector<64x4xf32> to vector<64x4xbf16>
    %c5 = arith.constant 5 : index
    %c0_44 = arith.constant 0 : index
    %c0_45 = arith.constant 0 : index
    %55 = vector.load %arg2[%c5, %c0_44, %c0_45] : memref<9x4x8xbf16, #tpu.memory_space<vmem>>, vector<1x4x8xbf16>
    %56 = vector.shape_cast %55 : vector<1x4x8xbf16> to vector<4x8xbf16>
    %cst_46 = arith.constant dense<0.000000e+00> : vector<64x8xf32>
    %57 = tpu.matmul %54, %56, %cst_46 {dimension_numbers = #tpu.dot_dimension_numbers<[1], [0], [0], [1], [0, 0, 1, 1], [], []>} : vector<64x4xbf16>, vector<4x8xbf16>, vector<64x8xf32> -> vector<64x8xf32>
    %58 = arith.addf %48, %57 : vector<64x8xf32>
    %c0_47 = arith.constant 0 : index
    %c0_48 = arith.constant 0 : index
    %c1_49 = arith.constant 1 : index
    %c0_50 = arith.constant 0 : index
    %c0_51 = arith.constant 0 : index
    %59 = vector.load %arg1[%c0_47, %c0_48, %c1_49, %c0_50, %c0_51] : memref<1x4x9x9x4xbf16, #tpu.memory_space<vmem>>, vector<1x1x8x9x4xbf16>
    %60 = vector.shape_cast %59 : vector<1x1x8x9x4xbf16> to vector<8x9x4xbf16>
    %61 = arith.extf %60 : vector<8x9x4xbf16> to vector<8x9x4xf32>
    %62 = vector.extract_strided_slice %61 {offsets = [0, 0, 0], sizes = [8, 8, 4], strides = [1, 1, 1]} : vector<8x9x4xf32> to vector<8x8x4xf32>
    %63 = vector.shape_cast %62 : vector<8x8x4xf32> to vector<64x4xf32>
    %64 = arith.truncf %63 : vector<64x4xf32> to vector<64x4xbf16>
    %c6 = arith.constant 6 : index
    %c0_52 = arith.constant 0 : index
    %c0_53 = arith.constant 0 : index
    %65 = vector.load %arg2[%c6, %c0_52, %c0_53] : memref<9x4x8xbf16, #tpu.memory_space<vmem>>, vector<1x4x8xbf16>
    %66 = vector.shape_cast %65 : vector<1x4x8xbf16> to vector<4x8xbf16>
    %cst_54 = arith.constant dense<0.000000e+00> : vector<64x8xf32>
    %67 = tpu.matmul %64, %66, %cst_54 {dimension_numbers = #tpu.dot_dimension_numbers<[1], [0], [0], [1], [0, 0, 1, 1], [], []>} : vector<64x4xbf16>, vector<4x8xbf16>, vector<64x8xf32> -> vector<64x8xf32>
    %68 = arith.addf %58, %67 : vector<64x8xf32>
    %c0_55 = arith.constant 0 : index
    %c1_56 = arith.constant 1 : index
    %c1_57 = arith.constant 1 : index
    %c0_58 = arith.constant 0 : index
    %c0_59 = arith.constant 0 : index
    %69 = vector.load %arg1[%c0_55, %c1_56, %c1_57, %c0_58, %c0_59] : memref<1x4x9x9x4xbf16, #tpu.memory_space<vmem>>, vector<1x1x8x9x4xbf16>
    %70 = vector.shape_cast %69 : vector<1x1x8x9x4xbf16> to vector<8x9x4xbf16>
    %71 = arith.extf %70 : vector<8x9x4xbf16> to vector<8x9x4xf32>
    %72 = vector.extract_strided_slice %71 {offsets = [0, 0, 0], sizes = [8, 8, 4], strides = [1, 1, 1]} : vector<8x9x4xf32> to vector<8x8x4xf32>
    %73 = vector.shape_cast %72 : vector<8x8x4xf32> to vector<64x4xf32>
    %74 = arith.truncf %73 : vector<64x4xf32> to vector<64x4xbf16>
    %c7 = arith.constant 7 : index
    %c0_60 = arith.constant 0 : index
    %c0_61 = arith.constant 0 : index
    %75 = vector.load %arg2[%c7, %c0_60, %c0_61] : memref<9x4x8xbf16, #tpu.memory_space<vmem>>, vector<1x4x8xbf16>
    %76 = vector.shape_cast %75 : vector<1x4x8xbf16> to vector<4x8xbf16>
    %cst_62 = arith.constant dense<0.000000e+00> : vector<64x8xf32>
    %77 = tpu.matmul %74, %76, %cst_62 {dimension_numbers = #tpu.dot_dimension_numbers<[1], [0], [0], [1], [0, 0, 1, 1], [], []>} : vector<64x4xbf16>, vector<4x8xbf16>, vector<64x8xf32> -> vector<64x8xf32>
    %78 = arith.addf %68, %77 : vector<64x8xf32>
    %c0_63 = arith.constant 0 : index
    %c0_64 = arith.constant 0 : index
    %c1_65 = arith.constant 1 : index
    %c0_66 = arith.constant 0 : index
    %c0_67 = arith.constant 0 : index
    %79 = vector.load %arg1[%c0_63, %c0_64, %c1_65, %c0_66, %c0_67] : memref<1x4x9x9x4xbf16, #tpu.memory_space<vmem>>, vector<1x1x8x9x4xbf16>
    %80 = vector.shape_cast %79 : vector<1x1x8x9x4xbf16> to vector<8x9x4xbf16>
    %81 = arith.extf %80 : vector<8x9x4xbf16> to vector<8x9x4xf32>
    %82 = vector.extract_strided_slice %81 {offsets = [0, 1, 0], sizes = [8, 8, 4], strides = [1, 1, 1]} : vector<8x9x4xf32> to vector<8x8x4xf32>
    %83 = vector.shape_cast %82 : vector<8x8x4xf32> to vector<64x4xf32>
    %84 = arith.truncf %83 : vector<64x4xf32> to vector<64x4xbf16>
    %c8 = arith.constant 8 : index
    %c0_68 = arith.constant 0 : index
    %c0_69 = arith.constant 0 : index
    %85 = vector.load %arg2[%c8, %c0_68, %c0_69] : memref<9x4x8xbf16, #tpu.memory_space<vmem>>, vector<1x4x8xbf16>
    %86 = vector.shape_cast %85 : vector<1x4x8xbf16> to vector<4x8xbf16>
    %cst_70 = arith.constant dense<0.000000e+00> : vector<64x8xf32>
    %87 = tpu.matmul %84, %86, %cst_70 {dimension_numbers = #tpu.dot_dimension_numbers<[1], [0], [0], [1], [0, 0, 1, 1], [], []>} : vector<64x4xbf16>, vector<4x8xbf16>, vector<64x8xf32> -> vector<64x8xf32>
    %88 = arith.addf %78, %87 : vector<64x8xf32>
    %c0_71 = arith.constant 0 : index
    %c0_72 = arith.constant 0 : index
    %89 = vector.load %arg3[%c0_71, %c0_72] : memref<1x8xf32, #tpu.memory_space<vmem>>, vector<1x8xf32>
    %90 = vector.broadcast %89 : vector<1x8xf32> to vector<64x8xf32>
    %91 = arith.addf %88, %90 : vector<64x8xf32>
    %cst_73 = arith.constant 0.000000e+00 : f32
    %92 = vector.broadcast %cst_73 : f32 to vector<64x8xf32>
    %93 = arith.maximumf %91, %92 : vector<64x8xf32>
    %94 = arith.truncf %93 : vector<64x8xf32> to vector<64x8xbf16>
    %c0_74 = arith.constant 0 : index
    %c0_75 = arith.constant 0 : index
    %95 = vector.load %arg4[%c0_74, %c0_75] : memref<8x32xbf16, #tpu.memory_space<vmem>>, vector<8x32xbf16>
    %cst_76 = arith.constant dense<0.000000e+00> : vector<64x32xf32>
    %96 = tpu.matmul %94, %95, %cst_76 {dimension_numbers = #tpu.dot_dimension_numbers<[1], [0], [0], [1], [0, 0, 1, 1], [], []>} : vector<64x8xbf16>, vector<8x32xbf16>, vector<64x32xf32> -> vector<64x32xf32>
    %c0_77 = arith.constant 0 : index
    %c0_78 = arith.constant 0 : index
    %97 = vector.load %arg5[%c0_77, %c0_78] : memref<1x32xf32, #tpu.memory_space<vmem>>, vector<1x32xf32>
    %98 = vector.broadcast %97 : vector<1x32xf32> to vector<64x32xf32>
    %99 = arith.addf %96, %98 : vector<64x32xf32>
    %c0_79 = arith.constant 0 : index
    %c0_80 = arith.constant 0 : index
    %c0_81 = arith.constant 0 : index
    %100 = vector.load %arg6[%c0_79, %c0_80, %c0_81] : memref<1x64x32xf32, #tpu.memory_space<vmem>>, vector<1x64x32xf32>
    %101 = vector.shape_cast %100 : vector<1x64x32xf32> to vector<64x32xf32>
    %102 = vector.shape_cast %99 : vector<64x32xf32> to vector<1x64x32xf32>
    tpu.vector_store %arg6[%c0_79, %c0_80, %c0_81], %102 {strides = array<i32>} : memref<1x64x32xf32, #tpu.memory_space<vmem>>, vector<1x64x32xf32>,
    return
  }
  func.func @transform_0(%arg0: i32) -> (i32, i32, i32, i32, i32) {
    %c0_i32 = arith.constant 0 : i32
    %c0_i32_0 = arith.constant 0 : i32
    %c0_i32_1 = arith.constant 0 : i32
    %c0_i32_2 = arith.constant 0 : i32
    %c0_i32_3 = arith.constant 0 : i32
    return %arg0, %c0_i32, %c0_i32_0, %c0_i32_1, %c0_i32_2 : i32, i32, i32, i32, i32
  }
  func.func @transform_1(%arg0: i32) -> (i32, i32, i32) {
    %c0_i32 = arith.constant 0 : i32
    %c0_i32_0 = arith.constant 0 : i32
    %c0_i32_1 = arith.constant 0 : i32
    %c0_i32_2 = arith.constant 0 : i32
    return %c0_i32, %c0_i32_0, %c0_i32_1 : i32, i32, i32
  }
  func.func @transform_2(%arg0: i32) -> (i32, i32) {
    %c0_i32 = arith.constant 0 : i32
    %c0_i32_0 = arith.constant 0 : i32
    %c0_i32_1 = arith.constant 0 : i32
    return %c0_i32, %c0_i32_0 : i32, i32
  }
  func.func @transform_3(%arg0: i32) -> (i32, i32) {
    %c0_i32 = arith.constant 0 : i32
    %c0_i32_0 = arith.constant 0 : i32
    %c0_i32_1 = arith.constant 0 : i32
    return %c0_i32, %c0_i32_0 : i32, i32
  }
  func.func @transform_4(%arg0: i32) -> (i32, i32) {
    %c0_i32 = arith.constant 0 : i32
    %c0_i32_0 = arith.constant 0 : i32
    %c0_i32_1 = arith.constant 0 : i32
    return %c0_i32, %c0_i32_0 : i32, i32
  }
  func.func @transform_5(%arg0: i32) -> (i32, i32, i32) {
    %c0_i32 = arith.constant 0 : i32
    %c0_i32_0 = arith.constant 0 : i32
    %c0_i32_1 = arith.constant 0 : i32
    return %arg0, %c0_i32, %c0_i32_0 : i32, i32, i32
  }
}

</mosaic_0001>

<llo_original>
// kernel: conv_stem_forward.2
$region0: #{conv_stem_forward.2}
  #allocation0 [shape = 'u32[]', space=smem, size = 0x4, offset = 0x4, fixed_abs, tag = 'smem constant byte address 0x4 - core index']
  #allocation1 [shape = 'u32[72,128]{1,0:T(1,128)}', space=vmem, size = 0x9000, scoped, tag = 'internal scratch']
  %s0 = inlined_call_operand.vmem [shape: bf16[2,4,17,17,3], index: 0, kind: input, shape index: {}]
  %s1 = inlined_call_operand.vmem [shape: bf16[9,3,4], index: 1, kind: input, shape index: {}]
  %s2 = inlined_call_operand.vmem [shape: f32[1,4], index: 2, kind: input, shape index: {}]
  %s3 = inlined_call_operand.vmem [shape: bf16[2,256,4], index: 3, kind: output, shape index: {}]
  %s4 = sld [smem:[#allocation0]]
  $region45: #{conv_stem_forward.2} parent=0
    _
  %s6 = ssub.s32 1, %s4
  %s7 = scalar_select 0, %s6, %s4
  loop: start=0, step=1, limit=4
  $region2: #{conv_stem_forward.2} parent=0 // loop_pre_header
    _
  $region3: #{conv_stem_forward.2} parent=0 // loop_header
    %s9 = sphi 0, %s13
    %p10 = scmp.ge.s32.totalorder %s9, 4
    %s19 = sphi 0, %s21
    %s22 = sphi 0, %s19
    %s23 = sphi 0, %s22
    %s39 = sphi 0, %s23
    %s43 = sphi 0, %s43
    %s45 = sphi 0, %s43
    %s46 = sphi 0, %s45
    %s60 = sphi 0, %s46
    %s64 = sphi 0, %s64
    %s66 = sphi 0, %s64
    %s67 = sphi 0, %s66
    %s81 = sphi 0, %s67
    %s87 = sphi 0, %s89
    %s90 = sphi 0, %s87
    %s91 = sphi 0, %s90
    %s107 = sphi 0, %s91
  $region4: #{conv_stem_forward.2} parent=0 // loop_header_branch
    %12 = sbr.rel (%p10) target = $region8
  $region5: #{conv_stem_forward.2} parent=0 // loop_body
    %s14 = ssub.s32 %s9, 1
    %s15 = ssub.s32 %s9, 2
    %s16 = sadd.s32 %s9, 1
    %s17 = ssub.s32 %s9, %s16
    %p18 = scmp.eq.s32.totalorder %s17, 0
    %s20 = sadd.s32 %s19, 1
    %s21 = scalar_select %p18, %s19, %s20
    %p24 = pneg %p18
    %p25 = scmp.eq.s32.totalorder %s9, 1
    %p26 = por %p24, %p25
    %p27 = scmp.ne.s32.totalorder %s19, %s22
    %p28 = scmp.eq.s32.totalorder %s9, 0
    %p29 = por %p27, %p28
    %p30 = scmp.ne.s32.totalorder %s19, %s22
    %p31 = scmp.eq.s32.totalorder %s14, 1
    %p32 = por %p30, %p31
    %p33 = scmp.ne.s32.totalorder %s22, %s23
    %p34 = scmp.eq.s32.totalorder %s14, 0
    %p35 = por %p33, %p34
    %p36 = scmp.ne.s32.totalorder %s22, %s23
    %p37 = scmp.eq.s32.totalorder %s15, 1
    %p38 = por %p36, %p37
    %p40 = scmp.ne.s32.totalorder %s23, %s39
    %p41 = scmp.eq.s32.totalorder %s15, 0
    %p42 = por %p40, %p41
    %s44 = sadd.s32 %s43, 1
    %p47 = scmp.eq.s32.totalorder %s9, 1
    %p48 = scmp.ne.s32.totalorder %s43, %s45
    %p49 = scmp.eq.s32.totalorder %s9, 0
    %p50 = por %p48, %p49
    %p51 = scmp.ne.s32.totalorder %s43, %s45
    %p52 = scmp.eq.s32.totalorder %s14, 1
    %p53 = por %p51, %p52
    %p54 = scmp.ne.s32.totalorder %s45, %s46
    %p55 = scmp.eq.s32.totalorder %s14, 0
    %p56 = por %p54, %p55
    %p57 = scmp.ne.s32.totalorder %s45, %s46
    %p58 = scmp.eq.s32.totalorder %s15, 1
    %p59 = por %p57, %p58
    %p61 = scmp.ne.s32.totalorder %s46, %s60
    %p62 = scmp.eq.s32.totalorder %s15, 0
    %p63 = por %p61, %p62
    %s65 = sadd.s32 %s64, 1
    %p68 = scmp.eq.s32.totalorder %s9, 1
    %p69 = scmp.ne.s32.totalorder %s64, %s66
    %p70 = scmp.eq.s32.totalorder %s9, 0
    %p71 = por %p69, %p70
    %p72 = scmp.ne.s32.totalorder %s64, %s66
    %p73 = scmp.eq.s32.totalorder %s14, 1
    %p74 = por %p72, %p73
    %p75 = scmp.ne.s32.totalorder %s66, %s67
    %p76 = scmp.eq.s32.totalorder %s14, 0
    %p77 = por %p75, %p76
    %p78 = scmp.ne.s32.totalorder %s66, %s67
    %p79 = scmp.eq.s32.totalorder %s15, 1
    %p80 = por %p78, %p79
    %p82 = scmp.ne.s32.totalorder %s67, %s81
    %p83 = scmp.eq.s32.totalorder %s15, 0
    %p84 = por %p82, %p83
    %s85 = ssub.s32 %s9, %s16
    %p86 = scmp.eq.s32.totalorder %s85, 0
    %s88 = sadd.s32 %s87, 1
    %s89 = scalar_select %p86, %s87, %s88
    %p92 = pneg %p86
    %p93 = scmp.eq.s32.totalorder %s9, 1
    %p94 = por %p92, %p93
    %p95 = scmp.ne.s32.totalorder %s87, %s90
    %p96 = scmp.eq.s32.totalorder %s9, 0
    %p97 = por %p95, %p96
    %p98 = scmp.ne.s32.totalorder %s87, %s90
    %p99 = scmp.eq.s32.totalorder %s14, 1
    %p100 = por %p98, %p99
    %p101 = scmp.ne.s32.totalorder %s90, %s91
    %p102 = scmp.eq.s32.totalorder %s14, 0
    %p103 = por %p101, %p102
    %p104 = scmp.ne.s32.totalorder %s90, %s91
    %p105 = scmp.eq.s32.totalorder %s15, 1
    %p106 = por %p104, %p105
    %p108 = scmp.ne.s32.totalorder %s91, %s107
    %p109 = scmp.eq.s32.totalorder %s15, 0
    %p110 = por %p108, %p109
    %p111 = scmp.le.s32.totalorder 1, %s9
    %p112 = scmp.lt.s32.totalorder %s9, 3
    %p113 = pnand %p111, %p112
    %p114 = pneg %p113
    // Predicated region
    $region9: #{conv_stem_forward.2} parent=5 // pred_check
      _
    $region10: #{conv_stem_forward.2} parent=5 // pred_check_branch
      %116 = sbr.rel (%p113) target = $region12
    $region11: #{conv_stem_forward.2} parent=5 // pred_region
      %s117 = ssub.s32 %s9, 1
      // Predicated region
      $region13: #{conv_stem_forward.2} parent=11 // pred_check
        %p118 = pneg %p56
      $region14: #{conv_stem_forward.2} parent=11 // pred_check_branch
        %120 = sbr.rel (%p118) target = $region16
      $region15: #{conv_stem_forward.2} parent=11 // pred_region
        _
      $region16: #{conv_stem_forward.2} parent=11 // pred_fallthru
        _
      // Predicated region
      $region17: #{conv_stem_forward.2} parent=11 // pred_check
        %p121 = pneg %p77
      $region18: #{conv_stem_forward.2} parent=11 // pred_check_branch
        %123 = sbr.rel (%p121) target = $region20
      $region19: #{conv_stem_forward.2} parent=11 // pred_region
        _
      $region20: #{conv_stem_forward.2} parent=11 // pred_fallthru
        _
    $region12: #{conv_stem_forward.2} parent=5 // pred_fallthru
      _
    %p124 = scmp.lt.s32.totalorder %s9, 2
    // Predicated region
    $region21: #{conv_stem_forward.2} parent=5 // pred_check
      %p125 = pneg %p124
    $region22: #{conv_stem_forward.2} parent=5 // pred_check_branch
      %127 = sbr.rel (%p125) target = $region24
    $region23: #{conv_stem_forward.2} parent=5 // pred_region
      // Predicated region
      $region25: #{conv_stem_forward.2} parent=23 // pred_check
        %p128 = pneg %p29
      $region26: #{conv_stem_forward.2} parent=23 // pred_check_branch
        %130 = sbr.rel (%p128) target = $region28
      $region27: #{conv_stem_forward.2} parent=23 // pred_region
        %p131 = scmp.lt.s32.totalorder %s9, 1
        %s132 = scalar_select %p131, %s9, 1
        %s133 = smul.addr %s132, 204
        %s134 = smul.addr %s133, 4
        %s135 = scalar_lea.vmem %s0, %s134
      $region28: #{conv_stem_forward.2} parent=23 // pred_fallthru
        _
    $region24: #{conv_stem_forward.2} parent=5 // pred_fallthru
      _
    %p136 = scmp.le.s32.totalorder 1, %s9
    %p137 = scmp.lt.s32.totalorder %s9, 3
    %p138 = pnand %p136, %p137
    %p139 = pneg %p138
    // Predicated region
    $region29: #{conv_stem_forward.2} parent=5 // pred_check
      _
    $region30: #{conv_stem_forward.2} parent=5 // pred_check_branch
      %141 = sbr.rel (%p138) target = $region32
    $region31: #{conv_stem_forward.2} parent=5 // pred_region
      %s142 = ssub.s32 %s9, 1
      %p143 = scmp.lt.s32.totalorder %s14, 1
      %s144 = scalar_select %p143, %s14, 1
      %s145 = smul.addr %s144, 204
      %s146 = smul.addr %s145, 4
      %s147 = scalar_lea.vmem %s0, %s146
      %p148 = pneg %p35
      %p149 = pneg %p32
      %p150 = pneg %p56
      %p151 = pneg %p53
      %p152 = pneg %p77
      %p153 = pneg %p74
      %p154 = pneg %p103
      %p155 = pneg %p100
      %p156 = scmp.lt.s32.totalorder %s14, 1
      %s157 = scalar_select %p156, %s14, 1
      %s158 = smul.addr %s157, 32
      %s159 = smul.addr %s158, 4
      %s160 = scalar_lea.vmem %s3, %s159
      %p161 = scmp.lt.s32.totalorder %s14, 1
      %s162 = scalar_select %p161, %s14, 1
      %s163 = smul.addr %s162, 204
      %s164 = smul.addr %s163, 4
      %s165 = scalar_lea.vmem %s0, %s164
      %p166 = scmp.lt.s32.totalorder %s14, 1
      %s167 = scalar_select %p166, %s14, 1
      %s168 = smul.addr %s167, 32
      %s169 = smul.addr %s168, 4
      %s170 = scalar_lea.vmem %s3, %s169
      %v172 = vld [vmem:[%s165] sm:$0xf]
      %v173 = vld [vmem:[%s165 + $0x4] sm:$0xf]
      %v174 = vld [vmem:[%s165 + $0x8] sm:$0x1]
      %v175 = vld [vmem:[%s165 + $0xc] sm:$0xf]
      %v176 = vld [vmem:[%s165 + $0x10] sm:$0xf]
      %v177 = vld [vmem:[%s165 + $0x14] sm:$0x1]
      %v178 = vld [vmem:[%s165 + $0x18] sm:$0xf]
      %v179 = vld [vmem:[%s165 + $0x1c] sm:$0xf]
      %v180 = vld [vmem:[%s165 + $0x20] sm:$0x1]
      %v181 = vld [vmem:[%s165 + $0x24] sm:$0xf]
      %v182 = vld [vmem:[%s165 + $0x28] sm:$0xf]
      %v183 = vld [vmem:[%s165 + $0x2c] sm:$0x1]
      %v184 = vld [vmem:[%s165 + $0x30] sm:$0xf]
      %v185 = vld [vmem:[%s165 + $0x34] sm:$0xf]
      %v186 = vld [vmem:[%s165 + $0x38] sm:$0x1]
      %v187 = vld [vmem:[%s165 + $0x3c] sm:$0xf]
      %v188 = vld [vmem:[%s165 + $0x40] sm:$0xf]
      %v189 = vld [vmem:[%s165 + $0x44] sm:$0x1]
      %v190 = vld [vmem:[%s165 + $0x48] sm:$0xf]
      %v191 = vld [vmem:[%s165 + $0x4c] sm:$0xf]
      %v192 = vld [vmem:[%s165 + $0x50] sm:$0x1]
      %v193 = vld [vmem:[%s165 + $0x54] sm:$0xf]
      %v194 = vld [vmem:[%s165 + $0x58] sm:$0xf]
      %v195 = vld [vmem:[%s165 + $0x5c] sm:$0x1]
      %v196 = vld [vmem:[%s165 + $0x60] sm:$0xf]
      %v197 = vld [vmem:[%s165 + $0x64] sm:$0xf]
      %v198 = vld [vmem:[%s165 + $0x68] sm:$0x1]
      %v199 = vld [vmem:[%s165 + $0x6c] sm:$0xf]
      %v200 = vld [vmem:[%s165 + $0x70] sm:$0xf]
      %v201 = vld [vmem:[%s165 + $0x74] sm:$0x1]
      %v202 = vld [vmem:[%s165 + $0x78] sm:$0xf]
      %v203 = vld [vmem:[%s165 + $0x7c] sm:$0xf]
      %v204 = vld [vmem:[%s165 + $0x80] sm:$0x1]
      %v205 = vld [vmem:[%s165 + $0x84] sm:$0xf]
      %v206 = vld [vmem:[%s165 + $0x88] sm:$0xf]
      %v207 = vld [vmem:[%s165 + $0x8c] sm:$0x1]
      %v208 = vld [vmem:[%s165 + $0x90] sm:$0xf]
      %v209 = vld [vmem:[%s165 + $0x94] sm:$0xf]
      %v210 = vld [vmem:[%s165 + $0x98] sm:$0x1]
      %v211 = vld [vmem:[%s165 + $0x9c] sm:$0xf]
      %v212 = vld [vmem:[%s165 + $0xa0] sm:$0xf]
      %v213 = vld [vmem:[%s165 + $0xa4] sm:$0x1]
      %v214 = vld [vmem:[%s165 + $0xa8] sm:$0xf]
      %v215 = vld [vmem:[%s165 + $0xac] sm:$0xf]
      %v216 = vld [vmem:[%s165 + $0xb0] sm:$0x1]
      %v217 = vld [vmem:[%s165 + $0xb4] sm:$0xf]
      %v218 = vld [vmem:[%s165 + $0xb8] sm:$0xf]
      %v219 = vld [vmem:[%s165 + $0xbc] sm:$0x1]
      %v220 = vunpack.c.l.bf16 %v172
      %v221 = vunpack.c.l.bf16 %v173
      %v222 = vunpack.c.l.bf16 %v174
      %v223 = vunpack.c.l.bf16 %v175
      %v224 = vunpack.c.l.bf16 %v176
      %v225 = vunpack.c.l.bf16 %v177
      %v226 = vunpack.c.l.bf16 %v178
      %v227 = vunpack.c.l.bf16 %v179
      %v228 = vunpack.c.l.bf16 %v180
      %v229 = vunpack.c.l.bf16 %v181
      %v230 = vunpack.c.l.bf16 %v182
      %v231 = vunpack.c.l.bf16 %v183
      %v232 = vunpack.c.l.bf16 %v184
      %v233 = vunpack.c.l.bf16 %v185
      %v234 = vunpack.c.l.bf16 %v186
      %v235 = vunpack.c.l.bf16 %v187
      %v236 = vunpack.c.l.bf16 %v188
      %v237 = vunpack.c.l.bf16 %v189
      %v238 = vunpack.c.l.bf16 %v190
      %v239 = vunpack.c.l.bf16 %v191
      %v240 = vunpack.c.l.bf16 %v192
      %v241 = vunpack.c.l.bf16 %v193
      %v242 = vunpack.c.l.bf16 %v194
      %v243 = vunpack.c.l.bf16 %v195
      %v244 = vunpack.c.l.bf16 %v196
      %v245 = vunpack.c.l.bf16 %v197
      %v246 = vunpack.c.l.bf16 %v198
      %v247 = vunpack.c.l.bf16 %v199
      %v248 = vunpack.c.l.bf16 %v200
      %v249 = vunpack.c.l.bf16 %v201
      %v250 = vunpack.c.l.bf16 %v202
      %v251 = vunpack.c.l.bf16 %v203
      %v252 = vunpack.c.l.bf16 %v204
      %v253 = vunpack.c.l.bf16 %v205
      %v254 = vunpack.c.l.bf16 %v206
      %v255 = vunpack.c.l.bf16 %v207
      %v256 = vunpack.c.l.bf16 %v208
      %v257 = vunpack.c.l.bf16 %v209
      %v258 = vunpack.c.l.bf16 %v210
      %v259 = vunpack.c.l.bf16 %v211
      %v260 = vunpack.c.l.bf16 %v212
      %v261 = vunpack.c.l.bf16 %v213
      %v262 = vunpack.c.l.bf16 %v214
      %v263 = vunpack.c.l.bf16 %v215
      %v264 = vunpack.c.l.bf16 %v216
      %v265 = vunpack.c.l.bf16 %v217
      %v266 = vunpack.c.l.bf16 %v218
      %v267 = vunpack.c.l.bf16 %v219
      %v268 = vpack.c.bf16 %v221, %v220
      %v269 = vpack.c.bf16 %v224, %v223
      %v270 = vpack.c.bf16 %v227, %v226
      %v271 = vpack.c.bf16 %v230, %v229
      %v272 = vpack.c.bf16 %v233, %v232
      %v273 = vpack.c.bf16 %v236, %v235
      %v274 = vpack.c.bf16 %v239, %v238
      %v275 = vpack.c.bf16 %v242, %v241
      %v276 = vpack.c.bf16 %v245, %v244
      %v277 = vpack.c.bf16 %v248, %v247
      %v278 = vpack.c.bf16 %v251, %v250
      %v279 = vpack.c.bf16 %v254, %v253
      %v280 = vpack.c.bf16 %v257, %v256
      %v281 = vpack.c.bf16 %v260, %v259
      %v282 = vpack.c.bf16 %v263, %v262
      %v283 = vpack.c.bf16 %v266, %v265
      %v284 = vld [vmem:[%s1] sm:$0x3]
      %s285 = scalar_lea.vmem %s165, 204
      %v286 = vld [vmem:[%s285] sm:$0xf]
      %v287 = vld [vmem:[%s285 + $0x4] sm:$0xf]
      %v288 = vld [vmem:[%s285 + $0xc] sm:$0xf]
      %v289 = vld [vmem:[%s285 + $0x10] sm:$0xf]
      %v290 = vld [vmem:[%s285 + $0x18] sm:$0xf]
      %v291 = vld [vmem:[%s285 + $0x1c] sm:$0xf]
      %v292 = vld [vmem:[%s285 + $0x24] sm:$0xf]
      %v293 = vld [vmem:[%s285 + $0x28] sm:$0xf]
      %v294 = vld [vmem:[%s285 + $0x30] sm:$0xf]
      %v295 = vld [vmem:[%s285 + $0x34] sm:$0xf]
      %v296 = vld [vmem:[%s285 + $0x3c] sm:$0xf]
      %v297 = vld [vmem:[%s285 + $0x40] sm:$0xf]
      %v298 = vld [vmem:[%s285 + $0x48] sm:$0xf]
      %v299 = vld [vmem:[%s285 + $0x4c] sm:$0xf]
      %v300 = vld [vmem:[%s285 + $0x54] sm:$0xf]
      %v301 = vld [vmem:[%s285 + $0x58] sm:$0xf]
      %v302 = vld [vmem:[%s285 + $0x60] sm:$0xf]
      %v303 = vld [vmem:[%s285 + $0x64] sm:$0xf]
      %v304 = vld [vmem:[%s285 + $0x6c] sm:$0xf]
      %v305 = vld [vmem:[%s285 + $0x70] sm:$0xf]
      %v306 = vld [vmem:[%s285 + $0x78] sm:$0xf]
      %v307 = vld [vmem:[%s285 + $0x7c] sm:$0xf]
      %v308 = vld [vmem:[%s285 + $0x84] sm:$0xf]
      %v309 = vld [vmem:[%s285 + $0x88] sm:$0xf]
      %v310 = vld [vmem:[%s285 + $0x90] sm:$0xf]
      %v311 = vld [vmem:[%s285 + $0x94] sm:$0xf]
      %v312 = vld [vmem:[%s285 + $0x9c] sm:$0xf]
      %v313 = vld [vmem:[%s285 + $0xa0] sm:$0xf]
      %v314 = vld [vmem:[%s285 + $0xa8] sm:$0xf]
      %v315 = vld [vmem:[%s285 + $0xac] sm:$0xf]
      %v316 = vld [vmem:[%s285 + $0xb4] sm:$0xf]
      %v317 = vld [vmem:[%s285 + $0xb8] sm:$0xf]
      %v318 = vunpack.c.l.bf16 %v286
      %v319 = vunpack.c.l.bf16 %v287
      %v320 = vunpack.c.l.bf16 %v288
      %v321 = vunpack.c.l.bf16 %v289
      %v322 = vunpack.c.l.bf16 %v290
      %v323 = vunpack.c.l.bf16 %v291
      %v324 = vunpack.c.l.bf16 %v292
      %v325 = vunpack.c.l.bf16 %v293
      %v326 = vunpack.c.l.bf16 %v294
      %v327 = vunpack.c.l.bf16 %v295
      %v328 = vunpack.c.l.bf16 %v296
      %v329 = vunpack.c.l.bf16 %v297
      %v330 = vunpack.c.l.bf16 %v298
      %v331 = vunpack.c.l.bf16 %v299
      %v332 = vunpack.c.l.bf16 %v300
      %v333 = vunpack.c.l.bf16 %v301
      %v334 = vunpack.c.l.bf16 %v302
      %v335 = vunpack.c.l.bf16 %v303
      %v336 = vunpack.c.l.bf16 %v304
      %v337 = vunpack.c.l.bf16 %v305
      %v338 = vunpack.c.l.bf16 %v306
      %v339 = vunpack.c.l.bf16 %v307
      %v340 = vunpack.c.l.bf16 %v308
      %v341 = vunpack.c.l.bf16 %v309
      %v342 = vunpack.c.l.bf16 %v310
      %v343 = vunpack.c.l.bf16 %v311
      %v344 = vunpack.c.l.bf16 %v312
      %v345 = vunpack.c.l.bf16 %v313
      %v346 = vunpack.c.l.bf16 %v314
      %v347 = vunpack.c.l.bf16 %v315
      %v348 = vunpack.c.l.bf16 %v316
      %v349 = vunpack.c.l.bf16 %v317
      %v350 = vpack.c.bf16 %v319, %v318
      %v351 = vpack.c.bf16 %v321, %v320
      %v352 = vpack.c.bf16 %v323, %v322
      %v353 = vpack.c.bf16 %v325, %v324
      %v354 = vpack.c.bf16 %v327, %v326
      %v355 = vpack.c.bf16 %v329, %v328
      %v356 = vpack.c.bf16 %v331, %v330
      %v357 = vpack.c.bf16 %v333, %v332
      %v358 = vpack.c.bf16 %v335, %v334
      %v359 = vpack.c.bf16 %v337, %v336
      %v360 = vpack.c.bf16 %v339, %v338
      %v361 = vpack.c.bf16 %v341, %v340
      %v362 = vpack.c.bf16 %v343, %v342
      %v363 = vpack.c.bf16 %v345, %v344
      %v364 = vpack.c.bf16 %v347, %v346
      %v365 = vpack.c.bf16 %v349, %v348
      %s366 = scalar_lea.vmem %s1, 2
      %v367 = vld [vmem:[%s366] sm:$0x3]
      %vm368 = vcmask 23552
      %v370 = vsel %vm368, %v350, 0
      %v373 = vsel %vm368, %v351, 0
      %v376 = vsel %vm368, %v352, 0
      %v379 = vsel %vm368, %v353, 0
      %v382 = vsel %vm368, %v354, 0
      %v385 = vsel %vm368, %v355, 0
      %v388 = vsel %vm368, %v356, 0
      %v391 = vsel %vm368, %v357, 0
      %v394 = vsel %vm368, %v358, 0
      %v397 = vsel %vm368, %v359, 0
      %v400 = vsel %vm368, %v360, 0
      %v403 = vsel %vm368, %v361, 0
      %v406 = vsel %vm368, %v362, 0
      %v409 = vsel %vm368, %v363, 0
      %v412 = vsel %vm368, %v364, 0
      %v415 = vsel %vm368, %v365, 0
      %vm417 = vcmask 1040384
      %vm418 = vcmask 1041408
      %v419 = vsel %vm417, 4294967295, 65535
      %v420 = vsel %vm418, %v419, 0
      %v422 = vand.u32 %v367, %v420
      %424 = vmatpush.bf16.msra.mxu0 0
      %425 = vmatpush.bf16.msra.mxu0 0
      %426 = vmatpush.bf16.msra.mxu0 0
      %427 = vmatpush.bf16.msra.mxu0 0
      %428 = vmatpush.bf16.msra.mxu0 0
      %429 = vmatpush.bf16.msra.mxu0 0
      %430 = vmatpush.bf16.msra.mxu0 0
      %431 = vmatpush.bf16.msra.mxu0 %v422
      %432 = vmatmul.bf16.gmra.mxu0 %v370
      %v433 = vpop.f32.mrf.mxu0
      %v434 = vadd.f32 0.0, %v433
      %v435 = vpop.f32.mrf.mxu0
      %v436 = vadd.f32 0.0, %v435
      %437 = vmatmul.bf16.gmra.mxu0 %v373
      %v438 = vpop.f32.mrf.mxu0
      %v439 = vadd.f32 0.0, %v438
      %v440 = vpop.f32.mrf.mxu0
      %v441 = vadd.f32 0.0, %v440
      %442 = vmatmul.bf16.gmra.mxu0 %v376
      %v443 = vpop.f32.mrf.mxu0
      %v444 = vadd.f32 0.0, %v443
      %v445 = vpop.f32.mrf.mxu0
      %v446 = vadd.f32 0.0, %v445
      %447 = vmatmul.bf16.gmra.mxu0 %v379
      %v448 = vpop.f32.mrf.mxu0
      %v449 = vadd.f32 0.0, %v448
      %v450 = vpop.f32.mrf.mxu0
      %v451 = vadd.f32 0.0, %v450
      %452 = vmatmul.bf16.gmra.mxu0 %v382
      %v453 = vpop.f32.mrf.mxu0
      %v454 = vadd.f32 0.0, %v453
      %v455 = vpop.f32.mrf.mxu0
      %v456 = vadd.f32 0.0, %v455
      %457 = vmatmul.bf16.gmra.mxu0 %v385
      %v458 = vpop.f32.mrf.mxu0
      %v459 = vadd.f32 0.0, %v458
      %v460 = vpop.f32.mrf.mxu0
      %v461 = vadd.f32 0.0, %v460
      %462 = vmatmul.bf16.gmra.mxu0 %v388
      %v463 = vpop.f32.mrf.mxu0
      %v464 = vadd.f32 0.0, %v463
      %v465 = vpop.f32.mrf.mxu0
      %v466 = vadd.f32 0.0, %v465
      %467 = vmatmul.bf16.gmra.mxu0 %v391
      %v468 = vpop.f32.mrf.mxu0
      %v469 = vadd.f32 0.0, %v468
      %v470 = vpop.f32.mrf.mxu0
      %v471 = vadd.f32 0.0, %v470
      %472 = vmatmul.bf16.gmra.mxu0 %v394
      %v473 = vpop.f32.mrf.mxu0
      %v474 = vadd.f32 0.0, %v473
      %v475 = vpop.f32.mrf.mxu0
      %v476 = vadd.f32 0.0, %v475
      %477 = vmatmul.bf16.gmra.mxu0 %v397
      %v478 = vpop.f32.mrf.mxu0
      %v479 = vadd.f32 0.0, %v478
      %v480 = vpop.f32.mrf.mxu0
      %v481 = vadd.f32 0.0, %v480
      %482 = vmatmul.bf16.gmra.mxu0 %v400
      %v483 = vpop.f32.mrf.mxu0
      %v484 = vadd.f32 0.0, %v483
      %v485 = vpop.f32.mrf.mxu0
      %v486 = vadd.f32 0.0, %v485
      %487 = vmatmul.bf16.gmra.mxu0 %v403
      %v488 = vpop.f32.mrf.mxu0
      %v489 = vadd.f32 0.0, %v488
      %v490 = vpop.f32.mrf.mxu0
      %v491 = vadd.f32 0.0, %v490
      %492 = vmatmul.bf16.gmra.mxu0 %v406
      %v493 = vpop.f32.mrf.mxu0
      %v494 = vadd.f32 0.0, %v493
      %v495 = vpop.f32.mrf.mxu0
      %v496 = vadd.f32 0.0, %v495
      %497 = vmatmul.bf16.gmra.mxu0 %v409
      %v498 = vpop.f32.mrf.mxu0
      %v499 = vadd.f32 0.0, %v498
      %v500 = vpop.f32.mrf.mxu0
      %v501 = vadd.f32 0.0, %v500
      %502 = vmatmul.bf16.gmra.mxu0 %v412
      %v503 = vpop.f32.mrf.mxu0
      %v504 = vadd.f32 0.0, %v503
      %v505 = vpop.f32.mrf.mxu0
      %v506 = vadd.f32 0.0, %v505
      %507 = vmatmul.bf16.gmra.mxu0 %v415
      %v508 = vpop.f32.mrf.mxu0
      %v509 = vadd.f32 0.0, %v508
      %v510 = vpop.f32.mrf.mxu0
      %v511 = vadd.f32 0.0, %v510
      %512 = vdwg.mxu0
      %v514 = vsel %vm368, %v268, 0
      %v517 = vsel %vm368, %v269, 0
      %v520 = vsel %vm368, %v270, 0
      %v523 = vsel %vm368, %v271, 0
      %v526 = vsel %vm368, %v272, 0
      %v529 = vsel %vm368, %v273, 0
      %v532 = vsel %vm368, %v274, 0
      %v535 = vsel %vm368, %v275, 0
      %v538 = vsel %vm368, %v276, 0
      %v541 = vsel %vm368, %v277, 0
      %v544 = vsel %vm368, %v278, 0
      %v547 = vsel %vm368, %v279, 0
      %v550 = vsel %vm368, %v280, 0
      %v553 = vsel %vm368, %v281, 0
      %v556 = vsel %vm368, %v282, 0
      %v559 = vsel %vm368, %v283, 0
      %v562 = vand.u32 %v284, %v420
      %564 = vmatpush.bf16.msra.mxu0 0
      %565 = vmatpush.bf16.msra.mxu0 0
      %566 = vmatpush.bf16.msra.mxu0 0
      %567 = vmatpush.bf16.msra.mxu0 0
      %568 = vmatpush.bf16.msra.mxu0 0
      %569 = vmatpush.bf16.msra.mxu0 0
      %570 = vmatpush.bf16.msra.mxu0 0
      %571 = vmatpush.bf16.msra.mxu0 %v562
      %572 = vmatmul.bf16.gmra.mxu0 %v514
      %v573 = vpop.f32.mrf.mxu0
      %v574 = vadd.f32 %v434, %v573
      %v575 = vpop.f32.mrf.mxu0
      %v576 = vadd.f32 %v436, %v575
      %577 = vmatmul.bf16.gmra.mxu0 %v517
      %v578 = vpop.f32.mrf.mxu0
      %v579 = vadd.f32 %v439, %v578
      %v580 = vpop.f32.mrf.mxu0
      %v581 = vadd.f32 %v441, %v580
      %582 = vmatmul.bf16.gmra.mxu0 %v520
      %v583 = vpop.f32.mrf.mxu0
      %v584 = vadd.f32 %v444, %v583
      %v585 = vpop.f32.mrf.mxu0
      %v586 = vadd.f32 %v446, %v585
      %587 = vmatmul.bf16.gmra.mxu0 %v523
      %v588 = vpop.f32.mrf.mxu0
      %v589 = vadd.f32 %v449, %v588
      %v590 = vpop.f32.mrf.mxu0
      %v591 = vadd.f32 %v451, %v590
      %592 = vmatmul.bf16.gmra.mxu0 %v526
      %v593 = vpop.f32.mrf.mxu0
      %v594 = vadd.f32 %v454, %v593
      %v595 = vpop.f32.mrf.mxu0
      %v596 = vadd.f32 %v456, %v595
      %597 = vmatmul.bf16.gmra.mxu0 %v529
      %v598 = vpop.f32.mrf.mxu0
      %v599 = vadd.f32 %v459, %v598
      %v600 = vpop.f32.mrf.mxu0
      %v601 = vadd.f32 %v461, %v600
      %602 = vmatmul.bf16.gmra.mxu0 %v532
      %v603 = vpop.f32.mrf.mxu0
      %v604 = vadd.f32 %v464, %v603
      %v605 = vpop.f32.mrf.mxu0
      %v606 = vadd.f32 %v466, %v605
      %607 = vmatmul.bf16.gmra.mxu0 %v535
      %v608 = vpop.f32.mrf.mxu0
      %v609 = vadd.f32 %v469, %v608
      %v610 = vpop.f32.mrf.mxu0
      %v611 = vadd.f32 %v471, %v610
      %612 = vmatmul.bf16.gmra.mxu0 %v538
      %v613 = vpop.f32.mrf.mxu0
      %v614 = vadd.f32 %v474, %v613
      %v615 = vpop.f32.mrf.mxu0
      %v616 = vadd.f32 %v476, %v615
      %617 = vmatmul.bf16.gmra.mxu0 %v541
      %v618 = vpop.f32.mrf.mxu0
      %v619 = vadd.f32 %v479, %v618
      %v620 = vpop.f32.mrf.mxu0
      %v621 = vadd.f32 %v481, %v620
      %622 = vmatmul.bf16.gmra.mxu0 %v544
      %v623 = vpop.f32.mrf.mxu0
      %v624 = vadd.f32 %v484, %v623
      %v625 = vpop.f32.mrf.mxu0
      %v626 = vadd.f32 %v486, %v625
      %627 = vmatmul.bf16.gmra.mxu0 %v547
      %v628 = vpop.f32.mrf.mxu0
      %v629 = vadd.f32 %v489, %v628
      %v630 = vpop.f32.mrf.mxu0
      %v631 = vadd.f32 %v491, %v630
      %632 = vmatmul.bf16.gmra.mxu0 %v550
      %v633 = vpop.f32.mrf.mxu0
      %v634 = vadd.f32 %v494, %v633
      %v635 = vpop.f32.mrf.mxu0
      %v636 = vadd.f32 %v496, %v635
      %637 = vmatmul.bf16.gmra.mxu0 %v553
      %v638 = vpop.f32.mrf.mxu0
      %v639 = vadd.f32 %v499, %v638
      %v640 = vpop.f32.mrf.mxu0
      %v641 = vadd.f32 %v501, %v640
      %642 = vmatmul.bf16.gmra.mxu0 %v556
      %v643 = vpop.f32.mrf.mxu0
      %v644 = vadd.f32 %v504, %v643
      %v645 = vpop.f32.mrf.mxu0
      %v646 = vadd.f32 %v506, %v645
      %647 = vmatmul.bf16.gmra.mxu0 %v559
      %v648 = vpop.f32.mrf.mxu0
      %v649 = vadd.f32 %v509, %v648
      %v650 = vpop.f32.mrf.mxu0
      %v651 = vadd.f32 %v511, %v650
      %652 = vdwg.mxu0
      %vm701 = vcmask 1046528
      %v702 = vrot.slane %v220, 1
      %v703 = vrot.slane %v221, 1
      %v704 = vsel %vm701, %v702, %v703
      %v705 = vrot.slane %v222, 1
      %v706 = vsel %vm701, %v703, %v705
      %v707 = vrot.slane %v223, 1
      %v708 = vrot.slane %v224, 1
      %v709 = vsel %vm701, %v707, %v708
      %v710 = vrot.slane %v225, 1
      %v711 = vsel %vm701, %v708, %v710
      %v712 = vrot.slane %v226, 1
      %v713 = vrot.slane %v227, 1
      %v714 = vsel %vm701, %v712, %v713
      %v715 = vrot.slane %v228, 1
      %v716 = vsel %vm701, %v713, %v715
      %v717 = vrot.slane %v229, 1
      %v718 = vrot.slane %v230, 1
      %v719 = vsel %vm701, %v717, %v718
      %v720 = vrot.slane %v231, 1
      %v721 = vsel %vm701, %v718, %v720
      %v722 = vrot.slane %v232, 1
      %v723 = vrot.slane %v233, 1
      %v724 = vsel %vm701, %v722, %v723
      %v725 = vrot.slane %v234, 1
      %v726 = vsel %vm701, %v723, %v725
      %v727 = vrot.slane %v235, 1
      %v728 = vrot.slane %v236, 1
      %v729 = vsel %vm701, %v727, %v728
      %v730 = vrot.slane %v237, 1
      %v731 = vsel %vm701, %v728, %v730
      %v732 = vrot.slane %v238, 1
      %v733 = vrot.slane %v239, 1
      %v734 = vsel %vm701, %v732, %v733
      %v735 = vrot.slane %v240, 1
      %v736 = vsel %vm701, %v733, %v735
      %v737 = vrot.slane %v241, 1
      %v738 = vrot.slane %v242, 1
      %v739 = vsel %vm701, %v737, %v738
      %v740 = vrot.slane %v243, 1
      %v741 = vsel %vm701, %v738, %v740
      %v742 = vrot.slane %v244, 1
      %v743 = vrot.slane %v245, 1
      %v744 = vsel %vm701, %v742, %v743
      %v745 = vrot.slane %v246, 1
      %v746 = vsel %vm701, %v743, %v745
      %v747 = vrot.slane %v247, 1
      %v748 = vrot.slane %v248, 1
      %v749 = vsel %vm701, %v747, %v748
      %v750 = vrot.slane %v249, 1
      %v751 = vsel %vm701, %v748, %v750
      %v752 = vrot.slane %v250, 1
      %v753 = vrot.slane %v251, 1
      %v754 = vsel %vm701, %v752, %v753
      %v755 = vrot.slane %v252, 1
      %v756 = vsel %vm701, %v753, %v755
      %v757 = vrot.slane %v253, 1
      %v758 = vrot.slane %v254, 1
      %v759 = vsel %vm701, %v757, %v758
      %v760 = vrot.slane %v255, 1
      %v761 = vsel %vm701, %v758, %v760
      %v762 = vrot.slane %v256, 1
      %v763 = vrot.slane %v257, 1
      %v764 = vsel %vm701, %v762, %v763
      %v765 = vrot.slane %v258, 1
      %v766 = vsel %vm701, %v763, %v765
      %v767 = vrot.slane %v259, 1
      %v768 = vrot.slane %v260, 1
      %v769 = vsel %vm701, %v767, %v768
      %v770 = vrot.slane %v261, 1
      %v771 = vsel %vm701, %v768, %v770
      %v772 = vrot.slane %v262, 1
      %v773 = vrot.slane %v263, 1
      %v774 = vsel %vm701, %v772, %v773
      %v775 = vrot.slane %v264, 1
      %v776 = vsel %vm701, %v773, %v775
      %v777 = vrot.slane %v265, 1
      %v778 = vrot.slane %v266, 1
      %v779 = vsel %vm701, %v777, %v778
      %v780 = vrot.slane %v267, 1
      %v781 = vsel %vm701, %v778, %v780
      %v814 = vpack.c.bf16 %v706, %v704
      %v815 = vpack.c.bf16 %v711, %v709
      %v816 = vpack.c.bf16 %v716, %v714
      %v817 = vpack.c.bf16 %v721, %v719
      %v818 = vpack.c.bf16 %v726, %v724
      %v819 = vpack.c.bf16 %v731, %v729
      %v820 = vpack.c.bf16 %v736, %v734
      %v821 = vpack.c.bf16 %v741, %v739
      %v822 = vpack.c.bf16 %v746, %v744
      %v823 = vpack.c.bf16 %v751, %v749
      %v824 = vpack.c.bf16 %v756, %v754
      %v825 = vpack.c.bf16 %v761, %v759
      %v826 = vpack.c.bf16 %v766, %v764
      %v827 = vpack.c.bf16 %v771, %v769
      %v828 = vpack.c.bf16 %v776, %v774
      %v829 = vpack.c.bf16 %v781, %v779
      %s830 = scalar_lea.vmem %s1, 4
      %v831 = vld [vmem:[%s830] sm:$0x3]
      %v833 = vsel %vm368, %v814, 0
      %v836 = vsel %vm368, %v815, 0
      %v839 = vsel %vm368, %v816, 0
      %v842 = vsel %vm368, %v817, 0
      %v845 = vsel %vm368, %v818, 0
      %v848 = vsel %vm368, %v819, 0
      %v851 = vsel %vm368, %v820, 0
      %v854 = vsel %vm368, %v821, 0
      %v857 = vsel %vm368, %v822, 0
      %v860 = vsel %vm368, %v823, 0
      %v863 = vsel %vm368, %v824, 0
      %v866 = vsel %vm368, %v825, 0
      %v869 = vsel %vm368, %v826, 0
      %v872 = vsel %vm368, %v827, 0
      %v875 = vsel %vm368, %v828, 0
      %v878 = vsel %vm368, %v829, 0
      %v881 = vand.u32 %v831, %v420
      %883 = vmatpush.bf16.msra.mxu0 0
      %884 = vmatpush.bf16.msra.mxu0 0
      %885 = vmatpush.bf16.msra.mxu0 0
      %886 = vmatpush.bf16.msra.mxu0 0
      %887 = vmatpush.bf16.msra.mxu0 0
      %888 = vmatpush.bf16.msra.mxu0 0
      %889 = vmatpush.bf16.msra.mxu0 0
      %890 = vmatpush.bf16.msra.mxu0 %v881
      %891 = vmatmul.bf16.gmra.mxu0 %v833
      %v892 = vpop.f32.mrf.mxu0
      %v893 = vadd.f32 0.0, %v892
      %v894 = vpop.f32.mrf.mxu0
      %v895 = vadd.f32 0.0, %v894
      %896 = vmatmul.bf16.gmra.mxu0 %v836
      %v897 = vpop.f32.mrf.mxu0
      %v898 = vadd.f32 0.0, %v897
      %v899 = vpop.f32.mrf.mxu0
      %v900 = vadd.f32 0.0, %v899
      %901 = vmatmul.bf16.gmra.mxu0 %v839
      %v902 = vpop.f32.mrf.mxu0
      %v903 = vadd.f32 0.0, %v902
      %v904 = vpop.f32.mrf.mxu0
      %v905 = vadd.f32 0.0, %v904
      %906 = vmatmul.bf16.gmra.mxu0 %v842
      %v907 = vpop.f32.mrf.mxu0
      %v908 = vadd.f32 0.0, %v907
      %v909 = vpop.f32.mrf.mxu0
      %v910 = vadd.f32 0.0, %v909
      %911 = vmatmul.bf16.gmra.mxu0 %v845
      %v912 = vpop.f32.mrf.mxu0
      %v913 = vadd.f32 0.0, %v912
      %v914 = vpop.f32.mrf.mxu0
      %v915 = vadd.f32 0.0, %v914
      %916 = vmatmul.bf16.gmra.mxu0 %v848
      %v917 = vpop.f32.mrf.mxu0
      %v918 = vadd.f32 0.0, %v917
      %v919 = vpop.f32.mrf.mxu0
      %v920 = vadd.f32 0.0, %v919
      %921 = vmatmul.bf16.gmra.mxu0 %v851
      %v922 = vpop.f32.mrf.mxu0
      %v923 = vadd.f32 0.0, %v922
      %v924 = vpop.f32.mrf.mxu0
      %v925 = vadd.f32 0.0, %v924
      %926 = vmatmul.bf16.gmra.mxu0 %v854
      %v927 = vpop.f32.mrf.mxu0
      %v928 = vadd.f32 0.0, %v927
      %v929 = vpop.f32.mrf.mxu0
      %v930 = vadd.f32 0.0, %v929
      %931 = vmatmul.bf16.gmra.mxu0 %v857
      %v932 = vpop.f32.mrf.mxu0
      %v933 = vadd.f32 0.0, %v932
      %v934 = vpop.f32.mrf.mxu0
      %v935 = vadd.f32 0.0, %v934
      %936 = vmatmul.bf16.gmra.mxu0 %v860
      %v937 = vpop.f32.mrf.mxu0
      %v938 = vadd.f32 0.0, %v937
      %v939 = vpop.f32.mrf.mxu0
      %v940 = vadd.f32 0.0, %v939
      %941 = vmatmul.bf16.gmra.mxu0 %v863
      %v942 = vpop.f32.mrf.mxu0
      %v943 = vadd.f32 0.0, %v942
      %v944 = vpop.f32.mrf.mxu0
      %v945 = vadd.f32 0.0, %v944
      %946 = vmatmul.bf16.gmra.mxu0 %v866
      %v947 = vpop.f32.mrf.mxu0
      %v948 = vadd.f32 0.0, %v947
      %v949 = vpop.f32.mrf.mxu0
      %v950 = vadd.f32 0.0, %v949
      %951 = vmatmul.bf16.gmra.mxu0 %v869
      %v952 = vpop.f32.mrf.mxu0
      %v953 = vadd.f32 0.0, %v952
      %v954 = vpop.f32.mrf.mxu0
      %v955 = vadd.f32 0.0, %v954
      %956 = vmatmul.bf16.gmra.mxu0 %v872
      %v957 = vpop.f32.mrf.mxu0
      %v958 = vadd.f32 0.0, %v957
      %v959 = vpop.f32.mrf.mxu0
      %v960 = vadd.f32 0.0, %v959
      %961 = vmatmul.bf16.gmra.mxu0 %v875
      %v962 = vpop.f32.mrf.mxu0
      %v963 = vadd.f32 0.0, %v962
      %v964 = vpop.f32.mrf.mxu0
      %v965 = vadd.f32 0.0, %v964
      %966 = vmatmul.bf16.gmra.mxu0 %v878
      %v967 = vpop.f32.mrf.mxu0
      %v968 = vadd.f32 0.0, %v967
      %v969 = vpop.f32.mrf.mxu0
      %v970 = vadd.f32 0.0, %v969
      %971 = vdwg.mxu0
      %v972 = vadd.f32 %v574, %v893
      %v973 = vadd.f32 %v576, %v895
      %v974 = vadd.f32 %v579, %v898
      %v975 = vadd.f32 %v581, %v900
      %v976 = vadd.f32 %v584, %v903
      %v977 = vadd.f32 %v586, %v905
      %v978 = vadd.f32 %v589, %v908
      %v979 = vadd.f32 %v591, %v910
      %v980 = vadd.f32 %v594, %v913
      %v981 = vadd.f32 %v596, %v915
      %v982 = vadd.f32 %v599, %v918
      %v983 = vadd.f32 %v601, %v920
      %v984 = vadd.f32 %v604, %v923
      %v985 = vadd.f32 %v606, %v925
      %v986 = vadd.f32 %v609, %v928
      %v987 = vadd.f32 %v611, %v930
      %v988 = vadd.f32 %v614, %v933
      %v989 = vadd.f32 %v616, %v935
      %v990 = vadd.f32 %v619, %v938
      %v991 = vadd.f32 %v621, %v940
      %v992 = vadd.f32 %v624, %v943
      %v993 = vadd.f32 %v626, %v945
      %v994 = vadd.f32 %v629, %v948
      %v995 = vadd.f32 %v631, %v950
      %v996 = vadd.f32 %v634, %v953
      %v997 = vadd.f32 %v636, %v955
      %v998 = vadd.f32 %v639, %v958
      %v999 = vadd.f32 %v641, %v960
      %v1000 = vadd.f32 %v644, %v963
      %v1001 = vadd.f32 %v646, %v965
      %v1002 = vadd.f32 %v649, %v968
      %v1003 = vadd.f32 %v651, %v970
      %s1004 = scalar_lea.vmem %s165, 408
      %v1005 = vld [vmem:[%s1004] sm:$0xf]
      %v1006 = vld [vmem:[%s1004 + $0x4] sm:$0xf]
      %v1007 = vld [vmem:[%s1004 + $0x8] sm:$0x1]
      %v1008 = vld [vmem:[%s1004 + $0xc] sm:$0xf]
      %v1009 = vld [vmem:[%s1004 + $0x10] sm:$0xf]
      %v1010 = vld [vmem:[%s1004 + $0x14] sm:$0x1]
      %v1011 = vld [vmem:[%s1004 + $0x18] sm:$0xf]
      %v1012 = vld [vmem:[%s1004 + $0x1c] sm:$0xf]
      %v1013 = vld [vmem:[%s1004 + $0x20] sm:$0x1]
      %v1014 = vld [vmem:[%s1004 + $0x24] sm:$0xf]
      %v1015 = vld [vmem:[%s1004 + $0x28] sm:$0xf]
      %v1016 = vld [vmem:[%s1004 + $0x2c] sm:$0x1]
      %v1017 = vld [vmem:[%s1004 + $0x30] sm:$0xf]
      %v1018 = vld [vmem:[%s1004 + $0x34] sm:$0xf]
      %v1019 = vld [vmem:[%s1004 + $0x38] sm:$0x1]
      %v1020 = vld [vmem:[%s1004 + $0x3c] sm:$0xf]
      %v1021 = vld [vmem:[%s1004 + $0x40] sm:$0xf]
      %v1022 = vld [vmem:[%s1004 + $0x44] sm:$0x1]
      %v1023 = vld [vmem:[%s1004 + $0x48] sm:$0xf]
      %v1024 = vld [vmem:[%s1004 + $0x4c] sm:$0xf]
      %v1025 = vld [vmem:[%s1004 + $0x50] sm:$0x1]
      %v1026 = vld [vmem:[%s1004 + $0x54] sm:$0xf]
      %v1027 = vld [vmem:[%s1004 + $0x58] sm:$0xf]
      %v1028 = vld [vmem:[%s1004 + $0x5c] sm:$0x1]
      %v1029 = vld [vmem:[%s1004 + $0x60] sm:$0xf]
      %v1030 = vld [vmem:[%s1004 + $0x64] sm:$0xf]
      %v1031 = vld [vmem:[%s1004 + $0x68] sm:$0x1]
      %v1032 = vld [vmem:[%s1004 + $0x6c] sm:$0xf]
      %v1033 = vld [vmem:[%s1004 + $0x70] sm:$0xf]
      %v1034 = vld [vmem:[%s1004 + $0x74] sm:$0x1]
      %v1035 = vld [vmem:[%s1004 + $0x78] sm:$0xf]
      %v1036 = vld [vmem:[%s1004 + $0x7c] sm:$0xf]
      %v1037 = vld [vmem:[%s1004 + $0x80] sm:$0x1]
      %v1038 = vld [vmem:[%s1004 + $0x84] sm:$0xf]
      %v1039 = vld [vmem:[%s1004 + $0x88] sm:$0xf]
      %v1040 = vld [vmem:[%s1004 + $0x8c] sm:$0x1]
      %v1041 = vld [vmem:[%s1004 + $0x90] sm:$0xf]
      %v1042 = vld [vmem:[%s1004 + $0x94] sm:$0xf]
      %v1043 = vld [vmem:[%s1004 + $0x98] sm:$0x1]
      %v1044 = vld [vmem:[%s1004 + $0x9c] sm:$0xf]
      %v1045 = vld [vmem:[%s1004 + $0xa0] sm:$0xf]
      %v1046 = vld [vmem:[%s1004 + $0xa4] sm:$0x1]
      %v1047 = vld [vmem:[%s1004 + $0xa8] sm:$0xf]
      %v1048 = vld [vmem:[%s1004 + $0xac] sm:$0xf]
      %v1049 = vld [vmem:[%s1004 + $0xb0] sm:$0x1]
      %v1050 = vld [vmem:[%s1004 + $0xb4] sm:$0xf]
      %v1051 = vld [vmem:[%s1004 + $0xb8] sm:$0xf]
      %v1052 = vld [vmem:[%s1004 + $0xbc] sm:$0x1]
      %v1053 = vunpack.c.l.bf16 %v1005
      %v1054 = vunpack.c.l.bf16 %v1006
      %v1055 = vunpack.c.l.bf16 %v1007
      %v1056 = vunpack.c.l.bf16 %v1008
      %v1057 = vunpack.c.l.bf16 %v1009
      %v1058 = vunpack.c.l.bf16 %v1010
      %v1059 = vunpack.c.l.bf16 %v1011
      %v1060 = vunpack.c.l.bf16 %v1012
      %v1061 = vunpack.c.l.bf16 %v1013
      %v1062 = vunpack.c.l.bf16 %v1014
      %v1063 = vunpack.c.l.bf16 %v1015
      %v1064 = vunpack.c.l.bf16 %v1016
      %v1065 = vunpack.c.l.bf16 %v1017
      %v1066 = vunpack.c.l.bf16 %v1018
      %v1067 = vunpack.c.l.bf16 %v1019
      %v1068 = vunpack.c.l.bf16 %v1020
      %v1069 = vunpack.c.l.bf16 %v1021
      %v1070 = vunpack.c.l.bf16 %v1022
      %v1071 = vunpack.c.l.bf16 %v1023
      %v1072 = vunpack.c.l.bf16 %v1024
      %v1073 = vunpack.c.l.bf16 %v1025
      %v1074 = vunpack.c.l.bf16 %v1026
      %v1075 = vunpack.c.l.bf16 %v1027
      %v1076 = vunpack.c.l.bf16 %v1028
      %v1077 = vunpack.c.l.bf16 %v1029
      %v1078 = vunpack.c.l.bf16 %v1030
      %v1079 = vunpack.c.l.bf16 %v1031
      %v1080 = vunpack.c.l.bf16 %v1032
      %v1081 = vunpack.c.l.bf16 %v1033
      %v1082 = vunpack.c.l.bf16 %v1034
      %v1083 = vunpack.c.l.bf16 %v1035
      %v1084 = vunpack.c.l.bf16 %v1036
      %v1085 = vunpack.c.l.bf16 %v1037
      %v1086 = vunpack.c.l.bf16 %v1038
      %v1087 = vunpack.c.l.bf16 %v1039
      %v1088 = vunpack.c.l.bf16 %v1040
      %v1089 = vunpack.c.l.bf16 %v1041
      %v1090 = vunpack.c.l.bf16 %v1042
      %v1091 = vunpack.c.l.bf16 %v1043
      %v1092 = vunpack.c.l.bf16 %v1044
      %v1093 = vunpack.c.l.bf16 %v1045
      %v1094 = vunpack.c.l.bf16 %v1046
      %v1095 = vunpack.c.l.bf16 %v1047
      %v1096 = vunpack.c.l.bf16 %v1048
      %v1097 = vunpack.c.l.bf16 %v1049
      %v1098 = vunpack.c.l.bf16 %v1050
      %v1099 = vunpack.c.l.bf16 %v1051
      %v1100 = vunpack.c.l.bf16 %v1052
      %v1101 = vpack.c.bf16 %v1054, %v1053
      %v1102 = vpack.c.bf16 %v1057, %v1056
      %v1103 = vpack.c.bf16 %v1060, %v1059
      %v1104 = vpack.c.bf16 %v1063, %v1062
      %v1105 = vpack.c.bf16 %v1066, %v1065
      %v1106 = vpack.c.bf16 %v1069, %v1068
      %v1107 = vpack.c.bf16 %v1072, %v1071
      %v1108 = vpack.c.bf16 %v1075, %v1074
      %v1109 = vpack.c.bf16 %v1078, %v1077
      %v1110 = vpack.c.bf16 %v1081, %v1080
      %v1111 = vpack.c.bf16 %v1084, %v1083
      %v1112 = vpack.c.bf16 %v1087, %v1086
      %v1113 = vpack.c.bf16 %v1090, %v1089
      %v1114 = vpack.c.bf16 %v1093, %v1092
      %v1115 = vpack.c.bf16 %v1096, %v1095
      %v1116 = vpack.c.bf16 %v1099, %v1098
      %s1117 = scalar_lea.vmem %s1, 6
      %v1118 = vld [vmem:[%s1117] sm:$0x3]
      %v1120 = vsel %vm368, %v1101, 0
      %v1123 = vsel %vm368, %v1102, 0
      %v1126 = vsel %vm368, %v1103, 0
      %v1129 = vsel %vm368, %v1104, 0
      %v1132 = vsel %vm368, %v1105, 0
      %v1135 = vsel %vm368, %v1106, 0
      %v1138 = vsel %vm368, %v1107, 0
      %v1141 = vsel %vm368, %v1108, 0
      %v1144 = vsel %vm368, %v1109, 0
      %v1147 = vsel %vm368, %v1110, 0
      %v1150 = vsel %vm368, %v1111, 0
      %v1153 = vsel %vm368, %v1112, 0
      %v1156 = vsel %vm368, %v1113, 0
      %v1159 = vsel %vm368, %v1114, 0
      %v1162 = vsel %vm368, %v1115, 0
      %v1165 = vsel %vm368, %v1116, 0
      %v1168 = vand.u32 %v1118, %v420
      %1170 = vmatpush.bf16.msra.mxu0 0
      %1171 = vmatpush.bf16.msra.mxu0 0
      %1172 = vmatpush.bf16.msra.mxu0 0
      %1173 = vmatpush.bf16.msra.mxu0 0
      %1174 = vmatpush.bf16.msra.mxu0 0
      %1175 = vmatpush.bf16.msra.mxu0 0
      %1176 = vmatpush.bf16.msra.mxu0 0
      %1177 = vmatpush.bf16.msra.mxu0 %v1168
      %1178 = vmatmul.bf16.gmra.mxu0 %v1120
      %v1179 = vpop.f32.mrf.mxu0
      %v1180 = vadd.f32 0.0, %v1179
      %v1181 = vpop.f32.mrf.mxu0
      %v1182 = vadd.f32 0.0, %v1181
      %1183 = vmatmul.bf16.gmra.mxu0 %v1123
      %v1184 = vpop.f32.mrf.mxu0
      %v1185 = vadd.f32 0.0, %v1184
      %v1186 = vpop.f32.mrf.mxu0
      %v1187 = vadd.f32 0.0, %v1186
      %1188 = vmatmul.bf16.gmra.mxu0 %v1126
      %v1189 = vpop.f32.mrf.mxu0
      %v1190 = vadd.f32 0.0, %v1189
      %v1191 = vpop.f32.mrf.mxu0
      %v1192 = vadd.f32 0.0, %v1191
      %1193 = vmatmul.bf16.gmra.mxu0 %v1129
      %v1194 = vpop.f32.mrf.mxu0
      %v1195 = vadd.f32 0.0, %v1194
      %v1196 = vpop.f32.mrf.mxu0
      %v1197 = vadd.f32 0.0, %v1196
      %1198 = vmatmul.bf16.gmra.mxu0 %v1132
      %v1199 = vpop.f32.mrf.mxu0
      %v1200 = vadd.f32 0.0, %v1199
      %v1201 = vpop.f32.mrf.mxu0
      %v1202 = vadd.f32 0.0, %v1201
      %1203 = vmatmul.bf16.gmra.mxu0 %v1135
      %v1204 = vpop.f32.mrf.mxu0
      %v1205 = vadd.f32 0.0, %v1204
      %v1206 = vpop.f32.mrf.mxu0
      %v1207 = vadd.f32 0.0, %v1206
      %1208 = vmatmul.bf16.gmra.mxu0 %v1138
      %v1209 = vpop.f32.mrf.mxu0
      %v1210 = vadd.f32 0.0, %v1209
      %v1211 = vpop.f32.mrf.mxu0
      %v1212 = vadd.f32 0.0, %v1211
      %1213 = vmatmul.bf16.gmra.mxu0 %v1141
      %v1214 = vpop.f32.mrf.mxu0
      %v1215 = vadd.f32 0.0, %v1214
      %v1216 = vpop.f32.mrf.mxu0
      %v1217 = vadd.f32 0.0, %v1216
      %1218 = vmatmul.bf16.gmra.mxu0 %v1144
      %v1219 = vpop.f32.mrf.mxu0
      %v1220 = vadd.f32 0.0, %v1219
      %v1221 = vpop.f32.mrf.mxu0
      %v1222 = vadd.f32 0.0, %v1221
      %1223 = vmatmul.bf16.gmra.mxu0 %v1147
      %v1224 = vpop.f32.mrf.mxu0
      %v1225 = vadd.f32 0.0, %v1224
      %v1226 = vpop.f32.mrf.mxu0
      %v1227 = vadd.f32 0.0, %v1226
      %1228 = vmatmul.bf16.gmra.mxu0 %v1150
      %v1229 = vpop.f32.mrf.mxu0
      %v1230 = vadd.f32 0.0, %v1229
      %v1231 = vpop.f32.mrf.mxu0
      %v1232 = vadd.f32 0.0, %v1231
      %1233 = vmatmul.bf16.gmra.mxu0 %v1153
      %v1234 = vpop.f32.mrf.mxu0
      %v1235 = vadd.f32 0.0, %v1234
      %v1236 = vpop.f32.mrf.mxu0
      %v1237 = vadd.f32 0.0, %v1236
      %1238 = vmatmul.bf16.gmra.mxu0 %v1156
      %v1239 = vpop.f32.mrf.mxu0
      %v1240 = vadd.f32 0.0, %v1239
      %v1241 = vpop.f32.mrf.mxu0
      %v1242 = vadd.f32 0.0, %v1241
      %1243 = vmatmul.bf16.gmra.mxu0 %v1159
      %v1244 = vpop.f32.mrf.mxu0
      %v1245 = vadd.f32 0.0, %v1244
      %v1246 = vpop.f32.mrf.mxu0
      %v1247 = vadd.f32 0.0, %v1246
      %1248 = vmatmul.bf16.gmra.mxu0 %v1162
      %v1249 = vpop.f32.mrf.mxu0
      %v1250 = vadd.f32 0.0, %v1249
      %v1251 = vpop.f32.mrf.mxu0
      %v1252 = vadd.f32 0.0, %v1251
      %1253 = vmatmul.bf16.gmra.mxu0 %v1165
      %v1254 = vpop.f32.mrf.mxu0
      %v1255 = vadd.f32 0.0, %v1254
      %v1256 = vpop.f32.mrf.mxu0
      %v1257 = vadd.f32 0.0, %v1256
      %1258 = vdwg.mxu0
      %v1259 = vadd.f32 %v972, %v1180
      %v1260 = vadd.f32 %v973, %v1182
      %v1261 = vadd.f32 %v974, %v1185
      %v1262 = vadd.f32 %v975, %v1187
      %v1263 = vadd.f32 %v976, %v1190
      %v1264 = vadd.f32 %v977, %v1192
      %v1265 = vadd.f32 %v978, %v1195
      %v1266 = vadd.f32 %v979, %v1197
      %v1267 = vadd.f32 %v980, %v1200
      %v1268 = vadd.f32 %v981, %v1202
      %v1269 = vadd.f32 %v982, %v1205
      %v1270 = vadd.f32 %v983, %v1207
      %v1271 = vadd.f32 %v984, %v1210
      %v1272 = vadd.f32 %v985, %v1212
      %v1273 = vadd.f32 %v986, %v1215
      %v1274 = vadd.f32 %v987, %v1217
      %v1275 = vadd.f32 %v988, %v1220
      %v1276 = vadd.f32 %v989, %v1222
      %v1277 = vadd.f32 %v990, %v1225
      %v1278 = vadd.f32 %v991, %v1227
      %v1279 = vadd.f32 %v992, %v1230
      %v1280 = vadd.f32 %v993, %v1232
      %v1281 = vadd.f32 %v994, %v1235
      %v1282 = vadd.f32 %v995, %v1237
      %v1283 = vadd.f32 %v996, %v1240
      %v1284 = vadd.f32 %v997, %v1242
      %v1285 = vadd.f32 %v998, %v1245
      %v1286 = vadd.f32 %v999, %v1247
      %v1287 = vadd.f32 %v1000, %v1250
      %v1288 = vadd.f32 %v1001, %v1252
      %v1289 = vadd.f32 %v1002, %v1255
      %v1290 = vadd.f32 %v1003, %v1257
      %s1291 = scalar_lea.vmem %s165, 612
      %v1292 = vld [vmem:[%s1291] sm:$0xf]
      %v1293 = vld [vmem:[%s1291 + $0x4] sm:$0xf]
      %v1294 = vld [vmem:[%s1291 + $0xc] sm:$0xf]
      %v1295 = vld [vmem:[%s1291 + $0x10] sm:$0xf]
      %v1296 = vld [vmem:[%s1291 + $0x18] sm:$0xf]
      %v1297 = vld [vmem:[%s1291 + $0x1c] sm:$0xf]
      %v1298 = vld [vmem:[%s1291 + $0x24] sm:$0xf]
      %v1299 = vld [vmem:[%s1291 + $0x28] sm:$0xf]
      %v1300 = vld [vmem:[%s1291 + $0x30] sm:$0xf]
      %v1301 = vld [vmem:[%s1291 + $0x34] sm:$0xf]
      %v1302 = vld [vmem:[%s1291 + $0x3c] sm:$0xf]
      %v1303 = vld [vmem:[%s1291 + $0x40] sm:$0xf]
      %v1304 = vld [vmem:[%s1291 + $0x48] sm:$0xf]
      %v1305 = vld [vmem:[%s1291 + $0x4c] sm:$0xf]
      %v1306 = vld [vmem:[%s1291 + $0x54] sm:$0xf]
      %v1307 = vld [vmem:[%s1291 + $0x58] sm:$0xf]
      %v1308 = vld [vmem:[%s1291 + $0x60] sm:$0xf]
      %v1309 = vld [vmem:[%s1291 + $0x64] sm:$0xf]
      %v1310 = vld [vmem:[%s1291 + $0x6c] sm:$0xf]
      %v1311 = vld [vmem:[%s1291 + $0x70] sm:$0xf]
      %v1312 = vld [vmem:[%s1291 + $0x78] sm:$0xf]
      %v1313 = vld [vmem:[%s1291 + $0x7c] sm:$0xf]
      %v1314 = vld [vmem:[%s1291 + $0x84] sm:$0xf]
      %v1315 = vld [vmem:[%s1291 + $0x88] sm:$0xf]
      %v1316 = vld [vmem:[%s1291 + $0x90] sm:$0xf]
      %v1317 = vld [vmem:[%s1291 + $0x94] sm:$0xf]
      %v1318 = vld [vmem:[%s1291 + $0x9c] sm:$0xf]
      %v1319 = vld [vmem:[%s1291 + $0xa0] sm:$0xf]
      %v1320 = vld [vmem:[%s1291 + $0xa8] sm:$0xf]
      %v1321 = vld [vmem:[%s1291 + $0xac] sm:$0xf]
      %v1322 = vld [vmem:[%s1291 + $0xb4] sm:$0xf]
      %v1323 = vld [vmem:[%s1291 + $0xb8] sm:$0xf]
      %v1324 = vunpack.c.l.bf16 %v1292
      %v1325 = vunpack.c.l.bf16 %v1293
      %v1326 = vunpack.c.l.bf16 %v1294
      %v1327 = vunpack.c.l.bf16 %v1295
      %v1328 = vunpack.c.l.bf16 %v1296
      %v1329 = vunpack.c.l.bf16 %v1297
      %v1330 = vunpack.c.l.bf16 %v1298
      %v1331 = vunpack.c.l.bf16 %v1299
      %v1332 = vunpack.c.l.bf16 %v1300
      %v1333 = vunpack.c.l.bf16 %v1301
      %v1334 = vunpack.c.l.bf16 %v1302
      %v1335 = vunpack.c.l.bf16 %v1303
      %v1336 = vunpack.c.l.bf16 %v1304
      %v1337 = vunpack.c.l.bf16 %v1305
      %v1338 = vunpack.c.l.bf16 %v1306
      %v1339 = vunpack.c.l.bf16 %v1307
      %v1340 = vunpack.c.l.bf16 %v1308
      %v1341 = vunpack.c.l.bf16 %v1309
      %v1342 = vunpack.c.l.bf16 %v1310
      %v1343 = vunpack.c.l.bf16 %v1311
      %v1344 = vunpack.c.l.bf16 %v1312
      %v1345 = vunpack.c.l.bf16 %v1313
      %v1346 = vunpack.c.l.bf16 %v1314
      %v1347 = vunpack.c.l.bf16 %v1315
      %v1348 = vunpack.c.l.bf16 %v1316
      %v1349 = vunpack.c.l.bf16 %v1317
      %v1350 = vunpack.c.l.bf16 %v1318
      %v1351 = vunpack.c.l.bf16 %v1319
      %v1352 = vunpack.c.l.bf16 %v1320
      %v1353 = vunpack.c.l.bf16 %v1321
      %v1354 = vunpack.c.l.bf16 %v1322
      %v1355 = vunpack.c.l.bf16 %v1323
      %v1356 = vpack.c.bf16 %v1325, %v1324
      %v1357 = vpack.c.bf16 %v1327, %v1326
      %v1358 = vpack.c.bf16 %v1329, %v1328
      %v1359 = vpack.c.bf16 %v1331, %v1330
      %v1360 = vpack.c.bf16 %v1333, %v1332
      %v1361 = vpack.c.bf16 %v1335, %v1334
      %v1362 = vpack.c.bf16 %v1337, %v1336
      %v1363 = vpack.c.bf16 %v1339, %v1338
      %v1364 = vpack.c.bf16 %v1341, %v1340
      %v1365 = vpack.c.bf16 %v1343, %v1342
      %v1366 = vpack.c.bf16 %v1345, %v1344
      %v1367 = vpack.c.bf16 %v1347, %v1346
      %v1368 = vpack.c.bf16 %v1349, %v1348
      %v1369 = vpack.c.bf16 %v1351, %v1350
      %v1370 = vpack.c.bf16 %v1353, %v1352
      %v1371 = vpack.c.bf16 %v1355, %v1354
      %s1372 = scalar_lea.vmem %s1, 8
      %v1373 = vld [vmem:[%s1372] sm:$0x3]
      %v1375 = vsel %vm368, %v1356, 0
      %v1378 = vsel %vm368, %v1357, 0
      %v1381 = vsel %vm368, %v1358, 0
      %v1384 = vsel %vm368, %v1359, 0
      %v1387 = vsel %vm368, %v1360, 0
      %v1390 = vsel %vm368, %v1361, 0
      %v1393 = vsel %vm368, %v1362, 0
      %v1396 = vsel %vm368, %v1363, 0
      %v1399 = vsel %vm368, %v1364, 0
      %v1402 = vsel %vm368, %v1365, 0
      %v1405 = vsel %vm368, %v1366, 0
      %v1408 = vsel %vm368, %v1367, 0
      %v1411 = vsel %vm368, %v1368, 0
      %v1414 = vsel %vm368, %v1369, 0
      %v1417 = vsel %vm368, %v1370, 0
      %v1420 = vsel %vm368, %v1371, 0
      %v1423 = vand.u32 %v1373, %v420
      %1425 = vmatpush.bf16.msra.mxu0 0
      %1426 = vmatpush.bf16.msra.mxu0 0
      %1427 = vmatpush.bf16.msra.mxu0 0
      %1428 = vmatpush.bf16.msra.mxu0 0
      %1429 = vmatpush.bf16.msra.mxu0 0
      %1430 = vmatpush.bf16.msra.mxu0 0
      %1431 = vmatpush.bf16.msra.mxu0 0
      %1432 = vmatpush.bf16.msra.mxu0 %v1423
      %1433 = vmatmul.bf16.gmra.mxu0 %v1375
      %v1434 = vpop.f32.mrf.mxu0
      %v1435 = vadd.f32 0.0, %v1434
      %v1436 = vpop.f32.mrf.mxu0
      %v1437 = vadd.f32 0.0, %v1436
      %1438 = vmatmul.bf16.gmra.mxu0 %v1378
      %v1439 = vpop.f32.mrf.mxu0
      %v1440 = vadd.f32 0.0, %v1439
      %v1441 = vpop.f32.mrf.mxu0
      %v1442 = vadd.f32 0.0, %v1441
      %1443 = vmatmul.bf16.gmra.mxu0 %v1381
      %v1444 = vpop.f32.mrf.mxu0
      %v1445 = vadd.f32 0.0, %v1444
      %v1446 = vpop.f32.mrf.mxu0
      %v1447 = vadd.f32 0.0, %v1446
      %1448 = vmatmul.bf16.gmra.mxu0 %v1384
      %v1449 = vpop.f32.mrf.mxu0
      %v1450 = vadd.f32 0.0, %v1449
      %v1451 = vpop.f32.mrf.mxu0
      %v1452 = vadd.f32 0.0, %v1451
      %1453 = vmatmul.bf16.gmra.mxu0 %v1387
      %v1454 = vpop.f32.mrf.mxu0
      %v1455 = vadd.f32 0.0, %v1454
      %v1456 = vpop.f32.mrf.mxu0
      %v1457 = vadd.f32 0.0, %v1456
      %1458 = vmatmul.bf16.gmra.mxu0 %v1390
      %v1459 = vpop.f32.mrf.mxu0
      %v1460 = vadd.f32 0.0, %v1459
      %v1461 = vpop.f32.mrf.mxu0
      %v1462 = vadd.f32 0.0, %v1461
      %1463 = vmatmul.bf16.gmra.mxu0 %v1393
      %v1464 = vpop.f32.mrf.mxu0
      %v1465 = vadd.f32 0.0, %v1464
      %v1466 = vpop.f32.mrf.mxu0
      %v1467 = vadd.f32 0.0, %v1466
      %1468 = vmatmul.bf16.gmra.mxu0 %v1396
      %v1469 = vpop.f32.mrf.mxu0
      %v1470 = vadd.f32 0.0, %v1469
      %v1471 = vpop.f32.mrf.mxu0
      %v1472 = vadd.f32 0.0, %v1471
      %1473 = vmatmul.bf16.gmra.mxu0 %v1399
      %v1474 = vpop.f32.mrf.mxu0
      %v1475 = vadd.f32 0.0, %v1474
      %v1476 = vpop.f32.mrf.mxu0
      %v1477 = vadd.f32 0.0, %v1476
      %1478 = vmatmul.bf16.gmra.mxu0 %v1402
      %v1479 = vpop.f32.mrf.mxu0
      %v1480 = vadd.f32 0.0, %v1479
      %v1481 = vpop.f32.mrf.mxu0
      %v1482 = vadd.f32 0.0, %v1481
      %1483 = vmatmul.bf16.gmra.mxu0 %v1405
      %v1484 = vpop.f32.mrf.mxu0
      %v1485 = vadd.f32 0.0, %v1484
      %v1486 = vpop.f32.mrf.mxu0
      %v1487 = vadd.f32 0.0, %v1486
      %1488 = vmatmul.bf16.gmra.mxu0 %v1408
      %v1489 = vpop.f32.mrf.mxu0
      %v1490 = vadd.f32 0.0, %v1489
      %v1491 = vpop.f32.mrf.mxu0
      %v1492 = vadd.f32 0.0, %v1491
      %1493 = vmatmul.bf16.gmra.mxu0 %v1411
      %v1494 = vpop.f32.mrf.mxu0
      %v1495 = vadd.f32 0.0, %v1494
      %v1496 = vpop.f32.mrf.mxu0
      %v1497 = vadd.f32 0.0, %v1496
      %1498 = vmatmul.bf16.gmra.mxu0 %v1414
      %v1499 = vpop.f32.mrf.mxu0
      %v1500 = vadd.f32 0.0, %v1499
      %v1501 = vpop.f32.mrf.mxu0
      %v1502 = vadd.f32 0.0, %v1501
      %1503 = vmatmul.bf16.gmra.mxu0 %v1417
      %v1504 = vpop.f32.mrf.mxu0
      %v1505 = vadd.f32 0.0, %v1504
      %v1506 = vpop.f32.mrf.mxu0
      %v1507 = vadd.f32 0.0, %v1506
      %1508 = vmatmul.bf16.gmra.mxu0 %v1420
      %v1509 = vpop.f32.mrf.mxu0
      %v1510 = vadd.f32 0.0, %v1509
      %v1511 = vpop.f32.mrf.mxu0
      %v1512 = vadd.f32 0.0, %v1511
      %1513 = vdwg.mxu0
      %v1514 = vadd.f32 %v1259, %v1435
      %v1515 = vadd.f32 %v1260, %v1437
      %v1516 = vadd.f32 %v1261, %v1440
      %v1517 = vadd.f32 %v1262, %v1442
      %v1518 = vadd.f32 %v1263, %v1445
      %v1519 = vadd.f32 %v1264, %v1447
      %v1520 = vadd.f32 %v1265, %v1450
      %v1521 = vadd.f32 %v1266, %v1452
      %v1522 = vadd.f32 %v1267, %v1455
      %v1523 = vadd.f32 %v1268, %v1457
      %v1524 = vadd.f32 %v1269, %v1460
      %v1525 = vadd.f32 %v1270, %v1462
      %v1526 = vadd.f32 %v1271, %v1465
      %v1527 = vadd.f32 %v1272, %v1467
      %v1528 = vadd.f32 %v1273, %v1470
      %v1529 = vadd.f32 %v1274, %v1472
      %v1530 = vadd.f32 %v1275, %v1475
      %v1531 = vadd.f32 %v1276, %v1477
      %v1532 = vadd.f32 %v1277, %v1480
      %v1533 = vadd.f32 %v1278, %v1482
      %v1534 = vadd.f32 %v1279, %v1485
      %v1535 = vadd.f32 %v1280, %v1487
      %v1536 = vadd.f32 %v1281, %v1490
      %v1537 = vadd.f32 %v1282, %v1492
      %v1538 = vadd.f32 %v1283, %v1495
      %v1539 = vadd.f32 %v1284, %v1497
      %v1540 = vadd.f32 %v1285, %v1500
      %v1541 = vadd.f32 %v1286, %v1502
      %v1542 = vadd.f32 %v1287, %v1505
      %v1543 = vadd.f32 %v1288, %v1507
      %v1544 = vadd.f32 %v1289, %v1510
      %v1545 = vadd.f32 %v1290, %v1512
      %v1594 = vrot.slane %v1053, 1
      %v1595 = vrot.slane %v1054, 1
      %v1596 = vsel %vm701, %v1594, %v1595
      %v1597 = vrot.slane %v1055, 1
      %v1598 = vsel %vm701, %v1595, %v1597
      %v1599 = vrot.slane %v1056, 1
      %v1600 = vrot.slane %v1057, 1
      %v1601 = vsel %vm701, %v1599, %v1600
      %v1602 = vrot.slane %v1058, 1
      %v1603 = vsel %vm701, %v1600, %v1602
      %v1604 = vrot.slane %v1059, 1
      %v1605 = vrot.slane %v1060, 1
      %v1606 = vsel %vm701, %v1604, %v1605
      %v1607 = vrot.slane %v1061, 1
      %v1608 = vsel %vm701, %v1605, %v1607
      %v1609 = vrot.slane %v1062, 1
      %v1610 = vrot.slane %v1063, 1
      %v1611 = vsel %vm701, %v1609, %v1610
      %v1612 = vrot.slane %v1064, 1
      %v1613 = vsel %vm701, %v1610, %v1612
      %v1614 = vrot.slane %v1065, 1
      %v1615 = vrot.slane %v1066, 1
      %v1616 = vsel %vm701, %v1614, %v1615
      %v1617 = vrot.slane %v1067, 1
      %v1618 = vsel %vm701, %v1615, %v1617
      %v1619 = vrot.slane %v1068, 1
      %v1620 = vrot.slane %v1069, 1
      %v1621 = vsel %vm701, %v1619, %v1620
      %v1622 = vrot.slane %v1070, 1
      %v1623 = vsel %vm701, %v1620, %v1622
      %v1624 = vrot.slane %v1071, 1
      %v1625 = vrot.slane %v1072, 1
      %v1626 = vsel %vm701, %v1624, %v1625
      %v1627 = vrot.slane %v1073, 1
      %v1628 = vsel %vm701, %v1625, %v1627
      %v1629 = vrot.slane %v1074, 1
      %v1630 = vrot.slane %v1075, 1
      %v1631 = vsel %vm701, %v1629, %v1630
      %v1632 = vrot.slane %v1076, 1
      %v1633 = vsel %vm701, %v1630, %v1632
      %v1634 = vrot.slane %v1077, 1
      %v1635 = vrot.slane %v1078, 1
      %v1636 = vsel %vm701, %v1634, %v1635
      %v1637 = vrot.slane %v1079, 1
      %v1638 = vsel %vm701, %v1635, %v1637
      %v1639 = vrot.slane %v1080, 1
      %v1640 = vrot.slane %v1081, 1
      %v1641 = vsel %vm701, %v1639, %v1640
      %v1642 = vrot.slane %v1082, 1
      %v1643 = vsel %vm701, %v1640, %v1642
      %v1644 = vrot.slane %v1083, 1
      %v1645 = vrot.slane %v1084, 1
      %v1646 = vsel %vm701, %v1644, %v1645
      %v1647 = vrot.slane %v1085, 1
      %v1648 = vsel %vm701, %v1645, %v1647
      %v1649 = vrot.slane %v1086, 1
      %v1650 = vrot.slane %v1087, 1
      %v1651 = vsel %vm701, %v1649, %v1650
      %v1652 = vrot.slane %v1088, 1
      %v1653 = vsel %vm701, %v1650, %v1652
      %v1654 = vrot.slane %v1089, 1
      %v1655 = vrot.slane %v1090, 1
      %v1656 = vsel %vm701, %v1654, %v1655
      %v1657 = vrot.slane %v1091, 1
      %v1658 = vsel %vm701, %v1655, %v1657
      %v1659 = vrot.slane %v1092, 1
      %v1660 = vrot.slane %v1093, 1
      %v1661 = vsel %vm701, %v1659, %v1660
      %v1662 = vrot.slane %v1094, 1
      %v1663 = vsel %vm701, %v1660, %v1662
      %v1664 = vrot.slane %v1095, 1
      %v1665 = vrot.slane %v1096, 1
      %v1666 = vsel %vm701, %v1664, %v1665
      %v1667 = vrot.slane %v1097, 1
      %v1668 = vsel %vm701, %v1665, %v1667
      %v1669 = vrot.slane %v1098, 1
      %v1670 = vrot.slane %v1099, 1
      %v1671 = vsel %vm701, %v1669, %v1670
      %v1672 = vrot.slane %v1100, 1
      %v1673 = vsel %vm701, %v1670, %v1672
      %v1706 = vpack.c.bf16 %v1598, %v1596
      %v1707 = vpack.c.bf16 %v1603, %v1601
      %v1708 = vpack.c.bf16 %v1608, %v1606
      %v1709 = vpack.c.bf16 %v1613, %v1611
      %v1710 = vpack.c.bf16 %v1618, %v1616
      %v1711 = vpack.c.bf16 %v1623, %v1621
      %v1712 = vpack.c.bf16 %v1628, %v1626
      %v1713 = vpack.c.bf16 %v1633, %v1631
      %v1714 = vpack.c.bf16 %v1638, %v1636
      %v1715 = vpack.c.bf16 %v1643, %v1641
      %v1716 = vpack.c.bf16 %v1648, %v1646
      %v1717 = vpack.c.bf16 %v1653, %v1651
      %v1718 = vpack.c.bf16 %v1658, %v1656
      %v1719 = vpack.c.bf16 %v1663, %v1661
      %v1720 = vpack.c.bf16 %v1668, %v1666
      %v1721 = vpack.c.bf16 %v1673, %v1671
      %s1722 = scalar_lea.vmem %s1, 10
      %v1723 = vld [vmem:[%s1722] sm:$0x3]
      %v1725 = vsel %vm368, %v1706, 0
      %v1728 = vsel %vm368, %v1707, 0
      %v1731 = vsel %vm368, %v1708, 0
      %v1734 = vsel %vm368, %v1709, 0
      %v1737 = vsel %vm368, %v1710, 0
      %v1740 = vsel %vm368, %v1711, 0
      %v1743 = vsel %vm368, %v1712, 0
      %v1746 = vsel %vm368, %v1713, 0
      %v1749 = vsel %vm368, %v1714, 0
      %v1752 = vsel %vm368, %v1715, 0
      %v1755 = vsel %vm368, %v1716, 0
      %v1758 = vsel %vm368, %v1717, 0
      %v1761 = vsel %vm368, %v1718, 0
      %v1764 = vsel %vm368, %v1719, 0
      %v1767 = vsel %vm368, %v1720, 0
      %v1770 = vsel %vm368, %v1721, 0
      %v1773 = vand.u32 %v1723, %v420
      %1775 = vmatpush.bf16.msra.mxu0 0
      %1776 = vmatpush.bf16.msra.mxu0 0
      %1777 = vmatpush.bf16.msra.mxu0 0
      %1778 = vmatpush.bf16.msra.mxu0 0
      %1779 = vmatpush.bf16.msra.mxu0 0
      %1780 = vmatpush.bf16.msra.mxu0 0
      %1781 = vmatpush.bf16.msra.mxu0 0
      %1782 = vmatpush.bf16.msra.mxu0 %v1773
      %1783 = vmatmul.bf16.gmra.mxu0 %v1725
      %v1784 = vpop.f32.mrf.mxu0
      %v1785 = vadd.f32 0.0, %v1784
      %v1786 = vpop.f32.mrf.mxu0
      %v1787 = vadd.f32 0.0, %v1786
      %1788 = vmatmul.bf16.gmra.mxu0 %v1728
      %v1789 = vpop.f32.mrf.mxu0
      %v1790 = vadd.f32 0.0, %v1789
      %v1791 = vpop.f32.mrf.mxu0
      %v1792 = vadd.f32 0.0, %v1791
      %1793 = vmatmul.bf16.gmra.mxu0 %v1731
      %v1794 = vpop.f32.mrf.mxu0
      %v1795 = vadd.f32 0.0, %v1794
      %v1796 = vpop.f32.mrf.mxu0
      %v1797 = vadd.f32 0.0, %v1796
      %1798 = vmatmul.bf16.gmra.mxu0 %v1734
      %v1799 = vpop.f32.mrf.mxu0
      %v1800 = vadd.f32 0.0, %v1799
      %v1801 = vpop.f32.mrf.mxu0
      %v1802 = vadd.f32 0.0, %v1801
      %1803 = vmatmul.bf16.gmra.mxu0 %v1737
      %v1804 = vpop.f32.mrf.mxu0
      %v1805 = vadd.f32 0.0, %v1804
      %v1806 = vpop.f32.mrf.mxu0
      %v1807 = vadd.f32 0.0, %v1806
      %1808 = vmatmul.bf16.gmra.mxu0 %v1740
      %v1809 = vpop.f32.mrf.mxu0
      %v1810 = vadd.f32 0.0, %v1809
      %v1811 = vpop.f32.mrf.mxu0
      %v1812 = vadd.f32 0.0, %v1811
      %1813 = vmatmul.bf16.gmra.mxu0 %v1743
      %v1814 = vpop.f32.mrf.mxu0
      %v1815 = vadd.f32 0.0, %v1814
      %v1816 = vpop.f32.mrf.mxu0
      %v1817 = vadd.f32 0.0, %v1816
      %1818 = vmatmul.bf16.gmra.mxu0 %v1746
      %v1819 = vpop.f32.mrf.mxu0
      %v1820 = vadd.f32 0.0, %v1819
      %v1821 = vpop.f32.mrf.mxu0
      %v1822 = vadd.f32 0.0, %v1821
      %1823 = vmatmul.bf16.gmra.mxu0 %v1749
      %v1824 = vpop.f32.mrf.mxu0
      %v1825 = vadd.f32 0.0, %v1824
      %v1826 = vpop.f32.mrf.mxu0
      %v1827 = vadd.f32 0.0, %v1826
      %1828 = vmatmul.bf16.gmra.mxu0 %v1752
      %v1829 = vpop.f32.mrf.mxu0
      %v1830 = vadd.f32 0.0, %v1829
      %v1831 = vpop.f32.mrf.mxu0
      %v1832 = vadd.f32 0.0, %v1831
      %1833 = vmatmul.bf16.gmra.mxu0 %v1755
      %v1834 = vpop.f32.mrf.mxu0
      %v1835 = vadd.f32 0.0, %v1834
      %v1836 = vpop.f32.mrf.mxu0
      %v1837 = vadd.f32 0.0, %v1836
      %1838 = vmatmul.bf16.gmra.mxu0 %v1758
      %v1839 = vpop.f32.mrf.mxu0
      %v1840 = vadd.f32 0.0, %v1839
      %v1841 = vpop.f32.mrf.mxu0
      %v1842 = vadd.f32 0.0, %v1841
      %1843 = vmatmul.bf16.gmra.mxu0 %v1761
      %v1844 = vpop.f32.mrf.mxu0
      %v1845 = vadd.f32 0.0, %v1844
      %v1846 = vpop.f32.mrf.mxu0
      %v1847 = vadd.f32 0.0, %v1846
      %1848 = vmatmul.bf16.gmra.mxu0 %v1764
      %v1849 = vpop.f32.mrf.mxu0
      %v1850 = vadd.f32 0.0, %v1849
      %v1851 = vpop.f32.mrf.mxu0
      %v1852 = vadd.f32 0.0, %v1851
      %1853 = vmatmul.bf16.gmra.mxu0 %v1767
      %v1854 = vpop.f32.mrf.mxu0
      %v1855 = vadd.f32 0.0, %v1854
      %v1856 = vpop.f32.mrf.mxu0
      %v1857 = vadd.f32 0.0, %v1856
      %1858 = vmatmul.bf16.gmra.mxu0 %v1770
      %v1859 = vpop.f32.mrf.mxu0
      %v1860 = vadd.f32 0.0, %v1859
      %v1861 = vpop.f32.mrf.mxu0
      %v1862 = vadd.f32 0.0, %v1861
      %1863 = vdwg.mxu0
      %v1864 = vadd.f32 %v1514, %v1785
      %v1865 = vadd.f32 %v1515, %v1787
      %v1866 = vadd.f32 %v1516, %v1790
      %v1867 = vadd.f32 %v1517, %v1792
      %v1868 = vadd.f32 %v1518, %v1795
      %v1869 = vadd.f32 %v1519, %v1797
      %v1870 = vadd.f32 %v1520, %v1800
      %v1871 = vadd.f32 %v1521, %v1802
      %v1872 = vadd.f32 %v1522, %v1805
      %v1873 = vadd.f32 %v1523, %v1807
      %v1874 = vadd.f32 %v1524, %v1810
      %v1875 = vadd.f32 %v1525, %v1812
      %v1876 = vadd.f32 %v1526, %v1815
      %v1877 = vadd.f32 %v1527, %v1817
      %v1878 = vadd.f32 %v1528, %v1820
      %v1879 = vadd.f32 %v1529, %v1822
      %v1880 = vadd.f32 %v1530, %v1825
      %v1881 = vadd.f32 %v1531, %v1827
      %v1882 = vadd.f32 %v1532, %v1830
      %v1883 = vadd.f32 %v1533, %v1832
      %v1884 = vadd.f32 %v1534, %v1835
      %v1885 = vadd.f32 %v1535, %v1837
      %v1886 = vadd.f32 %v1536, %v1840
      %v1887 = vadd.f32 %v1537, %v1842
      %v1888 = vadd.f32 %v1538, %v1845
      %v1889 = vadd.f32 %v1539, %v1847
      %v1890 = vadd.f32 %v1540, %v1850
      %v1891 = vadd.f32 %v1541, %v1852
      %v1892 = vadd.f32 %v1542, %v1855
      %v1893 = vadd.f32 %v1543, %v1857
      %v1894 = vadd.f32 %v1544, %v1860
      %v1895 = vadd.f32 %v1545, %v1862
      %s1896 = scalar_lea.vmem %s165, 12
      %v1897 = vld [vmem:[%s1896] sm:$0xf]
      %v1898 = vld [vmem:[%s1896 + $0x4] sm:$0xf]
      %v1899 = vld [vmem:[%s1896 + $0x8] sm:$0x1]
      %v1900 = vld [vmem:[%s1896 + $0xc] sm:$0xf]
      %v1901 = vld [vmem:[%s1896 + $0x10] sm:$0xf]
      %v1902 = vld [vmem:[%s1896 + $0x14] sm:$0x1]
      %v1903 = vld [vmem:[%s1896 + $0x18] sm:$0xf]
      %v1904 = vld [vmem:[%s1896 + $0x1c] sm:$0xf]
      %v1905 = vld [vmem:[%s1896 + $0x20] sm:$0x1]
      %v1906 = vld [vmem:[%s1896 + $0x24] sm:$0xf]
      %v1907 = vld [vmem:[%s1896 + $0x28] sm:$0xf]
      %v1908 = vld [vmem:[%s1896 + $0x2c] sm:$0x1]
      %v1909 = vld [vmem:[%s1896 + $0x30] sm:$0xf]
      %v1910 = vld [vmem:[%s1896 + $0x34] sm:$0xf]
      %v1911 = vld [vmem:[%s1896 + $0x38] sm:$0x1]
      %v1912 = vld [vmem:[%s1896 + $0x3c] sm:$0xf]
      %v1913 = vld [vmem:[%s1896 + $0x40] sm:$0xf]
      %v1914 = vld [vmem:[%s1896 + $0x44] sm:$0x1]
      %v1915 = vld [vmem:[%s1896 + $0x48] sm:$0xf]
      %v1916 = vld [vmem:[%s1896 + $0x4c] sm:$0xf]
      %v1917 = vld [vmem:[%s1896 + $0x50] sm:$0x1]
      %v1918 = vld [vmem:[%s1896 + $0x54] sm:$0xf]
      %v1919 = vld [vmem:[%s1896 + $0x58] sm:$0xf]
      %v1920 = vld [vmem:[%s1896 + $0x5c] sm:$0x1]
      %v1921 = vld [vmem:[%s1896 + $0x60] sm:$0xf]
      %v1922 = vld [vmem:[%s1896 + $0x64] sm:$0xf]
      %v1923 = vld [vmem:[%s1896 + $0x68] sm:$0x1]
      %v1924 = vld [vmem:[%s1896 + $0x6c] sm:$0xf]
      %v1925 = vld [vmem:[%s1896 + $0x70] sm:$0xf]
      %v1926 = vld [vmem:[%s1896 + $0x74] sm:$0x1]
      %v1927 = vld [vmem:[%s1896 + $0x78] sm:$0xf]
      %v1928 = vld [vmem:[%s1896 + $0x7c] sm:$0xf]
      %v1929 = vld [vmem:[%s1896 + $0x80] sm:$0x1]
      %v1930 = vld [vmem:[%s1896 + $0x84] sm:$0xf]
      %v1931 = vld [vmem:[%s1896 + $0x88] sm:$0xf]
      %v1932 = vld [vmem:[%s1896 + $0x8c] sm:$0x1]
      %v1933 = vld [vmem:[%s1896 + $0x90] sm:$0xf]
      %v1934 = vld [vmem:[%s1896 + $0x94] sm:$0xf]
      %v1935 = vld [vmem:[%s1896 + $0x98] sm:$0x1]
      %v1936 = vld [vmem:[%s1896 + $0x9c] sm:$0xf]
      %v1937 = vld [vmem:[%s1896 + $0xa0] sm:$0xf]
      %v1938 = vld [vmem:[%s1896 + $0xa4] sm:$0x1]
      %v1939 = vld [vmem:[%s1896 + $0xa8] sm:$0xf]
      %v1940 = vld [vmem:[%s1896 + $0xac] sm:$0xf]
      %v1941 = vld [vmem:[%s1896 + $0xb0] sm:$0x1]
      %v1942 = vld [vmem:[%s1896 + $0xb4] sm:$0xf]
      %v1943 = vld [vmem:[%s1896 + $0xb8] sm:$0xf]
      %v1944 = vld [vmem:[%s1896 + $0xbc] sm:$0x1]
      %v1945 = vunpack.c.l.bf16 %v1897
      %v1946 = vunpack.c.l.bf16 %v1898
      %v1947 = vunpack.c.l.bf16 %v1899
      %v1948 = vunpack.c.l.bf16 %v1900
      %v1949 = vunpack.c.l.bf16 %v1901
      %v1950 = vunpack.c.l.bf16 %v1902
      %v1951 = vunpack.c.l.bf16 %v1903
      %v1952 = vunpack.c.l.bf16 %v1904
      %v1953 = vunpack.c.l.bf16 %v1905
      %v1954 = vunpack.c.l.bf16 %v1906
      %v1955 = vunpack.c.l.bf16 %v1907
      %v1956 = vunpack.c.l.bf16 %v1908
      %v1957 = vunpack.c.l.bf16 %v1909
      %v1958 = vunpack.c.l.bf16 %v1910
      %v1959 = vunpack.c.l.bf16 %v1911
      %v1960 = vunpack.c.l.bf16 %v1912
      %v1961 = vunpack.c.l.bf16 %v1913
      %v1962 = vunpack.c.l.bf16 %v1914
      %v1963 = vunpack.c.l.bf16 %v1915
      %v1964 = vunpack.c.l.bf16 %v1916
      %v1965 = vunpack.c.l.bf16 %v1917
      %v1966 = vunpack.c.l.bf16 %v1918
      %v1967 = vunpack.c.l.bf16 %v1919
      %v1968 = vunpack.c.l.bf16 %v1920
      %v1969 = vunpack.c.l.bf16 %v1921
      %v1970 = vunpack.c.l.bf16 %v1922
      %v1971 = vunpack.c.l.bf16 %v1923
      %v1972 = vunpack.c.l.bf16 %v1924
      %v1973 = vunpack.c.l.bf16 %v1925
      %v1974 = vunpack.c.l.bf16 %v1926
      %v1975 = vunpack.c.l.bf16 %v1927
      %v1976 = vunpack.c.l.bf16 %v1928
      %v1977 = vunpack.c.l.bf16 %v1929
      %v1978 = vunpack.c.l.bf16 %v1930
      %v1979 = vunpack.c.l.bf16 %v1931
      %v1980 = vunpack.c.l.bf16 %v1932
      %v1981 = vunpack.c.l.bf16 %v1933
      %v1982 = vunpack.c.l.bf16 %v1934
      %v1983 = vunpack.c.l.bf16 %v1935
      %v1984 = vunpack.c.l.bf16 %v1936
      %v1985 = vunpack.c.l.bf16 %v1937
      %v1986 = vunpack.c.l.bf16 %v1938
      %v1987 = vunpack.c.l.bf16 %v1939
      %v1988 = vunpack.c.l.bf16 %v1940
      %v1989 = vunpack.c.l.bf16 %v1941
      %v1990 = vunpack.c.l.bf16 %v1942
      %v1991 = vunpack.c.l.bf16 %v1943
      %v1992 = vunpack.c.l.bf16 %v1944
      %v1993 = vpack.c.bf16 %v1946, %v1945
      %v1994 = vpack.c.bf16 %v1949, %v1948
      %v1995 = vpack.c.bf16 %v1952, %v1951
      %v1996 = vpack.c.bf16 %v1955, %v1954
      %v1997 = vpack.c.bf16 %v1958, %v1957
      %v1998 = vpack.c.bf16 %v1961, %v1960
      %v1999 = vpack.c.bf16 %v1964, %v1963
      %v2000 = vpack.c.bf16 %v1967, %v1966
      %v2001 = vpack.c.bf16 %v1970, %v1969
      %v2002 = vpack.c.bf16 %v1973, %v1972
      %v2003 = vpack.c.bf16 %v1976, %v1975
      %v2004 = vpack.c.bf16 %v1979, %v1978
      %v2005 = vpack.c.bf16 %v1982, %v1981
      %v2006 = vpack.c.bf16 %v1985, %v1984
      %v2007 = vpack.c.bf16 %v1988, %v1987
      %v2008 = vpack.c.bf16 %v1991, %v1990
      %s2009 = scalar_lea.vmem %s1, 12
      %v2010 = vld [vmem:[%s2009] sm:$0x3]
      %v2012 = vsel %vm368, %v1993, 0
      %v2015 = vsel %vm368, %v1994, 0
      %v2018 = vsel %vm368, %v1995, 0
      %v2021 = vsel %vm368, %v1996, 0
      %v2024 = vsel %vm368, %v1997, 0
      %v2027 = vsel %vm368, %v1998, 0
      %v2030 = vsel %vm368, %v1999, 0
      %v2033 = vsel %vm368, %v2000, 0
      %v2036 = vsel %vm368, %v2001, 0
      %v2039 = vsel %vm368, %v2002, 0
      %v2042 = vsel %vm368, %v2003, 0
      %v2045 = vsel %vm368, %v2004, 0
      %v2048 = vsel %vm368, %v2005, 0
      %v2051 = vsel %vm368, %v2006, 0
      %v2054 = vsel %vm368, %v2007, 0
      %v2057 = vsel %vm368, %v2008, 0
      %v2060 = vand.u32 %v2010, %v420
      %2062 = vmatpush.bf16.msra.mxu0 0
      %2063 = vmatpush.bf16.msra.mxu0 0
      %2064 = vmatpush.bf16.msra.mxu0 0
      %2065 = vmatpush.bf16.msra.mxu0 0
      %2066 = vmatpush.bf16.msra.mxu0 0
      %2067 = vmatpush.bf16.msra.mxu0 0
      %2068 = vmatpush.bf16.msra.mxu0 0
      %2069 = vmatpush.bf16.msra.mxu0 %v2060
      %2070 = vmatmul.bf16.gmra.mxu0 %v2012
      %v2071 = vpop.f32.mrf.mxu0
      %v2072 = vadd.f32 0.0, %v2071
      %v2073 = vpop.f32.mrf.mxu0
      %v2074 = vadd.f32 0.0, %v2073
      %2075 = vmatmul.bf16.gmra.mxu0 %v2015
      %v2076 = vpop.f32.mrf.mxu0
      %v2077 = vadd.f32 0.0, %v2076
      %v2078 = vpop.f32.mrf.mxu0
      %v2079 = vadd.f32 0.0, %v2078
      %2080 = vmatmul.bf16.gmra.mxu0 %v2018
      %v2081 = vpop.f32.mrf.mxu0
      %v2082 = vadd.f32 0.0, %v2081
      %v2083 = vpop.f32.mrf.mxu0
      %v2084 = vadd.f32 0.0, %v2083
      %2085 = vmatmul.bf16.gmra.mxu0 %v2021
      %v2086 = vpop.f32.mrf.mxu0
      %v2087 = vadd.f32 0.0, %v2086
      %v2088 = vpop.f32.mrf.mxu0
      %v2089 = vadd.f32 0.0, %v2088
      %2090 = vmatmul.bf16.gmra.mxu0 %v2024
      %v2091 = vpop.f32.mrf.mxu0
      %v2092 = vadd.f32 0.0, %v2091
      %v2093 = vpop.f32.mrf.mxu0
      %v2094 = vadd.f32 0.0, %v2093
      %2095 = vmatmul.bf16.gmra.mxu0 %v2027
      %v2096 = vpop.f32.mrf.mxu0
      %v2097 = vadd.f32 0.0, %v2096
      %v2098 = vpop.f32.mrf.mxu0
      %v2099 = vadd.f32 0.0, %v2098
      %2100 = vmatmul.bf16.gmra.mxu0 %v2030
      %v2101 = vpop.f32.mrf.mxu0
      %v2102 = vadd.f32 0.0, %v2101
      %v2103 = vpop.f32.mrf.mxu0
      %v2104 = vadd.f32 0.0, %v2103
      %2105 = vmatmul.bf16.gmra.mxu0 %v2033
      %v2106 = vpop.f32.mrf.mxu0
      %v2107 = vadd.f32 0.0, %v2106
      %v2108 = vpop.f32.mrf.mxu0
      %v2109 = vadd.f32 0.0, %v2108
      %2110 = vmatmul.bf16.gmra.mxu0 %v2036
      %v2111 = vpop.f32.mrf.mxu0
      %v2112 = vadd.f32 0.0, %v2111
      %v2113 = vpop.f32.mrf.mxu0
      %v2114 = vadd.f32 0.0, %v2113
      %2115 = vmatmul.bf16.gmra.mxu0 %v2039
      %v2116 = vpop.f32.mrf.mxu0
      %v2117 = vadd.f32 0.0, %v2116
      %v2118 = vpop.f32.mrf.mxu0
      %v2119 = vadd.f32 0.0, %v2118
      %2120 = vmatmul.bf16.gmra.mxu0 %v2042
      %v2121 = vpop.f32.mrf.mxu0
      %v2122 = vadd.f32 0.0, %v2121
      %v2123 = vpop.f32.mrf.mxu0
      %v2124 = vadd.f32 0.0, %v2123
      %2125 = vmatmul.bf16.gmra.mxu0 %v2045
      %v2126 = vpop.f32.mrf.mxu0
      %v2127 = vadd.f32 0.0, %v2126
      %v2128 = vpop.f32.mrf.mxu0
      %v2129 = vadd.f32 0.0, %v2128
      %2130 = vmatmul.bf16.gmra.mxu0 %v2048
      %v2131 = vpop.f32.mrf.mxu0
      %v2132 = vadd.f32 0.0, %v2131
      %v2133 = vpop.f32.mrf.mxu0
      %v2134 = vadd.f32 0.0, %v2133
      %2135 = vmatmul.bf16.gmra.mxu0 %v2051
      %v2136 = vpop.f32.mrf.mxu0
      %v2137 = vadd.f32 0.0, %v2136
      %v2138 = vpop.f32.mrf.mxu0
      %v2139 = vadd.f32 0.0, %v2138
      %2140 = vmatmul.bf16.gmra.mxu0 %v2054
      %v2141 = vpop.f32.mrf.mxu0
      %v2142 = vadd.f32 0.0, %v2141
      %v2143 = vpop.f32.mrf.mxu0
      %v2144 = vadd.f32 0.0, %v2143
      %2145 = vmatmul.bf16.gmra.mxu0 %v2057
      %v2146 = vpop.f32.mrf.mxu0
      %v2147 = vadd.f32 0.0, %v2146
      %v2148 = vpop.f32.mrf.mxu0
      %v2149 = vadd.f32 0.0, %v2148
      %2150 = vdwg.mxu0
      %v2151 = vadd.f32 %v1864, %v2072
      %v2152 = vadd.f32 %v1865, %v2074
      %v2153 = vadd.f32 %v1866, %v2077
      %v2154 = vadd.f32 %v1867, %v2079
      %v2155 = vadd.f32 %v1868, %v2082
      %v2156 = vadd.f32 %v1869, %v2084
      %v2157 = vadd.f32 %v1870, %v2087
      %v2158 = vadd.f32 %v1871, %v2089
      %v2159 = vadd.f32 %v1872, %v2092
      %v2160 = vadd.f32 %v1873, %v2094
      %v2161 = vadd.f32 %v1874, %v2097
      %v2162 = vadd.f32 %v1875, %v2099
      %v2163 = vadd.f32 %v1876, %v2102
      %v2164 = vadd.f32 %v1877, %v2104
      %v2165 = vadd.f32 %v1878, %v2107
      %v2166 = vadd.f32 %v1879, %v2109
      %v2167 = vadd.f32 %v1880, %v2112
      %v2168 = vadd.f32 %v1881, %v2114
      %v2169 = vadd.f32 %v1882, %v2117
      %v2170 = vadd.f32 %v1883, %v2119
      %v2171 = vadd.f32 %v1884, %v2122
      %v2172 = vadd.f32 %v1885, %v2124
      %v2173 = vadd.f32 %v1886, %v2127
      %v2174 = vadd.f32 %v1887, %v2129
      %v2175 = vadd.f32 %v1888, %v2132
      %v2176 = vadd.f32 %v1889, %v2134
      %v2177 = vadd.f32 %v1890, %v2137
      %v2178 = vadd.f32 %v1891, %v2139
      %v2179 = vadd.f32 %v1892, %v2142
      %v2180 = vadd.f32 %v1893, %v2144
      %v2181 = vadd.f32 %v1894, %v2147
      %v2182 = vadd.f32 %v1895, %v2149
      %s2183 = scalar_lea.vmem %s165, 216
      %v2184 = vld [vmem:[%s2183] sm:$0xf]
      %v2185 = vld [vmem:[%s2183 + $0x4] sm:$0xf]
      %v2186 = vld [vmem:[%s2183 + $0xc] sm:$0xf]
      %v2187 = vld [vmem:[%s2183 + $0x10] sm:$0xf]
      %v2188 = vld [vmem:[%s2183 + $0x18] sm:$0xf]
      %v2189 = vld [vmem:[%s2183 + $0x1c] sm:$0xf]
      %v2190 = vld [vmem:[%s2183 + $0x24] sm:$0xf]
      %v2191 = vld [vmem:[%s2183 + $0x28] sm:$0xf]
      %v2192 = vld [vmem:[%s2183 + $0x30] sm:$0xf]
      %v2193 = vld [vmem:[%s2183 + $0x34] sm:$0xf]
      %v2194 = vld [vmem:[%s2183 + $0x3c] sm:$0xf]
      %v2195 = vld [vmem:[%s2183 + $0x40] sm:$0xf]
      %v2196 = vld [vmem:[%s2183 + $0x48] sm:$0xf]
      %v2197 = vld [vmem:[%s2183 + $0x4c] sm:$0xf]
      %v2198 = vld [vmem:[%s2183 + $0x54] sm:$0xf]
      %v2199 = vld [vmem:[%s2183 + $0x58] sm:$0xf]
      %v2200 = vld [vmem:[%s2183 + $0x60] sm:$0xf]
      %v2201 = vld [vmem:[%s2183 + $0x64] sm:$0xf]
      %v2202 = vld [vmem:[%s2183 + $0x6c] sm:$0xf]
      %v2203 = vld [vmem:[%s2183 + $0x70] sm:$0xf]
      %v2204 = vld [vmem:[%s2183 + $0x78] sm:$0xf]
      %v2205 = vld [vmem:[%s2183 + $0x7c] sm:$0xf]
      %v2206 = vld [vmem:[%s2183 + $0x84] sm:$0xf]
      %v2207 = vld [vmem:[%s2183 + $0x88] sm:$0xf]
      %v2208 = vld [vmem:[%s2183 + $0x90] sm:$0xf]
      %v2209 = vld [vmem:[%s2183 + $0x94] sm:$0xf]
      %v2210 = vld [vmem:[%s2183 + $0x9c] sm:$0xf]
      %v2211 = vld [vmem:[%s2183 + $0xa0] sm:$0xf]
      %v2212 = vld [vmem:[%s2183 + $0xa8] sm:$0xf]
      %v2213 = vld [vmem:[%s2183 + $0xac] sm:$0xf]
      %v2214 = vld [vmem:[%s2183 + $0xb4] sm:$0xf]
      %v2215 = vld [vmem:[%s2183 + $0xb8] sm:$0xf]
      %v2216 = vunpack.c.l.bf16 %v2184
      %v2217 = vunpack.c.l.bf16 %v2185
      %v2218 = vunpack.c.l.bf16 %v2186
      %v2219 = vunpack.c.l.bf16 %v2187
      %v2220 = vunpack.c.l.bf16 %v2188
      %v2221 = vunpack.c.l.bf16 %v2189
      %v2222 = vunpack.c.l.bf16 %v2190
      %v2223 = vunpack.c.l.bf16 %v2191
      %v2224 = vunpack.c.l.bf16 %v2192
      %v2225 = vunpack.c.l.bf16 %v2193
      %v2226 = vunpack.c.l.bf16 %v2194
      %v2227 = vunpack.c.l.bf16 %v2195
      %v2228 = vunpack.c.l.bf16 %v2196
      %v2229 = vunpack.c.l.bf16 %v2197
      %v2230 = vunpack.c.l.bf16 %v2198
      %v2231 = vunpack.c.l.bf16 %v2199
      %v2232 = vunpack.c.l.bf16 %v2200
      %v2233 = vunpack.c.l.bf16 %v2201
      %v2234 = vunpack.c.l.bf16 %v2202
      %v2235 = vunpack.c.l.bf16 %v2203
      %v2236 = vunpack.c.l.bf16 %v2204
      %v2237 = vunpack.c.l.bf16 %v2205
      %v2238 = vunpack.c.l.bf16 %v2206
      %v2239 = vunpack.c.l.bf16 %v2207
      %v2240 = vunpack.c.l.bf16 %v2208
      %v2241 = vunpack.c.l.bf16 %v2209
      %v2242 = vunpack.c.l.bf16 %v2210
      %v2243 = vunpack.c.l.bf16 %v2211
      %v2244 = vunpack.c.l.bf16 %v2212
      %v2245 = vunpack.c.l.bf16 %v2213
      %v2246 = vunpack.c.l.bf16 %v2214
      %v2247 = vunpack.c.l.bf16 %v2215
      %v2248 = vpack.c.bf16 %v2217, %v2216
      %v2249 = vpack.c.bf16 %v2219, %v2218
      %v2250 = vpack.c.bf16 %v2221, %v2220
      %v2251 = vpack.c.bf16 %v2223, %v2222
      %v2252 = vpack.c.bf16 %v2225, %v2224
      %v2253 = vpack.c.bf16 %v2227, %v2226
      %v2254 = vpack.c.bf16 %v2229, %v2228
      %v2255 = vpack.c.bf16 %v2231, %v2230
      %v2256 = vpack.c.bf16 %v2233, %v2232
      %v2257 = vpack.c.bf16 %v2235, %v2234
      %v2258 = vpack.c.bf16 %v2237, %v2236
      %v2259 = vpack.c.bf16 %v2239, %v2238
      %v2260 = vpack.c.bf16 %v2241, %v2240
      %v2261 = vpack.c.bf16 %v2243, %v2242
      %v2262 = vpack.c.bf16 %v2245, %v2244
      %v2263 = vpack.c.bf16 %v2247, %v2246
      %s2264 = scalar_lea.vmem %s1, 14
      %v2265 = vld [vmem:[%s2264] sm:$0x3]
      %v2267 = vsel %vm368, %v2248, 0
      %v2270 = vsel %vm368, %v2249, 0
      %v2273 = vsel %vm368, %v2250, 0
      %v2276 = vsel %vm368, %v2251, 0
      %v2279 = vsel %vm368, %v2252, 0
      %v2282 = vsel %vm368, %v2253, 0
      %v2285 = vsel %vm368, %v2254, 0
      %v2288 = vsel %vm368, %v2255, 0
      %v2291 = vsel %vm368, %v2256, 0
      %v2294 = vsel %vm368, %v2257, 0
      %v2297 = vsel %vm368, %v2258, 0
      %v2300 = vsel %vm368, %v2259, 0
      %v2303 = vsel %vm368, %v2260, 0
      %v2306 = vsel %vm368, %v2261, 0
      %v2309 = vsel %vm368, %v2262, 0
      %v2312 = vsel %vm368, %v2263, 0
      %v2315 = vand.u32 %v2265, %v420
      %2317 = vmatpush.bf16.msra.mxu0 0
      %2318 = vmatpush.bf16.msra.mxu0 0
      %2319 = vmatpush.bf16.msra.mxu0 0
      %2320 = vmatpush.bf16.msra.mxu0 0
      %2321 = vmatpush.bf16.msra.mxu0 0
      %2322 = vmatpush.bf16.msra.mxu0 0
      %2323 = vmatpush.bf16.msra.mxu0 0
      %2324 = vmatpush.bf16.msra.mxu0 %v2315
      %2325 = vmatmul.bf16.gmra.mxu0 %v2267
      %v2326 = vpop.f32.mrf.mxu0
      %v2327 = vadd.f32 0.0, %v2326
      %v2328 = vpop.f32.mrf.mxu0
      %v2329 = vadd.f32 0.0, %v2328
      %2330 = vmatmul.bf16.gmra.mxu0 %v2270
      %v2331 = vpop.f32.mrf.mxu0
      %v2332 = vadd.f32 0.0, %v2331
      %v2333 = vpop.f32.mrf.mxu0
      %v2334 = vadd.f32 0.0, %v2333
      %2335 = vmatmul.bf16.gmra.mxu0 %v2273
      %v2336 = vpop.f32.mrf.mxu0
      %v2337 = vadd.f32 0.0, %v2336
      %v2338 = vpop.f32.mrf.mxu0
      %v2339 = vadd.f32 0.0, %v2338
      %2340 = vmatmul.bf16.gmra.mxu0 %v2276
      %v2341 = vpop.f32.mrf.mxu0
      %v2342 = vadd.f32 0.0, %v2341
      %v2343 = vpop.f32.mrf.mxu0
      %v2344 = vadd.f32 0.0, %v2343
      %2345 = vmatmul.bf16.gmra.mxu0 %v2279
      %v2346 = vpop.f32.mrf.mxu0
      %v2347 = vadd.f32 0.0, %v2346
      %v2348 = vpop.f32.mrf.mxu0
      %v2349 = vadd.f32 0.0, %v2348
      %2350 = vmatmul.bf16.gmra.mxu0 %v2282
      %v2351 = vpop.f32.mrf.mxu0
      %v2352 = vadd.f32 0.0, %v2351
      %v2353 = vpop.f32.mrf.mxu0
      %v2354 = vadd.f32 0.0, %v2353
      %2355 = vmatmul.bf16.gmra.mxu0 %v2285
      %v2356 = vpop.f32.mrf.mxu0
      %v2357 = vadd.f32 0.0, %v2356
      %v2358 = vpop.f32.mrf.mxu0
      %v2359 = vadd.f32 0.0, %v2358
      %2360 = vmatmul.bf16.gmra.mxu0 %v2288
      %v2361 = vpop.f32.mrf.mxu0
      %v2362 = vadd.f32 0.0, %v2361
      %v2363 = vpop.f32.mrf.mxu0
      %v2364 = vadd.f32 0.0, %v2363
      %2365 = vmatmul.bf16.gmra.mxu0 %v2291
      %v2366 = vpop.f32.mrf.mxu0
      %v2367 = vadd.f32 0.0, %v2366
      %v2368 = vpop.f32.mrf.mxu0
      %v2369 = vadd.f32 0.0, %v2368
      %2370 = vmatmul.bf16.gmra.mxu0 %v2294
      %v2371 = vpop.f32.mrf.mxu0
      %v2372 = vadd.f32 0.0, %v2371
      %v2373 = vpop.f32.mrf.mxu0
      %v2374 = vadd.f32 0.0, %v2373
      %2375 = vmatmul.bf16.gmra.mxu0 %v2297
      %v2376 = vpop.f32.mrf.mxu0
      %v2377 = vadd.f32 0.0, %v2376
      %v2378 = vpop.f32.mrf.mxu0
      %v2379 = vadd.f32 0.0, %v2378
      %2380 = vmatmul.bf16.gmra.mxu0 %v2300
      %v2381 = vpop.f32.mrf.mxu0
      %v2382 = vadd.f32 0.0, %v2381
      %v2383 = vpop.f32.mrf.mxu0
      %v2384 = vadd.f32 0.0, %v2383
      %2385 = vmatmul.bf16.gmra.mxu0 %v2303
      %v2386 = vpop.f32.mrf.mxu0
      %v2387 = vadd.f32 0.0, %v2386
      %v2388 = vpop.f32.mrf.mxu0
      %v2389 = vadd.f32 0.0, %v2388
      %2390 = vmatmul.bf16.gmra.mxu0 %v2306
      %v2391 = vpop.f32.mrf.mxu0
      %v2392 = vadd.f32 0.0, %v2391
      %v2393 = vpop.f32.mrf.mxu0
      %v2394 = vadd.f32 0.0, %v2393
      %2395 = vmatmul.bf16.gmra.mxu0 %v2309
      %v2396 = vpop.f32.mrf.mxu0
      %v2397 = vadd.f32 0.0, %v2396
      %v2398 = vpop.f32.mrf.mxu0
      %v2399 = vadd.f32 0.0, %v2398
      %2400 = vmatmul.bf16.gmra.mxu0 %v2312
      %v2401 = vpop.f32.mrf.mxu0
      %v2402 = vadd.f32 0.0, %v2401
      %v2403 = vpop.f32.mrf.mxu0
      %v2404 = vadd.f32 0.0, %v2403
      %2405 = vdwg.mxu0
      %v2406 = vadd.f32 %v2151, %v2327
      %v2407 = vadd.f32 %v2152, %v2329
      %v2408 = vadd.f32 %v2153, %v2332
      %v2409 = vadd.f32 %v2154, %v2334
      %v2410 = vadd.f32 %v2155, %v2337
      %v2411 = vadd.f32 %v2156, %v2339
      %v2412 = vadd.f32 %v2157, %v2342
      %v2413 = vadd.f32 %v2158, %v2344
      %v2414 = vadd.f32 %v2159, %v2347
      %v2415 = vadd.f32 %v2160, %v2349
      %v2416 = vadd.f32 %v2161, %v2352
      %v2417 = vadd.f32 %v2162, %v2354
      %v2418 = vadd.f32 %v2163, %v2357
      %v2419 = vadd.f32 %v2164, %v2359
      %v2420 = vadd.f32 %v2165, %v2362
      %v2421 = vadd.f32 %v2166, %v2364
      %v2422 = vadd.f32 %v2167, %v2367
      %v2423 = vadd.f32 %v2168, %v2369
      %v2424 = vadd.f32 %v2169, %v2372
      %v2425 = vadd.f32 %v2170, %v2374
      %v2426 = vadd.f32 %v2171, %v2377
      %v2427 = vadd.f32 %v2172, %v2379
      %v2428 = vadd.f32 %v2173, %v2382
      %v2429 = vadd.f32 %v2174, %v2384
      %v2430 = vadd.f32 %v2175, %v2387
      %v2431 = vadd.f32 %v2176, %v2389
      %v2432 = vadd.f32 %v2177, %v2392
      %v2433 = vadd.f32 %v2178, %v2394
      %v2434 = vadd.f32 %v2179, %v2397
      %v2435 = vadd.f32 %v2180, %v2399
      %v2436 = vadd.f32 %v2181, %v2402
      %v2437 = vadd.f32 %v2182, %v2404
      %v2486 = vrot.slane %v1945, 1
      %v2487 = vrot.slane %v1946, 1
      %v2488 = vsel %vm701, %v2486, %v2487
      %v2489 = vrot.slane %v1947, 1
      %v2490 = vsel %vm701, %v2487, %v2489
      %v2491 = vrot.slane %v1948, 1
      %v2492 = vrot.slane %v1949, 1
      %v2493 = vsel %vm701, %v2491, %v2492
      %v2494 = vrot.slane %v1950, 1
      %v2495 = vsel %vm701, %v2492, %v2494
      %v2496 = vrot.slane %v1951, 1
      %v2497 = vrot.slane %v1952, 1
      %v2498 = vsel %vm701, %v2496, %v2497
      %v2499 = vrot.slane %v1953, 1
      %v2500 = vsel %vm701, %v2497, %v2499
      %v2501 = vrot.slane %v1954, 1
      %v2502 = vrot.slane %v1955, 1
      %v2503 = vsel %vm701, %v2501, %v2502
      %v2504 = vrot.slane %v1956, 1
      %v2505 = vsel %vm701, %v2502, %v2504
      %v2506 = vrot.slane %v1957, 1
      %v2507 = vrot.slane %v1958, 1
      %v2508 = vsel %vm701, %v2506, %v2507
      %v2509 = vrot.slane %v1959, 1
      %v2510 = vsel %vm701, %v2507, %v2509
      %v2511 = vrot.slane %v1960, 1
      %v2512 = vrot.slane %v1961, 1
      %v2513 = vsel %vm701, %v2511, %v2512
      %v2514 = vrot.slane %v1962, 1
      %v2515 = vsel %vm701, %v2512, %v2514
      %v2516 = vrot.slane %v1963, 1
      %v2517 = vrot.slane %v1964, 1
      %v2518 = vsel %vm701, %v2516, %v2517
      %v2519 = vrot.slane %v1965, 1
      %v2520 = vsel %vm701, %v2517, %v2519
      %v2521 = vrot.slane %v1966, 1
      %v2522 = vrot.slane %v1967, 1
      %v2523 = vsel %vm701, %v2521, %v2522
      %v2524 = vrot.slane %v1968, 1
      %v2525 = vsel %vm701, %v2522, %v2524
      %v2526 = vrot.slane %v1969, 1
      %v2527 = vrot.slane %v1970, 1
      %v2528 = vsel %vm701, %v2526, %v2527
      %v2529 = vrot.slane %v1971, 1
      %v2530 = vsel %vm701, %v2527, %v2529
      %v2531 = vrot.slane %v1972, 1
      %v2532 = vrot.slane %v1973, 1
      %v2533 = vsel %vm701, %v2531, %v2532
      %v2534 = vrot.slane %v1974, 1
      %v2535 = vsel %vm701, %v2532, %v2534
      %v2536 = vrot.slane %v1975, 1
      %v2537 = vrot.slane %v1976, 1
      %v2538 = vsel %vm701, %v2536, %v2537
      %v2539 = vrot.slane %v1977, 1
      %v2540 = vsel %vm701, %v2537, %v2539
      %v2541 = vrot.slane %v1978, 1
      %v2542 = vrot.slane %v1979, 1
      %v2543 = vsel %vm701, %v2541, %v2542
      %v2544 = vrot.slane %v1980, 1
      %v2545 = vsel %vm701, %v2542, %v2544
      %v2546 = vrot.slane %v1981, 1
      %v2547 = vrot.slane %v1982, 1
      %v2548 = vsel %vm701, %v2546, %v2547
      %v2549 = vrot.slane %v1983, 1
      %v2550 = vsel %vm701, %v2547, %v2549
      %v2551 = vrot.slane %v1984, 1
      %v2552 = vrot.slane %v1985, 1
      %v2553 = vsel %vm701, %v2551, %v2552
      %v2554 = vrot.slane %v1986, 1
      %v2555 = vsel %vm701, %v2552, %v2554
      %v2556 = vrot.slane %v1987, 1
      %v2557 = vrot.slane %v1988, 1
      %v2558 = vsel %vm701, %v2556, %v2557
      %v2559 = vrot.slane %v1989, 1
      %v2560 = vsel %vm701, %v2557, %v2559
      %v2561 = vrot.slane %v1990, 1
      %v2562 = vrot.slane %v1991, 1
      %v2563 = vsel %vm701, %v2561, %v2562
      %v2564 = vrot.slane %v1992, 1
      %v2565 = vsel %vm701, %v2562, %v2564
      %v2598 = vpack.c.bf16 %v2490, %v2488
      %v2599 = vpack.c.bf16 %v2495, %v2493
      %v2600 = vpack.c.bf16 %v2500, %v2498
      %v2601 = vpack.c.bf16 %v2505, %v2503
      %v2602 = vpack.c.bf16 %v2510, %v2508
      %v2603 = vpack.c.bf16 %v2515, %v2513
      %v2604 = vpack.c.bf16 %v2520, %v2518
      %v2605 = vpack.c.bf16 %v2525, %v2523
      %v2606 = vpack.c.bf16 %v2530, %v2528
      %v2607 = vpack.c.bf16 %v2535, %v2533
      %v2608 = vpack.c.bf16 %v2540, %v2538
      %v2609 = vpack.c.bf16 %v2545, %v2543
      %v2610 = vpack.c.bf16 %v2550, %v2548
      %v2611 = vpack.c.bf16 %v2555, %v2553
      %v2612 = vpack.c.bf16 %v2560, %v2558
      %v2613 = vpack.c.bf16 %v2565, %v2563
      %s2614 = scalar_lea.vmem %s1, 16
      %v2615 = vld [vmem:[%s2614] sm:$0x3]
      %v2617 = vsel %vm368, %v2598, 0
      %v2620 = vsel %vm368, %v2599, 0
      %v2623 = vsel %vm368, %v2600, 0
      %v2626 = vsel %vm368, %v2601, 0
      %v2629 = vsel %vm368, %v2602, 0
      %v2632 = vsel %vm368, %v2603, 0
      %v2635 = vsel %vm368, %v2604, 0
      %v2638 = vsel %vm368, %v2605, 0
      %v2641 = vsel %vm368, %v2606, 0
      %v2644 = vsel %vm368, %v2607, 0
      %v2647 = vsel %vm368, %v2608, 0
      %v2650 = vsel %vm368, %v2609, 0
      %v2653 = vsel %vm368, %v2610, 0
      %v2656 = vsel %vm368, %v2611, 0
      %v2659 = vsel %vm368, %v2612, 0
      %v2662 = vsel %vm368, %v2613, 0
      %v2665 = vand.u32 %v2615, %v420
      %2667 = vmatpush.bf16.msra.mxu0 0
      %2668 = vmatpush.bf16.msra.mxu0 0
      %2669 = vmatpush.bf16.msra.mxu0 0
      %2670 = vmatpush.bf16.msra.mxu0 0
      %2671 = vmatpush.bf16.msra.mxu0 0
      %2672 = vmatpush.bf16.msra.mxu0 0
      %2673 = vmatpush.bf16.msra.mxu0 0
      %2674 = vmatpush.bf16.msra.mxu0 %v2665
      %2675 = vmatmul.bf16.gmra.mxu0 %v2617
      %v2676 = vpop.f32.mrf.mxu0
      %v2677 = vadd.f32 0.0, %v2676
      %v2678 = vpop.f32.mrf.mxu0
      %v2679 = vadd.f32 0.0, %v2678
      %2680 = vmatmul.bf16.gmra.mxu0 %v2620
      %v2681 = vpop.f32.mrf.mxu0
      %v2682 = vadd.f32 0.0, %v2681
      %v2683 = vpop.f32.mrf.mxu0
      %v2684 = vadd.f32 0.0, %v2683
      %2685 = vmatmul.bf16.gmra.mxu0 %v2623
      %v2686 = vpop.f32.mrf.mxu0
      %v2687 = vadd.f32 0.0, %v2686
      %v2688 = vpop.f32.mrf.mxu0
      %v2689 = vadd.f32 0.0, %v2688
      %2690 = vmatmul.bf16.gmra.mxu0 %v2626
      %v2691 = vpop.f32.mrf.mxu0
      %v2692 = vadd.f32 0.0, %v2691
      %v2693 = vpop.f32.mrf.mxu0
      %v2694 = vadd.f32 0.0, %v2693
      %2695 = vmatmul.bf16.gmra.mxu0 %v2629
      %v2696 = vpop.f32.mrf.mxu0
      %v2697 = vadd.f32 0.0, %v2696
      %v2698 = vpop.f32.mrf.mxu0
      %v2699 = vadd.f32 0.0, %v2698
      %2700 = vmatmul.bf16.gmra.mxu0 %v2632
      %v2701 = vpop.f32.mrf.mxu0
      %v2702 = vadd.f32 0.0, %v2701
      %v2703 = vpop.f32.mrf.mxu0
      %v2704 = vadd.f32 0.0, %v2703
      %2705 = vmatmul.bf16.gmra.mxu0 %v2635
      %v2706 = vpop.f32.mrf.mxu0
      %v2707 = vadd.f32 0.0, %v2706
      %v2708 = vpop.f32.mrf.mxu0
      %v2709 = vadd.f32 0.0, %v2708
      %2710 = vmatmul.bf16.gmra.mxu0 %v2638
      %v2711 = vpop.f32.mrf.mxu0
      %v2712 = vadd.f32 0.0, %v2711
      %v2713 = vpop.f32.mrf.mxu0
      %v2714 = vadd.f32 0.0, %v2713
      %2715 = vmatmul.bf16.gmra.mxu0 %v2641
      %v2716 = vpop.f32.mrf.mxu0
      %v2717 = vadd.f32 0.0, %v2716
      %v2718 = vpop.f32.mrf.mxu0
      %v2719 = vadd.f32 0.0, %v2718
      %2720 = vmatmul.bf16.gmra.mxu0 %v2644
      %v2721 = vpop.f32.mrf.mxu0
      %v2722 = vadd.f32 0.0, %v2721
      %v2723 = vpop.f32.mrf.mxu0
      %v2724 = vadd.f32 0.0, %v2723
      %2725 = vmatmul.bf16.gmra.mxu0 %v2647
      %v2726 = vpop.f32.mrf.mxu0
      %v2727 = vadd.f32 0.0, %v2726
      %v2728 = vpop.f32.mrf.mxu0
      %v2729 = vadd.f32 0.0, %v2728
      %2730 = vmatmul.bf16.gmra.mxu0 %v2650
      %v2731 = vpop.f32.mrf.mxu0
      %v2732 = vadd.f32 0.0, %v2731
      %v2733 = vpop.f32.mrf.mxu0
      %v2734 = vadd.f32 0.0, %v2733
      %2735 = vmatmul.bf16.gmra.mxu0 %v2653
      %v2736 = vpop.f32.mrf.mxu0
      %v2737 = vadd.f32 0.0, %v2736
      %v2738 = vpop.f32.mrf.mxu0
      %v2739 = vadd.f32 0.0, %v2738
      %2740 = vmatmul.bf16.gmra.mxu0 %v2656
      %v2741 = vpop.f32.mrf.mxu0
      %v2742 = vadd.f32 0.0, %v2741
      %v2743 = vpop.f32.mrf.mxu0
      %v2744 = vadd.f32 0.0, %v2743
      %2745 = vmatmul.bf16.gmra.mxu0 %v2659
      %v2746 = vpop.f32.mrf.mxu0
      %v2747 = vadd.f32 0.0, %v2746
      %v2748 = vpop.f32.mrf.mxu0
      %v2749 = vadd.f32 0.0, %v2748
      %2750 = vmatmul.bf16.gmra.mxu0 %v2662
      %v2751 = vpop.f32.mrf.mxu0
      %v2752 = vadd.f32 0.0, %v2751
      %v2753 = vpop.f32.mrf.mxu0
      %v2754 = vadd.f32 0.0, %v2753
      %2755 = vdwg.mxu0
      %v2756 = vadd.f32 %v2406, %v2677
      %v2757 = vadd.f32 %v2407, %v2679
      %v2758 = vadd.f32 %v2408, %v2682
      %v2759 = vadd.f32 %v2409, %v2684
      %v2760 = vadd.f32 %v2410, %v2687
      %v2761 = vadd.f32 %v2411, %v2689
      %v2762 = vadd.f32 %v2412, %v2692
      %v2763 = vadd.f32 %v2413, %v2694
      %v2764 = vadd.f32 %v2414, %v2697
      %v2765 = vadd.f32 %v2415, %v2699
      %v2766 = vadd.f32 %v2416, %v2702
      %v2767 = vadd.f32 %v2417, %v2704
      %v2768 = vadd.f32 %v2418, %v2707
      %v2769 = vadd.f32 %v2419, %v2709
      %v2770 = vadd.f32 %v2420, %v2712
      %v2771 = vadd.f32 %v2421, %v2714
      %v2772 = vadd.f32 %v2422, %v2717
      %v2773 = vadd.f32 %v2423, %v2719
      %v2774 = vadd.f32 %v2424, %v2722
      %v2775 = vadd.f32 %v2425, %v2724
      %v2776 = vadd.f32 %v2426, %v2727
      %v2777 = vadd.f32 %v2427, %v2729
      %v2778 = vadd.f32 %v2428, %v2732
      %v2779 = vadd.f32 %v2429, %v2734
      %v2780 = vadd.f32 %v2430, %v2737
      %v2781 = vadd.f32 %v2431, %v2739
      %v2782 = vadd.f32 %v2432, %v2742
      %v2783 = vadd.f32 %v2433, %v2744
      %v2784 = vadd.f32 %v2434, %v2747
      %v2785 = vadd.f32 %v2435, %v2749
      %v2786 = vadd.f32 %v2436, %v2752
      %v2787 = vadd.f32 %v2437, %v2754
      %v2788 = vld [vmem:[%s2] sm:$0x1]
      %v2790 = vperm.slane %v2788, 0
      %v2792 = vadd.f32 %v2756, %v2790
      %v2793 = vadd.f32 %v2757, %v2790
      %v2794 = vadd.f32 %v2758, %v2790
      %v2795 = vadd.f32 %v2759, %v2790
      %v2796 = vadd.f32 %v2760, %v2790
      %v2797 = vadd.f32 %v2761, %v2790
      %v2798 = vadd.f32 %v2762, %v2790
      %v2799 = vadd.f32 %v2763, %v2790
      %v2800 = vadd.f32 %v2764, %v2790
      %v2801 = vadd.f32 %v2765, %v2790
      %v2802 = vadd.f32 %v2766, %v2790
      %v2803 = vadd.f32 %v2767, %v2790
      %v2804 = vadd.f32 %v2768, %v2790
      %v2805 = vadd.f32 %v2769, %v2790
      %v2806 = vadd.f32 %v2770, %v2790
      %v2807 = vadd.f32 %v2771, %v2790
      %v2808 = vadd.f32 %v2772, %v2790
      %v2809 = vadd.f32 %v2773, %v2790
      %v2810 = vadd.f32 %v2774, %v2790
      %v2811 = vadd.f32 %v2775, %v2790
      %v2812 = vadd.f32 %v2776, %v2790
      %v2813 = vadd.f32 %v2777, %v2790
      %v2814 = vadd.f32 %v2778, %v2790
      %v2815 = vadd.f32 %v2779, %v2790
      %v2816 = vadd.f32 %v2780, %v2790
      %v2817 = vadd.f32 %v2781, %v2790
      %v2818 = vadd.f32 %v2782, %v2790
      %v2819 = vadd.f32 %v2783, %v2790
      %v2820 = vadd.f32 %v2784, %v2790
      %v2821 = vadd.f32 %v2785, %v2790
      %v2822 = vadd.f32 %v2786, %v2790
      %v2823 = vadd.f32 %v2787, %v2790
      %v2824 = vmax.f32 %v2792, 0.0
      %v2825 = vmax.f32 %v2793, 0.0
      %v2826 = vmax.f32 %v2794, 0.0
      %v2827 = vmax.f32 %v2795, 0.0
      %v2828 = vmax.f32 %v2796, 0.0
      %v2829 = vmax.f32 %v2797, 0.0
      %v2830 = vmax.f32 %v2798, 0.0
      %v2831 = vmax.f32 %v2799, 0.0
      %v2832 = vmax.f32 %v2800, 0.0
      %v2833 = vmax.f32 %v2801, 0.0
      %v2834 = vmax.f32 %v2802, 0.0
      %v2835 = vmax.f32 %v2803, 0.0
      %v2836 = vmax.f32 %v2804, 0.0
      %v2837 = vmax.f32 %v2805, 0.0
      %v2838 = vmax.f32 %v2806, 0.0
      %v2839 = vmax.f32 %v2807, 0.0
      %v2840 = vmax.f32 %v2808, 0.0
      %v2841 = vmax.f32 %v2809, 0.0
      %v2842 = vmax.f32 %v2810, 0.0
      %v2843 = vmax.f32 %v2811, 0.0
      %v2844 = vmax.f32 %v2812, 0.0
      %v2845 = vmax.f32 %v2813, 0.0
      %v2846 = vmax.f32 %v2814, 0.0
      %v2847 = vmax.f32 %v2815, 0.0
      %v2848 = vmax.f32 %v2816, 0.0
      %v2849 = vmax.f32 %v2817, 0.0
      %v2850 = vmax.f32 %v2818, 0.0
      %v2851 = vmax.f32 %v2819, 0.0
      %v2852 = vmax.f32 %v2820, 0.0
      %v2853 = vmax.f32 %v2821, 0.0
      %v2854 = vmax.f32 %v2822, 0.0
      %v2855 = vmax.f32 %v2823, 0.0
      %v2856 = vpack.c.bf16 %v2824, %v2824
      %v2857 = vpack.c.bf16 %v2825, %v2825
      %v2858 = vpack.c.bf16 %v2826, %v2826
      %v2859 = vpack.c.bf16 %v2827, %v2827
      %v2860 = vpack.c.bf16 %v2828, %v2828
      %v2861 = vpack.c.bf16 %v2829, %v2829
      %v2862 = vpack.c.bf16 %v2830, %v2830
      %v2863 = vpack.c.bf16 %v2831, %v2831
      %v2864 = vpack.c.bf16 %v2832, %v2832
      %v2865 = vpack.c.bf16 %v2833, %v2833
      %v2866 = vpack.c.bf16 %v2834, %v2834
      %v2867 = vpack.c.bf16 %v2835, %v2835
      %v2868 = vpack.c.bf16 %v2836, %v2836
      %v2869 = vpack.c.bf16 %v2837, %v2837
      %v2870 = vpack.c.bf16 %v2838, %v2838
      %v2871 = vpack.c.bf16 %v2839, %v2839
      %v2872 = vpack.c.bf16 %v2840, %v2840
      %v2873 = vpack.c.bf16 %v2841, %v2841
      %v2874 = vpack.c.bf16 %v2842, %v2842
      %v2875 = vpack.c.bf16 %v2843, %v2843
      %v2876 = vpack.c.bf16 %v2844, %v2844
      %v2877 = vpack.c.bf16 %v2845, %v2845
      %v2878 = vpack.c.bf16 %v2846, %v2846
      %v2879 = vpack.c.bf16 %v2847, %v2847
      %v2880 = vpack.c.bf16 %v2848, %v2848
      %v2881 = vpack.c.bf16 %v2849, %v2849
      %v2882 = vpack.c.bf16 %v2850, %v2850
      %v2883 = vpack.c.bf16 %v2851, %v2851
      %v2884 = vpack.c.bf16 %v2852, %v2852
      %v2885 = vpack.c.bf16 %v2853, %v2853
      %v2886 = vpack.c.bf16 %v2854, %v2854
      %v2887 = vpack.c.bf16 %v2855, %v2855
      %vm2888 = vcmask 27648
      %2889 = vst.msk [vmem:[%s170] sm:$0xf] %vm2888, %v2856
      %2890 = vst.msk [vmem:[%s170 + $0x4] sm:$0xf] %vm2888, %v2857
      %2891 = vst.msk [vmem:[%s170 + $0x8] sm:$0xf] %vm2888, %v2858
      %2892 = vst.msk [vmem:[%s170 + $0xc] sm:$0xf] %vm2888, %v2859
      %2893 = vst.msk [vmem:[%s170 + $0x10] sm:$0xf] %vm2888, %v2860
      %2894 = vst.msk [vmem:[%s170 + $0x14] sm:$0xf] %vm2888, %v2861
      %2895 = vst.msk [vmem:[%s170 + $0x18] sm:$0xf] %vm2888, %v2862
      %2896 = vst.msk [vmem:[%s170 + $0x1c] sm:$0xf] %vm2888, %v2863
      %2897 = vst.msk [vmem:[%s170 + $0x20] sm:$0xf] %vm2888, %v2864
      %2898 = vst.msk [vmem:[%s170 + $0x24] sm:$0xf] %vm2888, %v2865
      %2899 = vst.msk [vmem:[%s170 + $0x28] sm:$0xf] %vm2888, %v2866
      %2900 = vst.msk [vmem:[%s170 + $0x2c] sm:$0xf] %vm2888, %v2867
      %2901 = vst.msk [vmem:[%s170 + $0x30] sm:$0xf] %vm2888, %v2868
      %2902 = vst.msk [vmem:[%s170 + $0x34] sm:$0xf] %vm2888, %v2869
      %2903 = vst.msk [vmem:[%s170 + $0x38] sm:$0xf] %vm2888, %v2870
      %2904 = vst.msk [vmem:[%s170 + $0x3c] sm:$0xf] %vm2888, %v2871
      %2905 = vst.msk [vmem:[%s170 + $0x40] sm:$0xf] %vm2888, %v2872
      %2906 = vst.msk [vmem:[%s170 + $0x44] sm:$0xf] %vm2888, %v2873
      %2907 = vst.msk [vmem:[%s170 + $0x48] sm:$0xf] %vm2888, %v2874
      %2908 = vst.msk [vmem:[%s170 + $0x4c] sm:$0xf] %vm2888, %v2875
      %2909 = vst.msk [vmem:[%s170 + $0x50] sm:$0xf] %vm2888, %v2876
      %2910 = vst.msk [vmem:[%s170 + $0x54] sm:$0xf] %vm2888, %v2877
      %2911 = vst.msk [vmem:[%s170 + $0x58] sm:$0xf] %vm2888, %v2878
      %2912 = vst.msk [vmem:[%s170 + $0x5c] sm:$0xf] %vm2888, %v2879
      %2913 = vst.msk [vmem:[%s170 + $0x60] sm:$0xf] %vm2888, %v2880
      %2914 = vst.msk [vmem:[%s170 + $0x64] sm:$0xf] %vm2888, %v2881
      %2915 = vst.msk [vmem:[%s170 + $0x68] sm:$0xf] %vm2888, %v2882
      %2916 = vst.msk [vmem:[%s170 + $0x6c] sm:$0xf] %vm2888, %v2883
      %2917 = vst.msk [vmem:[%s170 + $0x70] sm:$0xf] %vm2888, %v2884
      %2918 = vst.msk [vmem:[%s170 + $0x74] sm:$0xf] %vm2888, %v2885
      %2919 = vst.msk [vmem:[%s170 + $0x78] sm:$0xf] %vm2888, %v2886
      %2920 = vst.msk [vmem:[%s170 + $0x7c] sm:$0xf] %vm2888, %v2887
      %p2921 = scmp.lt.s32.totalorder %s14, 1
      %s2922 = scalar_select %p2921, %s14, 1
      %s2923 = smul.addr %s2922, 32
      %s2924 = smul.addr %s2923, 4
      %s2925 = scalar_lea.vmem %s3, %s2924
      // Predicated region
      $region33: #{conv_stem_forward.2} parent=31 // pred_check
        %p2926 = pneg %p100
      $region34: #{conv_stem_forward.2} parent=31 // pred_check_branch
        %2928 = sbr.rel (%p2926) target = $region36
      $region35: #{conv_stem_forward.2} parent=31 // pred_region
        _
      $region36: #{conv_stem_forward.2} parent=31 // pred_fallthru
        _
    $region32: #{conv_stem_forward.2} parent=5 // pred_fallthru
      _
    %p2929 = scmp.le.s32.totalorder 2, %s9
    // Predicated region
    $region37: #{conv_stem_forward.2} parent=5 // pred_check
      %p2930 = pneg %p2929
    $region38: #{conv_stem_forward.2} parent=5 // pred_check_branch
      %2932 = sbr.rel (%p2930) target = $region40
    $region39: #{conv_stem_forward.2} parent=5 // pred_region
      %s2933 = ssub.s32 %s9, 2
      // Predicated region
      $region41: #{conv_stem_forward.2} parent=39 // pred_check
        %p2934 = pneg %p106
      $region42: #{conv_stem_forward.2} parent=39 // pred_check_branch
        %2936 = sbr.rel (%p2934) target = $region44
      $region43: #{conv_stem_forward.2} parent=39 // pred_region
        %p2937 = scmp.lt.s32.totalorder %s15, 1
        %s2938 = scalar_select %p2937, %s15, 1
        %s2939 = smul.addr %s2938, 32
        %s2940 = smul.addr %s2939, 4
        %s2941 = scalar_lea.vmem %s3, %s2940
      $region44: #{conv_stem_forward.2} parent=39 // pred_fallthru
        _
    $region40: #{conv_stem_forward.2} parent=5 // pred_fallthru
      _
  $region6: #{conv_stem_forward.2} parent=0 // loop_footer
    %s13 = sadd.s32 1, %s9
  $region7: #{conv_stem_forward.2} parent=0 // loop_footer_branch
    %8 = sbr.rel target = $region3
  $region8: #{conv_stem_forward.2} parent=0 // loop_exit
    _

// kernel: conv_stem_forward.3
$region0: #{conv_stem_forward.3}
  #allocation0 [shape = 'u32[]', space=smem, size = 0x4, offset = 0x4, fixed_abs, tag = 'smem constant byte address 0x4 - core index']
  #allocation1 [shape = 'u32[72,128]{1,0:T(1,128)}', space=vmem, size = 0x9000, scoped, tag = 'internal scratch']
  %s0 = inlined_call_operand.vmem [shape: bf16[2,4,9,9,4], index: 0, kind: input, shape index: {}]
  %s1 = inlined_call_operand.vmem [shape: bf16[9,4,8], index: 1, kind: input, shape index: {}]
  %s2 = inlined_call_operand.vmem [shape: f32[1,8], index: 2, kind: input, shape index: {}]
  %s3 = inlined_call_operand.vmem [shape: bf16[8,32], index: 3, kind: input, shape index: {}]
  %s4 = inlined_call_operand.vmem [shape: f32[1,32], index: 4, kind: input, shape index: {}]
  %s5 = inlined_call_operand.vmem [shape: f32[2,64,32], index: 5, kind: output, shape index: {}]
  %s6 = sld [smem:[#allocation0]]
  $region53: #{conv_stem_forward.3} parent=0
    _
  %s8 = ssub.s32 1, %s6
  %s9 = scalar_select 0, %s8, %s6
  loop: start=0, step=1, limit=4
  $region2: #{conv_stem_forward.3} parent=0 // loop_pre_header
    _
  $region3: #{conv_stem_forward.3} parent=0 // loop_header
    %s11 = sphi 0, %s15
    %p12 = scmp.ge.s32.totalorder %s11, 4
    %s21 = sphi 0, %s23
    %s24 = sphi 0, %s21
    %s25 = sphi 0, %s24
    %s41 = sphi 0, %s25
    %s45 = sphi 0, %s45
    %s47 = sphi 0, %s45
    %s48 = sphi 0, %s47
    %s62 = sphi 0, %s48
    %s66 = sphi 0, %s66
    %s68 = sphi 0, %s66
    %s69 = sphi 0, %s68
    %s83 = sphi 0, %s69
    %s87 = sphi 0, %s87
    %s89 = sphi 0, %s87
    %s90 = sphi 0, %s89
    %s104 = sphi 0, %s90
    %s108 = sphi 0, %s108
    %s110 = sphi 0, %s108
    %s111 = sphi 0, %s110
    %s125 = sphi 0, %s111
    %s131 = sphi 0, %s133
    %s134 = sphi 0, %s131
    %s135 = sphi 0, %s134
    %s151 = sphi 0, %s135
  $region4: #{conv_stem_forward.3} parent=0 // loop_header_branch
    %14 = sbr.rel (%p12) target = $region8
  $region5: #{conv_stem_forward.3} parent=0 // loop_body
    %s16 = ssub.s32 %s11, 1
    %s17 = ssub.s32 %s11, 2
    %s18 = sadd.s32 %s11, 1
    %s19 = ssub.s32 %s11, %s18
    %p20 = scmp.eq.s32.totalorder %s19, 0
    %s22 = sadd.s32 %s21, 1
    %s23 = scalar_select %p20, %s21, %s22
    %p26 = pneg %p20
    %p27 = scmp.eq.s32.totalorder %s11, 1
    %p28 = por %p26, %p27
    %p29 = scmp.ne.s32.totalorder %s21, %s24
    %p30 = scmp.eq.s32.totalorder %s11, 0
    %p31 = por %p29, %p30
    %p32 = scmp.ne.s32.totalorder %s21, %s24
    %p33 = scmp.eq.s32.totalorder %s16, 1
    %p34 = por %p32, %p33
    %p35 = scmp.ne.s32.totalorder %s24, %s25
    %p36 = scmp.eq.s32.totalorder %s16, 0
    %p37 = por %p35, %p36
    %p38 = scmp.ne.s32.totalorder %s24, %s25
    %p39 = scmp.eq.s32.totalorder %s17, 1
    %p40 = por %p38, %p39
    %p42 = scmp.ne.s32.totalorder %s25, %s41
    %p43 = scmp.eq.s32.totalorder %s17, 0
    %p44 = por %p42, %p43
    %s46 = sadd.s32 %s45, 1
    %p49 = scmp.eq.s32.totalorder %s11, 1
    %p50 = scmp.ne.s32.totalorder %s45, %s47
    %p51 = scmp.eq.s32.totalorder %s11, 0
    %p52 = por %p50, %p51
    %p53 = scmp.ne.s32.totalorder %s45, %s47
    %p54 = scmp.eq.s32.totalorder %s16, 1
    %p55 = por %p53, %p54
    %p56 = scmp.ne.s32.totalorder %s47, %s48
    %p57 = scmp.eq.s32.totalorder %s16, 0
    %p58 = por %p56, %p57
    %p59 = scmp.ne.s32.totalorder %s47, %s48
    %p60 = scmp.eq.s32.totalorder %s17, 1
    %p61 = por %p59, %p60
    %p63 = scmp.ne.s32.totalorder %s48, %s62
    %p64 = scmp.eq.s32.totalorder %s17, 0
    %p65 = por %p63, %p64
    %s67 = sadd.s32 %s66, 1
    %p70 = scmp.eq.s32.totalorder %s11, 1
    %p71 = scmp.ne.s32.totalorder %s66, %s68
    %p72 = scmp.eq.s32.totalorder %s11, 0
    %p73 = por %p71, %p72
    %p74 = scmp.ne.s32.totalorder %s66, %s68
    %p75 = scmp.eq.s32.totalorder %s16, 1
    %p76 = por %p74, %p75
    %p77 = scmp.ne.s32.totalorder %s68, %s69
    %p78 = scmp.eq.s32.totalorder %s16, 0
    %p79 = por %p77, %p78
    %p80 = scmp.ne.s32.totalorder %s68, %s69
    %p81 = scmp.eq.s32.totalorder %s17, 1
    %p82 = por %p80, %p81
    %p84 = scmp.ne.s32.totalorder %s69, %s83
    %p85 = scmp.eq.s32.totalorder %s17, 0
    %p86 = por %p84, %p85
    %s88 = sadd.s32 %s87, 1
    %p91 = scmp.eq.s32.totalorder %s11, 1
    %p92 = scmp.ne.s32.totalorder %s87, %s89
    %p93 = scmp.eq.s32.totalorder %s11, 0
    %p94 = por %p92, %p93
    %p95 = scmp.ne.s32.totalorder %s87, %s89
    %p96 = scmp.eq.s32.totalorder %s16, 1
    %p97 = por %p95, %p96
    %p98 = scmp.ne.s32.totalorder %s89, %s90
    %p99 = scmp.eq.s32.totalorder %s16, 0
    %p100 = por %p98, %p99
    %p101 = scmp.ne.s32.totalorder %s89, %s90
    %p102 = scmp.eq.s32.totalorder %s17, 1
    %p103 = por %p101, %p102
    %p105 = scmp.ne.s32.totalorder %s90, %s104
    %p106 = scmp.eq.s32.totalorder %s17, 0
    %p107 = por %p105, %p106
    %s109 = sadd.s32 %s108, 1
    %p112 = scmp.eq.s32.totalorder %s11, 1
    %p113 = scmp.ne.s32.totalorder %s108, %s110
    %p114 = scmp.eq.s32.totalorder %s11, 0
    %p115 = por %p113, %p114
    %p116 = scmp.ne.s32.totalorder %s108, %s110
    %p117 = scmp.eq.s32.totalorder %s16, 1
    %p118 = por %p116, %p117
    %p119 = scmp.ne.s32.totalorder %s110, %s111
    %p120 = scmp.eq.s32.totalorder %s16, 0
    %p121 = por %p119, %p120
    %p122 = scmp.ne.s32.totalorder %s110, %s111
    %p123 = scmp.eq.s32.totalorder %s17, 1
    %p124 = por %p122, %p123
    %p126 = scmp.ne.s32.totalorder %s111, %s125
    %p127 = scmp.eq.s32.totalorder %s17, 0
    %p128 = por %p126, %p127
    %s129 = ssub.s32 %s11, %s18
    %p130 = scmp.eq.s32.totalorder %s129, 0
    %s132 = sadd.s32 %s131, 1
    %s133 = scalar_select %p130, %s131, %s132
    %p136 = pneg %p130
    %p137 = scmp.eq.s32.totalorder %s11, 1
    %p138 = por %p136, %p137
    %p139 = scmp.ne.s32.totalorder %s131, %s134
    %p140 = scmp.eq.s32.totalorder %s11, 0
    %p141 = por %p139, %p140
    %p142 = scmp.ne.s32.totalorder %s131, %s134
    %p143 = scmp.eq.s32.totalorder %s16, 1
    %p144 = por %p142, %p143
    %p145 = scmp.ne.s32.totalorder %s134, %s135
    %p146 = scmp.eq.s32.totalorder %s16, 0
    %p147 = por %p145, %p146
    %p148 = scmp.ne.s32.totalorder %s134, %s135
    %p149 = scmp.eq.s32.totalorder %s17, 1
    %p150 = por %p148, %p149
    %p152 = scmp.ne.s32.totalorder %s135, %s151
    %p153 = scmp.eq.s32.totalorder %s17, 0
    %p154 = por %p152, %p153
    %p155 = scmp.le.s32.totalorder 1, %s11
    %p156 = scmp.lt.s32.totalorder %s11, 3
    %p157 = pnand %p155, %p156
    %p158 = pneg %p157
    // Predicated region
    $region9: #{conv_stem_forward.3} parent=5 // pred_check
      _
    $region10: #{conv_stem_forward.3} parent=5 // pred_check_branch
      %160 = sbr.rel (%p157) target = $region12
    $region11: #{conv_stem_forward.3} parent=5 // pred_region
      %s161 = ssub.s32 %s11, 1
      // Predicated region
      $region13: #{conv_stem_forward.3} parent=11 // pred_check
        %p162 = pneg %p58
      $region14: #{conv_stem_forward.3} parent=11 // pred_check_branch
        %164 = sbr.rel (%p162) target = $region16
      $region15: #{conv_stem_forward.3} parent=11 // pred_region
        _
      $region16: #{conv_stem_forward.3} parent=11 // pred_fallthru
        _
      // Predicated region
      $region17: #{conv_stem_forward.3} parent=11 // pred_check
        %p165 = pneg %p79
      $region18: #{conv_stem_forward.3} parent=11 // pred_check_branch
        %167 = sbr.rel (%p165) target = $region20
      $region19: #{conv_stem_forward.3} parent=11 // pred_region
        _
      $region20: #{conv_stem_forward.3} parent=11 // pred_fallthru
        _
      // Predicated region
      $region21: #{conv_stem_forward.3} parent=11 // pred_check
        %p168 = pneg %p100
      $region22: #{conv_stem_forward.3} parent=11 // pred_check_branch
        %170 = sbr.rel (%p168) target = $region24
      $region23: #{conv_stem_forward.3} parent=11 // pred_region
        _
      $region24: #{conv_stem_forward.3} parent=11 // pred_fallthru
        _
      // Predicated region
      $region25: #{conv_stem_forward.3} parent=11 // pred_check
        %p171 = pneg %p121
      $region26: #{conv_stem_forward.3} parent=11 // pred_check_branch
        %173 = sbr.rel (%p171) target = $region28
      $region27: #{conv_stem_forward.3} parent=11 // pred_region
        _
      $region28: #{conv_stem_forward.3} parent=11 // pred_fallthru
        _
    $region12: #{conv_stem_forward.3} parent=5 // pred_fallthru
      _
    %p174 = scmp.lt.s32.totalorder %s11, 2
    // Predicated region
    $region29: #{conv_stem_forward.3} parent=5 // pred_check
      %p175 = pneg %p174
    $region30: #{conv_stem_forward.3} parent=5 // pred_check_branch
      %177 = sbr.rel (%p175) target = $region32
    $region31: #{conv_stem_forward.3} parent=5 // pred_region
      // Predicated region
      $region33: #{conv_stem_forward.3} parent=31 // pred_check
        %p178 = pneg %p31
      $region34: #{conv_stem_forward.3} parent=31 // pred_check_branch
        %180 = sbr.rel (%p178) target = $region36
      $region35: #{conv_stem_forward.3} parent=31 // pred_region
        %p181 = scmp.lt.s32.totalorder %s11, 1
        %s182 = scalar_select %p181, %s11, 1
        %s183 = smul.addr %s182, 72
        %s184 = smul.addr %s183, 4
        %s185 = scalar_lea.vmem %s0, %s184
      $region36: #{conv_stem_forward.3} parent=31 // pred_fallthru
        _
    $region32: #{conv_stem_forward.3} parent=5 // pred_fallthru
      _
    %p186 = scmp.le.s32.totalorder 1, %s11
    %p187 = scmp.lt.s32.totalorder %s11, 3
    %p188 = pnand %p186, %p187
    %p189 = pneg %p188
    // Predicated region
    $region37: #{conv_stem_forward.3} parent=5 // pred_check
      _
    $region38: #{conv_stem_forward.3} parent=5 // pred_check_branch
      %191 = sbr.rel (%p188) target = $region40
    $region39: #{conv_stem_forward.3} parent=5 // pred_region
      %s192 = ssub.s32 %s11, 1
      %p193 = scmp.lt.s32.totalorder %s16, 1
      %s194 = scalar_select %p193, %s16, 1
      %s195 = smul.addr %s194, 72
      %s196 = smul.addr %s195, 4
      %s197 = scalar_lea.vmem %s0, %s196
      %p198 = pneg %p37
      %p199 = pneg %p34
      %p200 = pneg %p58
      %p201 = pneg %p55
      %p202 = pneg %p79
      %p203 = pneg %p76
      %p204 = pneg %p100
      %p205 = pneg %p97
      %p206 = pneg %p121
      %p207 = pneg %p118
      %p208 = pneg %p147
      %p209 = pneg %p144
      %p210 = scmp.lt.s32.totalorder %s16, 1
      %s211 = scalar_select %p210, %s16, 1
      %s212 = smul.addr %s211, 8
      %s213 = smul.addr %s212, 8
      %s214 = scalar_lea.vmem %s5, %s213
      %p215 = scmp.lt.s32.totalorder %s16, 1
      %s216 = scalar_select %p215, %s16, 1
      %s217 = smul.addr %s216, 72
      %s218 = smul.addr %s217, 4
      %s219 = scalar_lea.vmem %s0, %s218
      %p220 = scmp.lt.s32.totalorder %s16, 1
      %s221 = scalar_select %p220, %s16, 1
      %s222 = smul.addr %s221, 8
      %s223 = smul.addr %s222, 8
      %s224 = scalar_lea.vmem %s5, %s223
      %v226 = vld [vmem:[%s219] sm:$0xf]
      %v227 = vld [vmem:[%s219 + $0x4] sm:$0x1]
      %v228 = vld [vmem:[%s219 + $0x8] sm:$0xf]
      %v229 = vld [vmem:[%s219 + $0xc] sm:$0x1]
      %v230 = vld [vmem:[%s219 + $0x10] sm:$0xf]
      %v231 = vld [vmem:[%s219 + $0x14] sm:$0x1]
      %v232 = vld [vmem:[%s219 + $0x18] sm:$0xf]
      %v233 = vld [vmem:[%s219 + $0x1c] sm:$0x1]
      %v234 = vld [vmem:[%s219 + $0x20] sm:$0xf]
      %v235 = vld [vmem:[%s219 + $0x24] sm:$0x1]
      %v236 = vld [vmem:[%s219 + $0x28] sm:$0xf]
      %v237 = vld [vmem:[%s219 + $0x2c] sm:$0x1]
      %v238 = vld [vmem:[%s219 + $0x30] sm:$0xf]
      %v239 = vld [vmem:[%s219 + $0x34] sm:$0x1]
      %v240 = vld [vmem:[%s219 + $0x38] sm:$0xf]
      %v241 = vld [vmem:[%s219 + $0x3c] sm:$0x1]
      %v242 = vunpack.c.l.bf16 %v226
      %v243 = vunpack.c.l.bf16 %v227
      %v244 = vunpack.c.l.bf16 %v228
      %v245 = vunpack.c.l.bf16 %v229
      %v246 = vunpack.c.l.bf16 %v230
      %v247 = vunpack.c.l.bf16 %v231
      %v248 = vunpack.c.l.bf16 %v232
      %v249 = vunpack.c.l.bf16 %v233
      %v250 = vunpack.c.l.bf16 %v234
      %v251 = vunpack.c.l.bf16 %v235
      %v252 = vunpack.c.l.bf16 %v236
      %v253 = vunpack.c.l.bf16 %v237
      %v254 = vunpack.c.l.bf16 %v238
      %v255 = vunpack.c.l.bf16 %v239
      %v256 = vunpack.c.l.bf16 %v240
      %v257 = vunpack.c.l.bf16 %v241
      %v258 = vpack.c.bf16 %v244, %v242
      %v259 = vpack.c.bf16 %v248, %v246
      %v260 = vpack.c.bf16 %v252, %v250
      %v261 = vpack.c.bf16 %v256, %v254
      %v262 = vld [vmem:[%s1] sm:$0x3]
      %s263 = scalar_lea.vmem %s219, 72
      %v264 = vld [vmem:[%s263] sm:$0xf]
      %v265 = vld [vmem:[%s263 + $0x8] sm:$0xf]
      %v266 = vld [vmem:[%s263 + $0x10] sm:$0xf]
      %v267 = vld [vmem:[%s263 + $0x18] sm:$0xf]
      %v268 = vld [vmem:[%s263 + $0x20] sm:$0xf]
      %v269 = vld [vmem:[%s263 + $0x28] sm:$0xf]
      %v270 = vld [vmem:[%s263 + $0x30] sm:$0xf]
      %v271 = vld [vmem:[%s263 + $0x38] sm:$0xf]
      %v272 = vunpack.c.l.bf16 %v264
      %v273 = vunpack.c.l.bf16 %v265
      %v274 = vunpack.c.l.bf16 %v266
      %v275 = vunpack.c.l.bf16 %v267
      %v276 = vunpack.c.l.bf16 %v268
      %v277 = vunpack.c.l.bf16 %v269
      %v278 = vunpack.c.l.bf16 %v270
      %v279 = vunpack.c.l.bf16 %v271
      %v280 = vpack.c.bf16 %v273, %v272
      %v281 = vpack.c.bf16 %v275, %v274
      %v282 = vpack.c.bf16 %v277, %v276
      %v283 = vpack.c.bf16 %v279, %v278
      %s284 = scalar_lea.vmem %s1, 2
      %v285 = vld [vmem:[%s284] sm:$0x3]
      %vm286 = vcmask 31744
      %v288 = vsel %vm286, %v280, 0
      %v291 = vsel %vm286, %v281, 0
      %v294 = vsel %vm286, %v282, 0
      %v297 = vsel %vm286, %v283, 0
      %vm299 = vcmask 1041408
      %v301 = vsel %vm299, %v285, 0
      %303 = vmatpush.bf16.msra.mxu0 0
      %304 = vmatpush.bf16.msra.mxu0 0
      %305 = vmatpush.bf16.msra.mxu0 0
      %306 = vmatpush.bf16.msra.mxu0 0
      %307 = vmatpush.bf16.msra.mxu0 0
      %308 = vmatpush.bf16.msra.mxu0 0
      %309 = vmatpush.bf16.msra.mxu0 0
      %310 = vmatpush.bf16.msra.mxu0 %v301
      %311 = vmatmul.bf16.gmra.mxu0 %v288
      %v312 = vpop.f32.mrf.mxu0
      %v313 = vadd.f32 0.0, %v312
      %v314 = vpop.f32.mrf.mxu0
      %v315 = vadd.f32 0.0, %v314
      %316 = vmatmul.bf16.gmra.mxu0 %v291
      %v317 = vpop.f32.mrf.mxu0
      %v318 = vadd.f32 0.0, %v317
      %v319 = vpop.f32.mrf.mxu0
      %v320 = vadd.f32 0.0, %v319
      %321 = vmatmul.bf16.gmra.mxu0 %v294
      %v322 = vpop.f32.mrf.mxu0
      %v323 = vadd.f32 0.0, %v322
      %v324 = vpop.f32.mrf.mxu0
      %v325 = vadd.f32 0.0, %v324
      %326 = vmatmul.bf16.gmra.mxu0 %v297
      %v327 = vpop.f32.mrf.mxu0
      %v328 = vadd.f32 0.0, %v327
      %v329 = vpop.f32.mrf.mxu0
      %v330 = vadd.f32 0.0, %v329
      %331 = vdwg.mxu0
      %v333 = vsel %vm286, %v258, 0
      %v336 = vsel %vm286, %v259, 0
      %v339 = vsel %vm286, %v260, 0
      %v342 = vsel %vm286, %v261, 0
      %v345 = vsel %vm299, %v262, 0
      %347 = vmatpush.bf16.msra.mxu0 0
      %348 = vmatpush.bf16.msra.mxu0 0
      %349 = vmatpush.bf16.msra.mxu0 0
      %350 = vmatpush.bf16.msra.mxu0 0
      %351 = vmatpush.bf16.msra.mxu0 0
      %352 = vmatpush.bf16.msra.mxu0 0
      %353 = vmatpush.bf16.msra.mxu0 0
      %354 = vmatpush.bf16.msra.mxu0 %v345
      %355 = vmatmul.bf16.gmra.mxu0 %v333
      %v356 = vpop.f32.mrf.mxu0
      %v357 = vadd.f32 %v313, %v356
      %v358 = vpop.f32.mrf.mxu0
      %v359 = vadd.f32 %v315, %v358
      %360 = vmatmul.bf16.gmra.mxu0 %v336
      %v361 = vpop.f32.mrf.mxu0
      %v362 = vadd.f32 %v318, %v361
      %v363 = vpop.f32.mrf.mxu0
      %v364 = vadd.f32 %v320, %v363
      %365 = vmatmul.bf16.gmra.mxu0 %v339
      %v366 = vpop.f32.mrf.mxu0
      %v367 = vadd.f32 %v323, %v366
      %v368 = vpop.f32.mrf.mxu0
      %v369 = vadd.f32 %v325, %v368
      %370 = vmatmul.bf16.gmra.mxu0 %v342
      %v371 = vpop.f32.mrf.mxu0
      %v372 = vadd.f32 %v328, %v371
      %v373 = vpop.f32.mrf.mxu0
      %v374 = vadd.f32 %v330, %v373
      %375 = vdwg.mxu0
      %vm392 = vcmask 1046528
      %v393 = vrot.slane %v242, 1
      %v394 = vrot.slane %v243, 1
      %v395 = vsel %vm392, %v393, %v394
      %v396 = vrot.slane %v244, 1
      %v397 = vrot.slane %v245, 1
      %v398 = vsel %vm392, %v396, %v397
      %v399 = vrot.slane %v246, 1
      %v400 = vrot.slane %v247, 1
      %v401 = vsel %vm392, %v399, %v400
      %v402 = vrot.slane %v248, 1
      %v403 = vrot.slane %v249, 1
      %v404 = vsel %vm392, %v402, %v403
      %v405 = vrot.slane %v250, 1
      %v406 = vrot.slane %v251, 1
      %v407 = vsel %vm392, %v405, %v406
      %v408 = vrot.slane %v252, 1
      %v409 = vrot.slane %v253, 1
      %v410 = vsel %vm392, %v408, %v409
      %v411 = vrot.slane %v254, 1
      %v412 = vrot.slane %v255, 1
      %v413 = vsel %vm392, %v411, %v412
      %v414 = vrot.slane %v256, 1
      %v415 = vrot.slane %v257, 1
      %v416 = vsel %vm392, %v414, %v415
      %v425 = vpack.c.bf16 %v398, %v395
      %v426 = vpack.c.bf16 %v404, %v401
      %v427 = vpack.c.bf16 %v410, %v407
      %v428 = vpack.c.bf16 %v416, %v413
      %s429 = scalar_lea.vmem %s1, 4
      %v430 = vld [vmem:[%s429] sm:$0x3]
      %v432 = vsel %vm286, %v425, 0
      %v435 = vsel %vm286, %v426, 0
      %v438 = vsel %vm286, %v427, 0
      %v441 = vsel %vm286, %v428, 0
      %v444 = vsel %vm299, %v430, 0
      %446 = vmatpush.bf16.msra.mxu0 0
      %447 = vmatpush.bf16.msra.mxu0 0
      %448 = vmatpush.bf16.msra.mxu0 0
      %449 = vmatpush.bf16.msra.mxu0 0
      %450 = vmatpush.bf16.msra.mxu0 0
      %451 = vmatpush.bf16.msra.mxu0 0
      %452 = vmatpush.bf16.msra.mxu0 0
      %453 = vmatpush.bf16.msra.mxu0 %v444
      %454 = vmatmul.bf16.gmra.mxu0 %v432
      %v455 = vpop.f32.mrf.mxu0
      %v456 = vadd.f32 0.0, %v455
      %v457 = vpop.f32.mrf.mxu0
      %v458 = vadd.f32 0.0, %v457
      %459 = vmatmul.bf16.gmra.mxu0 %v435
      %v460 = vpop.f32.mrf.mxu0
      %v461 = vadd.f32 0.0, %v460
      %v462 = vpop.f32.mrf.mxu0
      %v463 = vadd.f32 0.0, %v462
      %464 = vmatmul.bf16.gmra.mxu0 %v438
      %v465 = vpop.f32.mrf.mxu0
      %v466 = vadd.f32 0.0, %v465
      %v467 = vpop.f32.mrf.mxu0
      %v468 = vadd.f32 0.0, %v467
      %469 = vmatmul.bf16.gmra.mxu0 %v441
      %v470 = vpop.f32.mrf.mxu0
      %v471 = vadd.f32 0.0, %v470
      %v472 = vpop.f32.mrf.mxu0
      %v473 = vadd.f32 0.0, %v472
      %474 = vdwg.mxu0
      %v475 = vadd.f32 %v357, %v456
      %v476 = vadd.f32 %v359, %v458
      %v477 = vadd.f32 %v362, %v461
      %v478 = vadd.f32 %v364, %v463
      %v479 = vadd.f32 %v367, %v466
      %v480 = vadd.f32 %v369, %v468
      %v481 = vadd.f32 %v372, %v471
      %v482 = vadd.f32 %v374, %v473
      %s483 = scalar_lea.vmem %s219, 144
      %v484 = vld [vmem:[%s483] sm:$0xf]
      %v485 = vld [vmem:[%s483 + $0x4] sm:$0x1]
      %v486 = vld [vmem:[%s483 + $0x8] sm:$0xf]
      %v487 = vld [vmem:[%s483 + $0xc] sm:$0x1]
      %v488 = vld [vmem:[%s483 + $0x10] sm:$0xf]
      %v489 = vld [vmem:[%s483 + $0x14] sm:$0x1]
      %v490 = vld [vmem:[%s483 + $0x18] sm:$0xf]
      %v491 = vld [vmem:[%s483 + $0x1c] sm:$0x1]
      %v492 = vld [vmem:[%s483 + $0x20] sm:$0xf]
      %v493 = vld [vmem:[%s483 + $0x24] sm:$0x1]
      %v494 = vld [vmem:[%s483 + $0x28] sm:$0xf]
      %v495 = vld [vmem:[%s483 + $0x2c] sm:$0x1]
      %v496 = vld [vmem:[%s483 + $0x30] sm:$0xf]
      %v497 = vld [vmem:[%s483 + $0x34] sm:$0x1]
      %v498 = vld [vmem:[%s483 + $0x38] sm:$0xf]
      %v499 = vld [vmem:[%s483 + $0x3c] sm:$0x1]
      %v500 = vunpack.c.l.bf16 %v484
      %v501 = vunpack.c.l.bf16 %v485
      %v502 = vunpack.c.l.bf16 %v486
      %v503 = vunpack.c.l.bf16 %v487
      %v504 = vunpack.c.l.bf16 %v488
      %v505 = vunpack.c.l.bf16 %v489
      %v506 = vunpack.c.l.bf16 %v490
      %v507 = vunpack.c.l.bf16 %v491
      %v508 = vunpack.c.l.bf16 %v492
      %v509 = vunpack.c.l.bf16 %v493
      %v510 = vunpack.c.l.bf16 %v494
      %v511 = vunpack.c.l.bf16 %v495
      %v512 = vunpack.c.l.bf16 %v496
      %v513 = vunpack.c.l.bf16 %v497
      %v514 = vunpack.c.l.bf16 %v498
      %v515 = vunpack.c.l.bf16 %v499
      %v516 = vpack.c.bf16 %v502, %v500
      %v517 = vpack.c.bf16 %v506, %v504
      %v518 = vpack.c.bf16 %v510, %v508
      %v519 = vpack.c.bf16 %v514, %v512
      %s520 = scalar_lea.vmem %s1, 6
      %v521 = vld [vmem:[%s520] sm:$0x3]
      %v523 = vsel %vm286, %v516, 0
      %v526 = vsel %vm286, %v517, 0
      %v529 = vsel %vm286, %v518, 0
      %v532 = vsel %vm286, %v519, 0
      %v535 = vsel %vm299, %v521, 0
      %537 = vmatpush.bf16.msra.mxu0 0
      %538 = vmatpush.bf16.msra.mxu0 0
      %539 = vmatpush.bf16.msra.mxu0 0
      %540 = vmatpush.bf16.msra.mxu0 0
      %541 = vmatpush.bf16.msra.mxu0 0
      %542 = vmatpush.bf16.msra.mxu0 0
      %543 = vmatpush.bf16.msra.mxu0 0
      %544 = vmatpush.bf16.msra.mxu0 %v535
      %545 = vmatmul.bf16.gmra.mxu0 %v523
      %v546 = vpop.f32.mrf.mxu0
      %v547 = vadd.f32 0.0, %v546
      %v548 = vpop.f32.mrf.mxu0
      %v549 = vadd.f32 0.0, %v548
      %550 = vmatmul.bf16.gmra.mxu0 %v526
      %v551 = vpop.f32.mrf.mxu0
      %v552 = vadd.f32 0.0, %v551
      %v553 = vpop.f32.mrf.mxu0
      %v554 = vadd.f32 0.0, %v553
      %555 = vmatmul.bf16.gmra.mxu0 %v529
      %v556 = vpop.f32.mrf.mxu0
      %v557 = vadd.f32 0.0, %v556
      %v558 = vpop.f32.mrf.mxu0
      %v559 = vadd.f32 0.0, %v558
      %560 = vmatmul.bf16.gmra.mxu0 %v532
      %v561 = vpop.f32.mrf.mxu0
      %v562 = vadd.f32 0.0, %v561
      %v563 = vpop.f32.mrf.mxu0
      %v564 = vadd.f32 0.0, %v563
      %565 = vdwg.mxu0
      %v566 = vadd.f32 %v475, %v547
      %v567 = vadd.f32 %v476, %v549
      %v568 = vadd.f32 %v477, %v552
      %v569 = vadd.f32 %v478, %v554
      %v570 = vadd.f32 %v479, %v557
      %v571 = vadd.f32 %v480, %v559
      %v572 = vadd.f32 %v481, %v562
      %v573 = vadd.f32 %v482, %v564
      %s574 = scalar_lea.vmem %s219, 216
      %v575 = vld [vmem:[%s574] sm:$0xf]
      %v576 = vld [vmem:[%s574 + $0x8] sm:$0xf]
      %v577 = vld [vmem:[%s574 + $0x10] sm:$0xf]
      %v578 = vld [vmem:[%s574 + $0x18] sm:$0xf]
      %v579 = vld [vmem:[%s574 + $0x20] sm:$0xf]
      %v580 = vld [vmem:[%s574 + $0x28] sm:$0xf]
      %v581 = vld [vmem:[%s574 + $0x30] sm:$0xf]
      %v582 = vld [vmem:[%s574 + $0x38] sm:$0xf]
      %v583 = vunpack.c.l.bf16 %v575
      %v584 = vunpack.c.l.bf16 %v576
      %v585 = vunpack.c.l.bf16 %v577
      %v586 = vunpack.c.l.bf16 %v578
      %v587 = vunpack.c.l.bf16 %v579
      %v588 = vunpack.c.l.bf16 %v580
      %v589 = vunpack.c.l.bf16 %v581
      %v590 = vunpack.c.l.bf16 %v582
      %v591 = vpack.c.bf16 %v584, %v583
      %v592 = vpack.c.bf16 %v586, %v585
      %v593 = vpack.c.bf16 %v588, %v587
      %v594 = vpack.c.bf16 %v590, %v589
      %s595 = scalar_lea.vmem %s1, 8
      %v596 = vld [vmem:[%s595] sm:$0x3]
      %v598 = vsel %vm286, %v591, 0
      %v601 = vsel %vm286, %v592, 0
      %v604 = vsel %vm286, %v593, 0
      %v607 = vsel %vm286, %v594, 0
      %v610 = vsel %vm299, %v596, 0
      %612 = vmatpush.bf16.msra.mxu0 0
      %613 = vmatpush.bf16.msra.mxu0 0
      %614 = vmatpush.bf16.msra.mxu0 0
      %615 = vmatpush.bf16.msra.mxu0 0
      %616 = vmatpush.bf16.msra.mxu0 0
      %617 = vmatpush.bf16.msra.mxu0 0
      %618 = vmatpush.bf16.msra.mxu0 0
      %619 = vmatpush.bf16.msra.mxu0 %v610
      %620 = vmatmul.bf16.gmra.mxu0 %v598
      %v621 = vpop.f32.mrf.mxu0
      %v622 = vadd.f32 0.0, %v621
      %v623 = vpop.f32.mrf.mxu0
      %v624 = vadd.f32 0.0, %v623
      %625 = vmatmul.bf16.gmra.mxu0 %v601
      %v626 = vpop.f32.mrf.mxu0
      %v627 = vadd.f32 0.0, %v626
      %v628 = vpop.f32.mrf.mxu0
      %v629 = vadd.f32 0.0, %v628
      %630 = vmatmul.bf16.gmra.mxu0 %v604
      %v631 = vpop.f32.mrf.mxu0
      %v632 = vadd.f32 0.0, %v631
      %v633 = vpop.f32.mrf.mxu0
      %v634 = vadd.f32 0.0, %v633
      %635 = vmatmul.bf16.gmra.mxu0 %v607
      %v636 = vpop.f32.mrf.mxu0
      %v637 = vadd.f32 0.0, %v636
      %v638 = vpop.f32.mrf.mxu0
      %v639 = vadd.f32 0.0, %v638
      %640 = vdwg.mxu0
      %v641 = vadd.f32 %v566, %v622
      %v642 = vadd.f32 %v567, %v624
      %v643 = vadd.f32 %v568, %v627
      %v644 = vadd.f32 %v569, %v629
      %v645 = vadd.f32 %v570, %v632
      %v646 = vadd.f32 %v571, %v634
      %v647 = vadd.f32 %v572, %v637
      %v648 = vadd.f32 %v573, %v639
      %v665 = vrot.slane %v500, 1
      %v666 = vrot.slane %v501, 1
      %v667 = vsel %vm392, %v665, %v666
      %v668 = vrot.slane %v502, 1
      %v669 = vrot.slane %v503, 1
      %v670 = vsel %vm392, %v668, %v669
      %v671 = vrot.slane %v504, 1
      %v672 = vrot.slane %v505, 1
      %v673 = vsel %vm392, %v671, %v672
      %v674 = vrot.slane %v506, 1
      %v675 = vrot.slane %v507, 1
      %v676 = vsel %vm392, %v674, %v675
      %v677 = vrot.slane %v508, 1
      %v678 = vrot.slane %v509, 1
      %v679 = vsel %vm392, %v677, %v678
      %v680 = vrot.slane %v510, 1
      %v681 = vrot.slane %v511, 1
      %v682 = vsel %vm392, %v680, %v681
      %v683 = vrot.slane %v512, 1
      %v684 = vrot.slane %v513, 1
      %v685 = vsel %vm392, %v683, %v684
      %v686 = vrot.slane %v514, 1
      %v687 = vrot.slane %v515, 1
      %v688 = vsel %vm392, %v686, %v687
      %v697 = vpack.c.bf16 %v670, %v667
      %v698 = vpack.c.bf16 %v676, %v673
      %v699 = vpack.c.bf16 %v682, %v679
      %v700 = vpack.c.bf16 %v688, %v685
      %s701 = scalar_lea.vmem %s1, 10
      %v702 = vld [vmem:[%s701] sm:$0x3]
      %v704 = vsel %vm286, %v697, 0
      %v707 = vsel %vm286, %v698, 0
      %v710 = vsel %vm286, %v699, 0
      %v713 = vsel %vm286, %v700, 0
      %v716 = vsel %vm299, %v702, 0
      %718 = vmatpush.bf16.msra.mxu0 0
      %719 = vmatpush.bf16.msra.mxu0 0
      %720 = vmatpush.bf16.msra.mxu0 0
      %721 = vmatpush.bf16.msra.mxu0 0
      %722 = vmatpush.bf16.msra.mxu0 0
      %723 = vmatpush.bf16.msra.mxu0 0
      %724 = vmatpush.bf16.msra.mxu0 0
      %725 = vmatpush.bf16.msra.mxu0 %v716
      %726 = vmatmul.bf16.gmra.mxu0 %v704
      %v727 = vpop.f32.mrf.mxu0
      %v728 = vadd.f32 0.0, %v727
      %v729 = vpop.f32.mrf.mxu0
      %v730 = vadd.f32 0.0, %v729
      %731 = vmatmul.bf16.gmra.mxu0 %v707
      %v732 = vpop.f32.mrf.mxu0
      %v733 = vadd.f32 0.0, %v732
      %v734 = vpop.f32.mrf.mxu0
      %v735 = vadd.f32 0.0, %v734
      %736 = vmatmul.bf16.gmra.mxu0 %v710
      %v737 = vpop.f32.mrf.mxu0
      %v738 = vadd.f32 0.0, %v737
      %v739 = vpop.f32.mrf.mxu0
      %v740 = vadd.f32 0.0, %v739
      %741 = vmatmul.bf16.gmra.mxu0 %v713
      %v742 = vpop.f32.mrf.mxu0
      %v743 = vadd.f32 0.0, %v742
      %v744 = vpop.f32.mrf.mxu0
      %v745 = vadd.f32 0.0, %v744
      %746 = vdwg.mxu0
      %v747 = vadd.f32 %v641, %v728
      %v748 = vadd.f32 %v642, %v730
      %v749 = vadd.f32 %v643, %v733
      %v750 = vadd.f32 %v644, %v735
      %v751 = vadd.f32 %v645, %v738
      %v752 = vadd.f32 %v646, %v740
      %v753 = vadd.f32 %v647, %v743
      %v754 = vadd.f32 %v648, %v745
      %s755 = scalar_lea.vmem %s219, 8
      %v756 = vld [vmem:[%s755] sm:$0xf]
      %v757 = vld [vmem:[%s755 + $0x4] sm:$0x1]
      %v758 = vld [vmem:[%s755 + $0x8] sm:$0xf]
      %v759 = vld [vmem:[%s755 + $0xc] sm:$0x1]
      %v760 = vld [vmem:[%s755 + $0x10] sm:$0xf]
      %v761 = vld [vmem:[%s755 + $0x14] sm:$0x1]
      %v762 = vld [vmem:[%s755 + $0x18] sm:$0xf]
      %v763 = vld [vmem:[%s755 + $0x1c] sm:$0x1]
      %v764 = vld [vmem:[%s755 + $0x20] sm:$0xf]
      %v765 = vld [vmem:[%s755 + $0x24] sm:$0x1]
      %v766 = vld [vmem:[%s755 + $0x28] sm:$0xf]
      %v767 = vld [vmem:[%s755 + $0x2c] sm:$0x1]
      %v768 = vld [vmem:[%s755 + $0x30] sm:$0xf]
      %v769 = vld [vmem:[%s755 + $0x34] sm:$0x1]
      %v770 = vld [vmem:[%s755 + $0x38] sm:$0xf]
      %v771 = vld [vmem:[%s755 + $0x3c] sm:$0x1]
      %v772 = vunpack.c.l.bf16 %v756
      %v773 = vunpack.c.l.bf16 %v757
      %v774 = vunpack.c.l.bf16 %v758
      %v775 = vunpack.c.l.bf16 %v759
      %v776 = vunpack.c.l.bf16 %v760
      %v777 = vunpack.c.l.bf16 %v761
      %v778 = vunpack.c.l.bf16 %v762
      %v779 = vunpack.c.l.bf16 %v763
      %v780 = vunpack.c.l.bf16 %v764
      %v781 = vunpack.c.l.bf16 %v765
      %v782 = vunpack.c.l.bf16 %v766
      %v783 = vunpack.c.l.bf16 %v767
      %v784 = vunpack.c.l.bf16 %v768
      %v785 = vunpack.c.l.bf16 %v769
      %v786 = vunpack.c.l.bf16 %v770
      %v787 = vunpack.c.l.bf16 %v771
      %v788 = vpack.c.bf16 %v774, %v772
      %v789 = vpack.c.bf16 %v778, %v776
      %v790 = vpack.c.bf16 %v782, %v780
      %v791 = vpack.c.bf16 %v786, %v784
      %s792 = scalar_lea.vmem %s1, 12
      %v793 = vld [vmem:[%s792] sm:$0x3]
      %v795 = vsel %vm286, %v788, 0
      %v798 = vsel %vm286, %v789, 0
      %v801 = vsel %vm286, %v790, 0
      %v804 = vsel %vm286, %v791, 0
      %v807 = vsel %vm299, %v793, 0
      %809 = vmatpush.bf16.msra.mxu0 0
      %810 = vmatpush.bf16.msra.mxu0 0
      %811 = vmatpush.bf16.msra.mxu0 0
      %812 = vmatpush.bf16.msra.mxu0 0
      %813 = vmatpush.bf16.msra.mxu0 0
      %814 = vmatpush.bf16.msra.mxu0 0
      %815 = vmatpush.bf16.msra.mxu0 0
      %816 = vmatpush.bf16.msra.mxu0 %v807
      %817 = vmatmul.bf16.gmra.mxu0 %v795
      %v818 = vpop.f32.mrf.mxu0
      %v819 = vadd.f32 0.0, %v818
      %v820 = vpop.f32.mrf.mxu0
      %v821 = vadd.f32 0.0, %v820
      %822 = vmatmul.bf16.gmra.mxu0 %v798
      %v823 = vpop.f32.mrf.mxu0
      %v824 = vadd.f32 0.0, %v823
      %v825 = vpop.f32.mrf.mxu0
      %v826 = vadd.f32 0.0, %v825
      %827 = vmatmul.bf16.gmra.mxu0 %v801
      %v828 = vpop.f32.mrf.mxu0
      %v829 = vadd.f32 0.0, %v828
      %v830 = vpop.f32.mrf.mxu0
      %v831 = vadd.f32 0.0, %v830
      %832 = vmatmul.bf16.gmra.mxu0 %v804
      %v833 = vpop.f32.mrf.mxu0
      %v834 = vadd.f32 0.0, %v833
      %v835 = vpop.f32.mrf.mxu0
      %v836 = vadd.f32 0.0, %v835
      %837 = vdwg.mxu0
      %v838 = vadd.f32 %v747, %v819
      %v839 = vadd.f32 %v748, %v821
      %v840 = vadd.f32 %v749, %v824
      %v841 = vadd.f32 %v750, %v826
      %v842 = vadd.f32 %v751, %v829
      %v843 = vadd.f32 %v752, %v831
      %v844 = vadd.f32 %v753, %v834
      %v845 = vadd.f32 %v754, %v836
      %s846 = scalar_lea.vmem %s219, 80
      %v847 = vld [vmem:[%s846] sm:$0xf]
      %v848 = vld [vmem:[%s846 + $0x8] sm:$0xf]
      %v849 = vld [vmem:[%s846 + $0x10] sm:$0xf]
      %v850 = vld [vmem:[%s846 + $0x18] sm:$0xf]
      %v851 = vld [vmem:[%s846 + $0x20] sm:$0xf]
      %v852 = vld [vmem:[%s846 + $0x28] sm:$0xf]
      %v853 = vld [vmem:[%s846 + $0x30] sm:$0xf]
      %v854 = vld [vmem:[%s846 + $0x38] sm:$0xf]
      %v855 = vunpack.c.l.bf16 %v847
      %v856 = vunpack.c.l.bf16 %v848
      %v857 = vunpack.c.l.bf16 %v849
      %v858 = vunpack.c.l.bf16 %v850
      %v859 = vunpack.c.l.bf16 %v851
      %v860 = vunpack.c.l.bf16 %v852
      %v861 = vunpack.c.l.bf16 %v853
      %v862 = vunpack.c.l.bf16 %v854
      %v863 = vpack.c.bf16 %v856, %v855
      %v864 = vpack.c.bf16 %v858, %v857
      %v865 = vpack.c.bf16 %v860, %v859
      %v866 = vpack.c.bf16 %v862, %v861
      %s867 = scalar_lea.vmem %s1, 14
      %v868 = vld [vmem:[%s867] sm:$0x3]
      %v870 = vsel %vm286, %v863, 0
      %v873 = vsel %vm286, %v864, 0
      %v876 = vsel %vm286, %v865, 0
      %v879 = vsel %vm286, %v866, 0
      %v882 = vsel %vm299, %v868, 0
      %884 = vmatpush.bf16.msra.mxu0 0
      %885 = vmatpush.bf16.msra.mxu0 0
      %886 = vmatpush.bf16.msra.mxu0 0
      %887 = vmatpush.bf16.msra.mxu0 0
      %888 = vmatpush.bf16.msra.mxu0 0
      %889 = vmatpush.bf16.msra.mxu0 0
      %890 = vmatpush.bf16.msra.mxu0 0
      %891 = vmatpush.bf16.msra.mxu0 %v882
      %892 = vmatmul.bf16.gmra.mxu0 %v870
      %v893 = vpop.f32.mrf.mxu0
      %v894 = vadd.f32 0.0, %v893
      %v895 = vpop.f32.mrf.mxu0
      %v896 = vadd.f32 0.0, %v895
      %897 = vmatmul.bf16.gmra.mxu0 %v873
      %v898 = vpop.f32.mrf.mxu0
      %v899 = vadd.f32 0.0, %v898
      %v900 = vpop.f32.mrf.mxu0
      %v901 = vadd.f32 0.0, %v900
      %902 = vmatmul.bf16.gmra.mxu0 %v876
      %v903 = vpop.f32.mrf.mxu0
      %v904 = vadd.f32 0.0, %v903
      %v905 = vpop.f32.mrf.mxu0
      %v906 = vadd.f32 0.0, %v905
      %907 = vmatmul.bf16.gmra.mxu0 %v879
      %v908 = vpop.f32.mrf.mxu0
      %v909 = vadd.f32 0.0, %v908
      %v910 = vpop.f32.mrf.mxu0
      %v911 = vadd.f32 0.0, %v910
      %912 = vdwg.mxu0
      %v913 = vadd.f32 %v838, %v894
      %v914 = vadd.f32 %v839, %v896
      %v915 = vadd.f32 %v840, %v899
      %v916 = vadd.f32 %v841, %v901
      %v917 = vadd.f32 %v842, %v904
      %v918 = vadd.f32 %v843, %v906
      %v919 = vadd.f32 %v844, %v909
      %v920 = vadd.f32 %v845, %v911
      %v937 = vrot.slane %v772, 1
      %v938 = vrot.slane %v773, 1
      %v939 = vsel %vm392, %v937, %v938
      %v940 = vrot.slane %v774, 1
      %v941 = vrot.slane %v775, 1
      %v942 = vsel %vm392, %v940, %v941
      %v943 = vrot.slane %v776, 1
      %v944 = vrot.slane %v777, 1
      %v945 = vsel %vm392, %v943, %v944
      %v946 = vrot.slane %v778, 1
      %v947 = vrot.slane %v779, 1
      %v948 = vsel %vm392, %v946, %v947
      %v949 = vrot.slane %v780, 1
      %v950 = vrot.slane %v781, 1
      %v951 = vsel %vm392, %v949, %v950
      %v952 = vrot.slane %v782, 1
      %v953 = vrot.slane %v783, 1
      %v954 = vsel %vm392, %v952, %v953
      %v955 = vrot.slane %v784, 1
      %v956 = vrot.slane %v785, 1
      %v957 = vsel %vm392, %v955, %v956
      %v958 = vrot.slane %v786, 1
      %v959 = vrot.slane %v787, 1
      %v960 = vsel %vm392, %v958, %v959
      %v969 = vpack.c.bf16 %v942, %v939
      %v970 = vpack.c.bf16 %v948, %v945
      %v971 = vpack.c.bf16 %v954, %v951
      %v972 = vpack.c.bf16 %v960, %v957
      %s973 = scalar_lea.vmem %s1, 16
      %v974 = vld [vmem:[%s973] sm:$0x3]
      %v976 = vsel %vm286, %v969, 0
      %v979 = vsel %vm286, %v970, 0
      %v982 = vsel %vm286, %v971, 0
      %v985 = vsel %vm286, %v972, 0
      %v988 = vsel %vm299, %v974, 0
      %990 = vmatpush.bf16.msra.mxu0 0
      %991 = vmatpush.bf16.msra.mxu0 0
      %992 = vmatpush.bf16.msra.mxu0 0
      %993 = vmatpush.bf16.msra.mxu0 0
      %994 = vmatpush.bf16.msra.mxu0 0
      %995 = vmatpush.bf16.msra.mxu0 0
      %996 = vmatpush.bf16.msra.mxu0 0
      %997 = vmatpush.bf16.msra.mxu0 %v988
      %998 = vmatmul.bf16.gmra.mxu0 %v976
      %v999 = vpop.f32.mrf.mxu0
      %v1000 = vadd.f32 0.0, %v999
      %v1001 = vpop.f32.mrf.mxu0
      %v1002 = vadd.f32 0.0, %v1001
      %1003 = vmatmul.bf16.gmra.mxu0 %v979
      %v1004 = vpop.f32.mrf.mxu0
      %v1005 = vadd.f32 0.0, %v1004
      %v1006 = vpop.f32.mrf.mxu0
      %v1007 = vadd.f32 0.0, %v1006
      %1008 = vmatmul.bf16.gmra.mxu0 %v982
      %v1009 = vpop.f32.mrf.mxu0
      %v1010 = vadd.f32 0.0, %v1009
      %v1011 = vpop.f32.mrf.mxu0
      %v1012 = vadd.f32 0.0, %v1011
      %1013 = vmatmul.bf16.gmra.mxu0 %v985
      %v1014 = vpop.f32.mrf.mxu0
      %v1015 = vadd.f32 0.0, %v1014
      %v1016 = vpop.f32.mrf.mxu0
      %v1017 = vadd.f32 0.0, %v1016
      %1018 = vdwg.mxu0
      %v1019 = vadd.f32 %v913, %v1000
      %v1020 = vadd.f32 %v914, %v1002
      %v1021 = vadd.f32 %v915, %v1005
      %v1022 = vadd.f32 %v916, %v1007
      %v1023 = vadd.f32 %v917, %v1010
      %v1024 = vadd.f32 %v918, %v1012
      %v1025 = vadd.f32 %v919, %v1015
      %v1026 = vadd.f32 %v920, %v1017
      %v1027 = vld [vmem:[%s2] sm:$0x1]
      %v1029 = vperm.slane %v1027, 0
      %v1031 = vadd.f32 %v1019, %v1029
      %v1032 = vadd.f32 %v1020, %v1029
      %v1033 = vadd.f32 %v1021, %v1029
      %v1034 = vadd.f32 %v1022, %v1029
      %v1035 = vadd.f32 %v1023, %v1029
      %v1036 = vadd.f32 %v1024, %v1029
      %v1037 = vadd.f32 %v1025, %v1029
      %v1038 = vadd.f32 %v1026, %v1029
      %v1039 = vmax.f32 %v1031, 0.0
      %v1040 = vmax.f32 %v1032, 0.0
      %v1041 = vmax.f32 %v1033, 0.0
      %v1042 = vmax.f32 %v1034, 0.0
      %v1043 = vmax.f32 %v1035, 0.0
      %v1044 = vmax.f32 %v1036, 0.0
      %v1045 = vmax.f32 %v1037, 0.0
      %v1046 = vmax.f32 %v1038, 0.0
      %v1047 = vpack.c.bf16 %v1040, %v1039
      %v1048 = vpack.c.bf16 %v1042, %v1041
      %v1049 = vpack.c.bf16 %v1044, %v1043
      %v1050 = vpack.c.bf16 %v1046, %v1045
      %v1051 = vld [vmem:[%s3] sm:$0xf]
      %v1052 = vld [vmem:[%s4] sm:$0x1]
      %v1054 = vperm.slane %v1052, 0
      %vm1056 = vcmask 64512
      %v1058 = vsel %vm1056, %v1047, 0
      %v1061 = vsel %vm1056, %v1048, 0
      %v1064 = vsel %vm1056, %v1049, 0
      %v1067 = vsel %vm1056, %v1050, 0
      %vm1069 = vcmask 1043456
      %v1071 = vsel %vm1069, %v1051, 0
      %1073 = vmatpush.bf16.msra.mxu0 0
      %1074 = vmatpush.bf16.msra.mxu0 0
      %1075 = vmatpush.bf16.msra.mxu0 0
      %1076 = vmatpush.bf16.msra.mxu0 0
      %1077 = vmatpush.bf16.msra.mxu0 0
      %1078 = vmatpush.bf16.msra.mxu0 0
      %1079 = vmatpush.bf16.msra.mxu0 0
      %1080 = vmatpush.bf16.msra.mxu0 %v1071
      %1081 = vmatmul.bf16.gmra.mxu0 %v1058
      %v1082 = vpop.f32.mrf.mxu0
      %v1083 = vadd.f32 %v1054, %v1082
      %v1084 = vpop.f32.mrf.mxu0
      %v1085 = vadd.f32 %v1054, %v1084
      %1086 = vmatmul.bf16.gmra.mxu0 %v1061
      %v1087 = vpop.f32.mrf.mxu0
      %v1088 = vadd.f32 %v1054, %v1087
      %v1089 = vpop.f32.mrf.mxu0
      %v1090 = vadd.f32 %v1054, %v1089
      %1091 = vmatmul.bf16.gmra.mxu0 %v1064
      %v1092 = vpop.f32.mrf.mxu0
      %v1093 = vadd.f32 %v1054, %v1092
      %v1094 = vpop.f32.mrf.mxu0
      %v1095 = vadd.f32 %v1054, %v1094
      %1096 = vmatmul.bf16.gmra.mxu0 %v1067
      %v1097 = vpop.f32.mrf.mxu0
      %v1098 = vadd.f32 %v1054, %v1097
      %v1099 = vpop.f32.mrf.mxu0
      %v1100 = vadd.f32 %v1054, %v1099
      %1101 = vdwg.mxu0
      %vm1102 = vcmask 261120
      %1103 = vst.msk [vmem:[%s224] sm:$0xff] %vm1102, %v1083
      %1104 = vst.msk [vmem:[%s224 + $0x8] sm:$0xff] %vm1102, %v1085
      %1105 = vst.msk [vmem:[%s224 + $0x10] sm:$0xff] %vm1102, %v1088
      %1106 = vst.msk [vmem:[%s224 + $0x18] sm:$0xff] %vm1102, %v1090
      %1107 = vst.msk [vmem:[%s224 + $0x20] sm:$0xff] %vm1102, %v1093
      %1108 = vst.msk [vmem:[%s224 + $0x28] sm:$0xff] %vm1102, %v1095
      %1109 = vst.msk [vmem:[%s224 + $0x30] sm:$0xff] %vm1102, %v1098
      %1110 = vst.msk [vmem:[%s224 + $0x38] sm:$0xff] %vm1102, %v1100
      %p1111 = scmp.lt.s32.totalorder %s16, 1
      %s1112 = scalar_select %p1111, %s16, 1
      %s1113 = smul.addr %s1112, 8
      %s1114 = smul.addr %s1113, 8
      %s1115 = scalar_lea.vmem %s5, %s1114
      // Predicated region
      $region41: #{conv_stem_forward.3} parent=39 // pred_check
        %p1116 = pneg %p144
      $region42: #{conv_stem_forward.3} parent=39 // pred_check_branch
        %1118 = sbr.rel (%p1116) target = $region44
      $region43: #{conv_stem_forward.3} parent=39 // pred_region
        _
      $region44: #{conv_stem_forward.3} parent=39 // pred_fallthru
        _
    $region40: #{conv_stem_forward.3} parent=5 // pred_fallthru
      _
    %p1119 = scmp.le.s32.totalorder 2, %s11
    // Predicated region
    $region45: #{conv_stem_forward.3} parent=5 // pred_check
      %p1120 = pneg %p1119
    $region46: #{conv_stem_forward.3} parent=5 // pred_check_branch
      %1122 = sbr.rel (%p1120) target = $region48
    $region47: #{conv_stem_forward.3} parent=5 // pred_region
      %s1123 = ssub.s32 %s11, 2
      // Predicated region
      $region49: #{conv_stem_forward.3} parent=47 // pred_check
        %p1124 = pneg %p150
      $region50: #{conv_stem_forward.3} parent=47 // pred_check_branch
        %1126 = sbr.rel (%p1124) target = $region52
      $region51: #{conv_stem_forward.3} parent=47 // pred_region
        %p1127 = scmp.lt.s32.totalorder %s17, 1
        %s1128 = scalar_select %p1127, %s17, 1
        %s1129 = smul.addr %s1128, 8
        %s1130 = smul.addr %s1129, 8
        %s1131 = scalar_lea.vmem %s5, %s1130
      $region52: #{conv_stem_forward.3} parent=47 // pred_fallthru
        _
    $region48: #{conv_stem_forward.3} parent=5 // pred_fallthru
      _
  $region6: #{conv_stem_forward.3} parent=0 // loop_footer
    %s15 = sadd.s32 1, %s11
  $region7: #{conv_stem_forward.3} parent=0 // loop_footer_branch
    %10 = sbr.rel target = $region3
  $region8: #{conv_stem_forward.3} parent=0 // loop_exit
    _

</llo_original>
